<compile_context>
chip_gen: v7x
topology: tpu7x:2x2x1
jax: 0.10.0
libtpu: 0.0.40
codegen_flags: <defaults>
</compile_context>

<pallas_src>
import functools

import jax
import jax.numpy as jnp
from jax.experimental import pallas as pl
from jax.experimental.pallas import tpu as pltpu

LANE = 128                      # every feature dim is zero-padded to this
VMEM_LIMIT = 32 * 1024 * 1024   # >> actual use, << v7x 64 MiB physical


# ----------------------------------------------------------------------------
# Kernel 1: per-node feature transform   T = X @ Wl   (bf16 in/out, f32 acc)
# ----------------------------------------------------------------------------
def transform_kernel(x_ref, wl_ref, t_ref):
    t = jnp.dot(x_ref[...], wl_ref[...], preferred_element_type=jnp.float32)
    t_ref[...] = t.astype(t_ref.dtype)


def transform(x, w_l, *, tm):
    n_pad, d_in = x.shape
    d_out = w_l.shape[1]
    return pl.pallas_call(
        transform_kernel,
        out_shape=jax.ShapeDtypeStruct((n_pad, d_out), jnp.bfloat16),
        grid_spec=pltpu.PrefetchScalarGridSpec(
            num_scalar_prefetch=0,
            grid=(n_pad // tm,),
            in_specs=[
                pl.BlockSpec((tm, d_in), lambda i: (i, 0)),
                pl.BlockSpec((d_in, d_out), lambda i: (0, 0)),   # resident
            ],
            out_specs=pl.BlockSpec((tm, d_out), lambda i: (i, 0)),
        ),
        compiler_params=pltpu.CompilerParams(
            dimension_semantics=("parallel",),
            vmem_limit_bytes=VMEM_LIMIT,
        ),
    )(x, w_l)


# ----------------------------------------------------------------------------
# Kernel 2: mean aggregation + self term + bias [+ relu]
#   out = [relu]( (A_counts @ T) * inv_deg + X @ Wr + b )
# ----------------------------------------------------------------------------
def aggregate_kernel(a_ref, t_ref, x_ref, wr_ref, b_ref, invdeg_ref, o_ref,
                     *scratch, apply_relu):
    # f32 output -> accumulate directly into the resident o_ref block;
    # bf16 output -> use the f32 VMEM scratch accumulator.
    acc_ref = scratch[0] if scratch else o_ref
    k = pl.program_id(1)

    @pl.when(k == 0)
    def _():
        acc_ref[...] = jnp.zeros_like(acc_ref)

    acc_ref[...] += jnp.dot(
        a_ref[...], t_ref[...], preferred_element_type=jnp.float32
    )

    @pl.when(k == pl.num_programs(1) - 1)
    def _():
        self_term = jnp.dot(
            x_ref[...], wr_ref[...], preferred_element_type=jnp.float32
        )
        out = acc_ref[...] * invdeg_ref[...] + self_term + b_ref[...]
        if apply_relu:
            out = jnp.maximum(out, 0.0)
        o_ref[...] = out.astype(o_ref.dtype)


def aggregate(a_counts, t, x, w_r, b, inv_deg, *, apply_relu, out_dtype, tm, tk):
    n_pad = a_counts.shape[0]
    d_in = x.shape[1]
    d_out = t.shape[1]
    use_scratch = out_dtype != jnp.float32
    kernel = functools.partial(aggregate_kernel, apply_relu=apply_relu)
    scratch_shapes = (
        [pltpu.VMEM((tm, d_out), jnp.float32)] if use_scratch else []
    )
    return pl.pallas_call(
        kernel,
        out_shape=jax.ShapeDtypeStruct((n_pad, d_out), out_dtype),
        grid_spec=pltpu.PrefetchScalarGridSpec(
            num_scalar_prefetch=0,
            grid=(n_pad // tm, n_pad // tk),
            in_specs=[
                pl.BlockSpec((tm, tk), lambda i, k: (i, k)),      # A counts
                pl.BlockSpec((tk, d_out), lambda i, k: (k, 0)),   # T
                pl.BlockSpec((tm, d_in), lambda i, k: (i, 0)),    # X row tile
                pl.BlockSpec((d_in, d_out), lambda i, k: (0, 0)),  # Wr (resident)
                pl.BlockSpec((1, d_out), lambda i, k: (0, 0)),     # bias (resident)
                pl.BlockSpec((tm, 1), lambda i, k: (i, 0)),        # inv_deg (f32)
            ],
            out_specs=pl.BlockSpec((tm, d_out), lambda i, k: (i, 0)),
            scratch_shapes=scratch_shapes,
        ),
        compiler_params=pltpu.CompilerParams(
            dimension_semantics=("parallel", "arbitrary"),
            vmem_limit_bytes=VMEM_LIMIT,
        ),
    )(a_counts, t, x, w_r, b, inv_deg)


def sage_conv(a_counts, inv_deg, x, w_l, w_r, b, *,
              apply_relu, out_dtype, tm, tk, tm_t):
    t = transform(x, w_l, tm=tm_t)
    return aggregate(a_counts, t, x, w_r, b, inv_deg,
                     apply_relu=apply_relu, out_dtype=out_dtype, tm=tm, tk=tk)


# ----------------------------------------------------------------------------
# Glue (plain JAX): padding, tiling choice, dense edge-count adjacency
# ----------------------------------------------------------------------------
def _round_up(x, m):
    return (x + m - 1) // m * m


def _pad2d(a, rows, cols):
    return jnp.pad(a, ((0, rows - a.shape[0]), (0, cols - a.shape[1])))


def _pick_tile(n_pad, candidates):
    """Largest candidate that divides n_pad (all divide since n_pad % 256 == 0)."""
    for c in candidates:
        if c <= n_pad and n_pad % c == 0:
            return c
    return n_pad


def build_adjacency(edge_index, num_nodes_pad):
    """Unnormalized edge counts (bf16, exact for multiplicity <= 256) and the
    exact f32 1/in-degree folded into the kernel finalize."""
    src, dst = edge_index[0], edge_index[1]
    counts = jnp.zeros((num_nodes_pad, num_nodes_pad), jnp.float32)
    counts = counts.at[dst, src].add(1.0)
    deg = jnp.sum(counts, axis=1, keepdims=True)
    inv_deg = jnp.where(deg > 0.0, 1.0 / deg, 0.0)          # f32 (n_pad, 1)
    return counts.astype(jnp.bfloat16), inv_deg


def graphsage_forward(x, edge_index, params):
    n = x.shape[0]
    d_out = params["w_l2"].shape[1]

    # Pad N to a multiple of 256 (MXU-friendly tiles); pick the largest tiles
    # that divide n_pad so both grid axes are exact.
    n_pad = _round_up(n, 256)
    tm = _pick_tile(n_pad, (512, 256))                 # aggregate row tile
    tk = _pick_tile(n_pad, (2048, 1024, 512, 256))     # aggregate reduction tile
    tm_t = _pick_tile(n_pad, (2048, 1024, 512, 256))   # transform row tile

    # bf16 everywhere on the streaming path; bias stays f32.
    x_pad = _pad2d(x.astype(jnp.float32), n_pad, LANE).astype(jnp.bfloat16)
    a_counts, inv_deg = build_adjacency(edge_index, n_pad)

    wl1 = _pad2d(params["w_l1"], LANE, LANE).astype(jnp.bfloat16)
    wr1 = _pad2d(params["w_r1"], LANE, LANE).astype(jnp.bfloat16)
    b1 = _pad2d(params["b1"].reshape(1, -1), 1, LANE).astype(jnp.float32)
    wl2 = _pad2d(params["w_l2"], LANE, LANE).astype(jnp.bfloat16)
    wr2 = _pad2d(params["w_r2"], LANE, LANE).astype(jnp.bfloat16)
    b2 = _pad2d(params["b2"].reshape(1, -1), 1, LANE).astype(jnp.float32)

    # NOTE: padded (zero-degree) rows pick up h = relu(b1); harmless because
    # their adjacency columns are zero and the rows are sliced off below.
    h = sage_conv(a_counts, inv_deg, x_pad, wl1, wr1, b1,
                  apply_relu=True, out_dtype=jnp.bfloat16,
                  tm=tm, tk=tk, tm_t=tm_t)
    out = sage_conv(a_counts, inv_deg, h, wl2, wr2, b2,
                    apply_relu=False, out_dtype=jnp.float32,
                    tm=tm, tk=tk, tm_t=tm_t)
    return out[:n, :d_out]


# ----------------------------------------------------------------------------
# Pure-JAX f32 reference for correctness
# ----------------------------------------------------------------------------
def graphsage_reference(x, edge_index, params):
    n = x.shape[0]
    src, dst = edge_index[0], edge_index[1]
    adj = jnp.zeros((n, n), jnp.float32).at[dst, src].add(1.0)
    a_norm = adj / jnp.maximum(adj.sum(axis=1, keepdims=True), 1.0)
    h = a_norm @ x @ params["w_l1"] + x @ params["w_r1"] + params["b1"]
    h = jnp.maximum(h, 0.0)
    out = a_norm @ h @ params["w_l2"] + h @ params["w_r2"] + params["b2"]
    return out


if __name__ == "__main__":
    # Synthetic "user + content" graph: 200 nodes, 800 directed edges.
    # in_channels=16, hidden_channels=32, out_channels=8 (padded to 128 lanes,
    # N padded to 256 -> aggregate grid (1, 1) at tm=tk=256 for this toy size).
    num_nodes = 200
    num_edges = 800
    in_channels, hidden_channels, out_channels = 16, 32, 8

    key = jax.random.PRNGKey(0)
    k_x, k_e, k1, k2, k3, k4, k5, k6 = jax.random.split(key, 8)

    x = jax.random.normal(k_x, (num_nodes, in_channels), dtype=jnp.float32)
    edge_index = jax.random.randint(
        k_e, (2, num_edges), 0, num_nodes, dtype=jnp.int32
    )

    def glorot(k, fan_in, fan_out):
        limit = jnp.sqrt(6.0 / (fan_in + fan_out))
        return jax.random.uniform(k, (fan_in, fan_out), jnp.float32, -limit, limit)

    params = {
        "w_l1": glorot(k1, in_channels, hidden_channels),
        "w_r1": glorot(k2, in_channels, hidden_channels),
        "b1": 0.1 * jax.random.normal(k5, (hidden_channels,), jnp.float32),
        "w_l2": glorot(k3, hidden_channels, out_channels),
        "w_r2": glorot(k4, hidden_channels, out_channels),
        "b2": 0.1 * jax.random.normal(k6, (out_channels,), jnp.float32),
    }

    fwd = jax.jit(graphsage_forward)
    out = jax.block_until_ready(fwd(x, edge_index, params))

    ref = graphsage_reference(x, edge_index, params)
    assert out.shape == (num_nodes, out_channels)
    # bf16 streaming path (X, h, T, A counts) with f32 accumulation and exact
    # f32 1/deg -> loosened tolerance vs the f32 reference.
    assert jnp.allclose(out, ref, atol=5e-2, rtol=5e-2), (
        f"max abs err = {float(jnp.max(jnp.abs(out - ref)))}"
    )

    print("KERNEL_OK")
</pallas_src>

<mosaic_0001>
module attributes {stable_mosaic.version = 11 : i64} {
  func.func private @main(%arg0: i32) attributes {dimension_semantics = [#tpu.dimension_semantics<core_parallel>], iteration_bounds = array<i64: 2>, tpu.core_type = #tpu.core_type<sc_scalar_subcore>, window_params = []} {
    return
  }
}

module attributes {stable_mosaic.version = 11 : i64} {
  func.func private @main(%arg0: i32) attributes {dimension_semantics = [#tpu.dimension_semantics<core_parallel>], iteration_bounds = array<i64: 2>, tpu.core_type = #tpu.core_type<sc_scalar_subcore>, window_params = []} {
    return
  }
}

module attributes {stable_mosaic.version = 11 : i64} {
  func.func @transform_kernel(%arg0: i32, %arg1: memref<256x128xbf16, #tpu.memory_space<vmem>>, %arg2: memref<128x128xbf16, #tpu.memory_space<vmem>>, %arg3: memref<256x128xbf16, #tpu.memory_space<vmem>>) attributes {dimension_semantics = [#tpu.dimension_semantics<parallel>], iteration_bounds = array<i64: 1>, scalar_prefetch = 0 : i64, scratch_operands = 0 : i64, tpu.core_type = #tpu.core_type<tc>, window_params = [{transform_indices = @transform_0, window_bounds = array<i64: 256, 128>}, {pipeline_mode = #tpu.pipeline_mode<synchronous>, transform_indices = @transform_1, window_bounds = array<i64: 128, 128>}, {transform_indices = @transform_2, window_bounds = array<i64: 256, 128>}]} {
    %c0 = arith.constant 0 : index
    %c0_0 = arith.constant 0 : index
    %0 = vector.load %arg1[%c0, %c0_0] : memref<256x128xbf16, #tpu.memory_space<vmem>>, vector<256x128xbf16>
    %c0_1 = arith.constant 0 : index
    %c0_2 = arith.constant 0 : index
    %1 = vector.load %arg2[%c0_1, %c0_2] : memref<128x128xbf16, #tpu.memory_space<vmem>>, vector<128x128xbf16>
    %cst = arith.constant dense<0.000000e+00> : vector<256x128xf32>
    %2 = tpu.matmul %0, %1, %cst {dimension_numbers = #tpu.dot_dimension_numbers<[1], [0], [0], [1], [0, 0, 1, 1], [], []>} : vector<256x128xbf16>, vector<128x128xbf16>, vector<256x128xf32> -> vector<256x128xf32>
    %3 = arith.truncf %2 : vector<256x128xf32> to vector<256x128xbf16>
    %c0_3 = arith.constant 0 : index
    %c0_4 = arith.constant 0 : index
    %4 = vector.load %arg3[%c0_3, %c0_4] : memref<256x128xbf16, #tpu.memory_space<vmem>>, vector<256x128xbf16>
    tpu.vector_store %arg3[%c0_3, %c0_4], %3 {strides = array<i32>} : memref<256x128xbf16, #tpu.memory_space<vmem>>, vector<256x128xbf16>,
    return
  }
  func.func @transform_0(%arg0: i32) -> (i32, i32) {
    %c0_i32 = arith.constant 0 : i32
    %c0_i32_0 = arith.constant 0 : i32
    return %arg0, %c0_i32 : i32, i32
  }
  func.func @transform_1(%arg0: i32) -> (i32, i32) {
    %c0_i32 = arith.constant 0 : i32
    %c0_i32_0 = arith.constant 0 : i32
    %c0_i32_1 = arith.constant 0 : i32
    return %c0_i32, %c0_i32_0 : i32, i32
  }
  func.func @transform_2(%arg0: i32) -> (i32, i32) {
    %c0_i32 = arith.constant 0 : i32
    %c0_i32_0 = arith.constant 0 : i32
    return %arg0, %c0_i32 : i32, i32
  }
}

module attributes {stable_mosaic.version = 11 : i64} {
  func.func @aggregate_kernel(%arg0: i32, %arg1: i32, %arg2: memref<256x256xbf16, #tpu.memory_space<vmem>>, %arg3: memref<256x128xbf16, #tpu.memory_space<vmem>>, %arg4: memref<256x128xbf16, #tpu.memory_space<vmem>>, %arg5: memref<128x128xbf16, #tpu.memory_space<vmem>>, %arg6: memref<1x128xf32, #tpu.memory_space<vmem>>, %arg7: memref<256x1xf32, #tpu.memory_space<vmem>>, %arg8: memref<256x128xbf16, #tpu.memory_space<vmem>>, %arg9: memref<256x128xf32, #tpu.memory_space<vmem>>) attributes {dimension_semantics = [#tpu.dimension_semantics<parallel>, #tpu.dimension_semantics<arbitrary>], iteration_bounds = array<i64: 1, 1>, scalar_prefetch = 0 : i64, scratch_operands = 1 : i64, tpu.core_type = #tpu.core_type<tc>, window_params = [{transform_indices = @transform_0, window_bounds = array<i64: 256, 256>}, {transform_indices = @transform_1, window_bounds = array<i64: 256, 128>}, {transform_indices = @transform_2, window_bounds = array<i64: 256, 128>}, {pipeline_mode = #tpu.pipeline_mode<synchronous>, transform_indices = @transform_3, window_bounds = array<i64: 128, 128>}, {pipeline_mode = #tpu.pipeline_mode<synchronous>, transform_indices = @transform_4, window_bounds = array<i64: 1, 128>}, {transform_indices = @transform_5, window_bounds = array<i64: 256, 1>}, {transform_indices = @transform_6, window_bounds = array<i64: 256, 128>}]} {
    %c0_i32 = arith.constant 0 : i32
    %0 = arith.cmpi eq, %arg1, %c0_i32 : i32
    %1 = arith.extui %0 : i1 to i32
    %c0_i32_0 = arith.constant 0 : i32
    %2 = arith.cmpi ne, %1, %c0_i32_0 : i32
    scf.if %2 {
      %cst_10 = arith.constant 0.000000e+00 : f32
      %12 = vector.broadcast %cst_10 : f32 to vector<256x128xf32>
      %c0_11 = arith.constant 0 : index
      %c0_12 = arith.constant 0 : index
      %13 = vector.load %arg9[%c0_11, %c0_12] : memref<256x128xf32, #tpu.memory_space<vmem>>, vector<256x128xf32>
      tpu.vector_store %arg9[%c0_11, %c0_12], %12 {strides = array<i32>} : memref<256x128xf32, #tpu.memory_space<vmem>>, vector<256x128xf32>,
    } else {
    }
    %c0 = arith.constant 0 : index
    %c0_1 = arith.constant 0 : index
    %3 = vector.load %arg9[%c0, %c0_1] : memref<256x128xf32, #tpu.memory_space<vmem>>, vector<256x128xf32>
    %c0_2 = arith.constant 0 : index
    %c0_3 = arith.constant 0 : index
    %4 = vector.load %arg2[%c0_2, %c0_3] : memref<256x256xbf16, #tpu.memory_space<vmem>>, vector<256x256xbf16>
    %c0_4 = arith.constant 0 : index
    %c0_5 = arith.constant 0 : index
    %5 = vector.load %arg3[%c0_4, %c0_5] : memref<256x128xbf16, #tpu.memory_space<vmem>>, vector<256x128xbf16>
    %cst = arith.constant dense<0.000000e+00> : vector<256x128xf32>
    %6 = tpu.matmul %4, %5, %cst {dimension_numbers = #tpu.dot_dimension_numbers<[1], [0], [0], [1], [0, 0, 1, 1], [], []>} : vector<256x256xbf16>, vector<256x128xbf16>, vector<256x128xf32> -> vector<256x128xf32>
    %7 = arith.addf %3, %6 : vector<256x128xf32>
    %c0_6 = arith.constant 0 : index
    %c0_7 = arith.constant 0 : index
    %8 = vector.load %arg9[%c0_6, %c0_7] : memref<256x128xf32, #tpu.memory_space<vmem>>, vector<256x128xf32>
    tpu.vector_store %arg9[%c0_6, %c0_7], %7 {strides = array<i32>} : memref<256x128xf32, #tpu.memory_space<vmem>>, vector<256x128xf32>,
    %c0_i32_8 = arith.constant 0 : i32
    %9 = arith.cmpi eq, %arg1, %c0_i32_8 : i32
    %10 = arith.extui %9 : i1 to i32
    %c0_i32_9 = arith.constant 0 : i32
    %11 = arith.cmpi ne, %10, %c0_i32_9 : i32
    scf.if %11 {
      %c0_10 = arith.constant 0 : index
      %c0_11 = arith.constant 0 : index
      %12 = vector.load %arg4[%c0_10, %c0_11] : memref<256x128xbf16, #tpu.memory_space<vmem>>, vector<256x128xbf16>
      %c0_12 = arith.constant 0 : index
      %c0_13 = arith.constant 0 : index
      %13 = vector.load %arg5[%c0_12, %c0_13] : memref<128x128xbf16, #tpu.memory_space<vmem>>, vector<128x128xbf16>
      %cst_14 = arith.constant dense<0.000000e+00> : vector<256x128xf32>
      %14 = tpu.matmul %12, %13, %cst_14 {dimension_numbers = #tpu.dot_dimension_numbers<[1], [0], [0], [1], [0, 0, 1, 1], [], []>} : vector<256x128xbf16>, vector<128x128xbf16>, vector<256x128xf32> -> vector<256x128xf32>
      %c0_15 = arith.constant 0 : index
      %c0_16 = arith.constant 0 : index
      %15 = vector.load %arg9[%c0_15, %c0_16] : memref<256x128xf32, #tpu.memory_space<vmem>>, vector<256x128xf32>
      %c0_17 = arith.constant 0 : index
      %c0_18 = arith.constant 0 : index
      %16 = vector.load %arg7[%c0_17, %c0_18] : memref<256x1xf32, #tpu.memory_space<vmem>>, vector<256x1xf32>
      %17 = vector.broadcast %16 : vector<256x1xf32> to vector<256x128xf32>
      %18 = arith.mulf %15, %17 : vector<256x128xf32>
      %19 = arith.addf %18, %14 : vector<256x128xf32>
      %c0_19 = arith.constant 0 : index
      %c0_20 = arith.constant 0 : index
      %20 = vector.load %arg6[%c0_19, %c0_20] : memref<1x128xf32, #tpu.memory_space<vmem>>, vector<1x128xf32>
      %21 = vector.broadcast %20 : vector<1x128xf32> to vector<256x128xf32>
      %22 = arith.addf %19, %21 : vector<256x128xf32>
      %cst_21 = arith.constant 0.000000e+00 : f32
      %23 = vector.broadcast %cst_21 : f32 to vector<256x128xf32>
      %24 = arith.maximumf %22, %23 : vector<256x128xf32>
      %25 = arith.truncf %24 : vector<256x128xf32> to vector<256x128xbf16>
      %c0_22 = arith.constant 0 : index
      %c0_23 = arith.constant 0 : index
      %26 = vector.load %arg8[%c0_22, %c0_23] : memref<256x128xbf16, #tpu.memory_space<vmem>>, vector<256x128xbf16>
      tpu.vector_store %arg8[%c0_22, %c0_23], %25 {strides = array<i32>} : memref<256x128xbf16, #tpu.memory_space<vmem>>, vector<256x128xbf16>,
    } else {
    }
    return
  }
  func.func @transform_0(%arg0: i32, %arg1: i32) -> (i32, i32) {
    %c0_i32 = arith.constant 0 : i32
    return %arg0, %arg1 : i32, i32
  }
  func.func @transform_1(%arg0: i32, %arg1: i32) -> (i32, i32) {
    %c0_i32 = arith.constant 0 : i32
    %c0_i32_0 = arith.constant 0 : i32
    return %arg1, %c0_i32 : i32, i32
  }
  func.func @transform_2(%arg0: i32, %arg1: i32) -> (i32, i32) {
    %c0_i32 = arith.constant 0 : i32
    %c0_i32_0 = arith.constant 0 : i32
    return %arg0, %c0_i32 : i32, i32
  }
  func.func @transform_3(%arg0: i32, %arg1: i32) -> (i32, i32) {
    %c0_i32 = arith.constant 0 : i32
    %c0_i32_0 = arith.constant 0 : i32
    %c0_i32_1 = arith.constant 0 : i32
    return %c0_i32, %c0_i32_0 : i32, i32
  }
  func.func @transform_4(%arg0: i32, %arg1: i32) -> (i32, i32) {
    %c0_i32 = arith.constant 0 : i32
    %c0_i32_0 = arith.constant 0 : i32
    %c0_i32_1 = arith.constant 0 : i32
    return %c0_i32, %c0_i32_0 : i32, i32
  }
  func.func @transform_5(%arg0: i32, %arg1: i32) -> (i32, i32) {
    %c0_i32 = arith.constant 0 : i32
    %c0_i32_0 = arith.constant 0 : i32
    return %arg0, %c0_i32 : i32, i32
  }
  func.func @transform_6(%arg0: i32, %arg1: i32) -> (i32, i32) {
    %c0_i32 = arith.constant 0 : i32
    %c0_i32_0 = arith.constant 0 : i32
    return %arg0, %c0_i32 : i32, i32
  }
}

module attributes {stable_mosaic.version = 11 : i64} {
  func.func @aggregate_kernel(%arg0: i32, %arg1: i32, %arg2: memref<256x256xbf16, #tpu.memory_space<vmem>>, %arg3: memref<256x128xbf16, #tpu.memory_space<vmem>>, %arg4: memref<256x128xbf16, #tpu.memory_space<vmem>>, %arg5: memref<128x128xbf16, #tpu.memory_space<vmem>>, %arg6: memref<1x128xf32, #tpu.memory_space<vmem>>, %arg7: memref<256x1xf32, #tpu.memory_space<vmem>>, %arg8: memref<256x128xf32, #tpu.memory_space<vmem>>) attributes {dimension_semantics = [#tpu.dimension_semantics<parallel>, #tpu.dimension_semantics<arbitrary>], iteration_bounds = array<i64: 1, 1>, scalar_prefetch = 0 : i64, scratch_operands = 0 : i64, tpu.core_type = #tpu.core_type<tc>, window_params = [{transform_indices = @transform_0, window_bounds = array<i64: 256, 256>}, {transform_indices = @transform_1, window_bounds = array<i64: 256, 128>}, {transform_indices = @transform_2, window_bounds = array<i64: 256, 128>}, {pipeline_mode = #tpu.pipeline_mode<synchronous>, transform_indices = @transform_3, window_bounds = array<i64: 128, 128>}, {pipeline_mode = #tpu.pipeline_mode<synchronous>, transform_indices = @transform_4, window_bounds = array<i64: 1, 128>}, {transform_indices = @transform_5, window_bounds = array<i64: 256, 1>}, {transform_indices = @transform_6, window_bounds = array<i64: 256, 128>}]} {
    %c0_i32 = arith.constant 0 : i32
    %0 = arith.cmpi eq, %arg1, %c0_i32 : i32
    %1 = arith.extui %0 : i1 to i32
    %c0_i32_0 = arith.constant 0 : i32
    %2 = arith.cmpi ne, %1, %c0_i32_0 : i32
    scf.if %2 {
      %cst_10 = arith.constant 0.000000e+00 : f32
      %12 = vector.broadcast %cst_10 : f32 to vector<256x128xf32>
      %c0_11 = arith.constant 0 : index
      %c0_12 = arith.constant 0 : index
      %13 = vector.load %arg8[%c0_11, %c0_12] : memref<256x128xf32, #tpu.memory_space<vmem>>, vector<256x128xf32>
      tpu.vector_store %arg8[%c0_11, %c0_12], %12 {strides = array<i32>} : memref<256x128xf32, #tpu.memory_space<vmem>>, vector<256x128xf32>,
    } else {
    }
    %c0 = arith.constant 0 : index
    %c0_1 = arith.constant 0 : index
    %3 = vector.load %arg8[%c0, %c0_1] : memref<256x128xf32, #tpu.memory_space<vmem>>, vector<256x128xf32>
    %c0_2 = arith.constant 0 : index
    %c0_3 = arith.constant 0 : index
    %4 = vector.load %arg2[%c0_2, %c0_3] : memref<256x256xbf16, #tpu.memory_space<vmem>>, vector<256x256xbf16>
    %c0_4 = arith.constant 0 : index
    %c0_5 = arith.constant 0 : index
    %5 = vector.load %arg3[%c0_4, %c0_5] : memref<256x128xbf16, #tpu.memory_space<vmem>>, vector<256x128xbf16>
    %cst = arith.constant dense<0.000000e+00> : vector<256x128xf32>
    %6 = tpu.matmul %4, %5, %cst {dimension_numbers = #tpu.dot_dimension_numbers<[1], [0], [0], [1], [0, 0, 1, 1], [], []>} : vector<256x256xbf16>, vector<256x128xbf16>, vector<256x128xf32> -> vector<256x128xf32>
    %7 = arith.addf %3, %6 : vector<256x128xf32>
    %c0_6 = arith.constant 0 : index
    %c0_7 = arith.constant 0 : index
    %8 = vector.load %arg8[%c0_6, %c0_7] : memref<256x128xf32, #tpu.memory_space<vmem>>, vector<256x128xf32>
    tpu.vector_store %arg8[%c0_6, %c0_7], %7 {strides = array<i32>} : memref<256x128xf32, #tpu.memory_space<vmem>>, vector<256x128xf32>,
    %c0_i32_8 = arith.constant 0 : i32
    %9 = arith.cmpi eq, %arg1, %c0_i32_8 : i32
    %10 = arith.extui %9 : i1 to i32
    %c0_i32_9 = arith.constant 0 : i32
    %11 = arith.cmpi ne, %10, %c0_i32_9 : i32
    scf.if %11 {
      %c0_10 = arith.constant 0 : index
      %c0_11 = arith.constant 0 : index
      %12 = vector.load %arg4[%c0_10, %c0_11] : memref<256x128xbf16, #tpu.memory_space<vmem>>, vector<256x128xbf16>
      %c0_12 = arith.constant 0 : index
      %c0_13 = arith.constant 0 : index
      %13 = vector.load %arg5[%c0_12, %c0_13] : memref<128x128xbf16, #tpu.memory_space<vmem>>, vector<128x128xbf16>
      %cst_14 = arith.constant dense<0.000000e+00> : vector<256x128xf32>
      %14 = tpu.matmul %12, %13, %cst_14 {dimension_numbers = #tpu.dot_dimension_numbers<[1], [0], [0], [1], [0, 0, 1, 1], [], []>} : vector<256x128xbf16>, vector<128x128xbf16>, vector<256x128xf32> -> vector<256x128xf32>
      %c0_15 = arith.constant 0 : index
      %c0_16 = arith.constant 0 : index
      %15 = vector.load %arg8[%c0_15, %c0_16] : memref<256x128xf32, #tpu.memory_space<vmem>>, vector<256x128xf32>
      %c0_17 = arith.constant 0 : index
      %c0_18 = arith.constant 0 : index
      %16 = vector.load %arg7[%c0_17, %c0_18] : memref<256x1xf32, #tpu.memory_space<vmem>>, vector<256x1xf32>
      %17 = vector.broadcast %16 : vector<256x1xf32> to vector<256x128xf32>
      %18 = arith.mulf %15, %17 : vector<256x128xf32>
      %19 = arith.addf %18, %14 : vector<256x128xf32>
      %c0_19 = arith.constant 0 : index
      %c0_20 = arith.constant 0 : index
      %20 = vector.load %arg6[%c0_19, %c0_20] : memref<1x128xf32, #tpu.memory_space<vmem>>, vector<1x128xf32>
      %21 = vector.broadcast %20 : vector<1x128xf32> to vector<256x128xf32>
      %22 = arith.addf %19, %21 : vector<256x128xf32>
      %c0_21 = arith.constant 0 : index
      %c0_22 = arith.constant 0 : index
      %23 = vector.load %arg8[%c0_21, %c0_22] : memref<256x128xf32, #tpu.memory_space<vmem>>, vector<256x128xf32>
      tpu.vector_store %arg8[%c0_21, %c0_22], %22 {strides = array<i32>} : memref<256x128xf32, #tpu.memory_space<vmem>>, vector<256x128xf32>,
    } else {
    }
    return
  }
  func.func @transform_0(%arg0: i32, %arg1: i32) -> (i32, i32) {
    %c0_i32 = arith.constant 0 : i32
    return %arg0, %arg1 : i32, i32
  }
  func.func @transform_1(%arg0: i32, %arg1: i32) -> (i32, i32) {
    %c0_i32 = arith.constant 0 : i32
    %c0_i32_0 = arith.constant 0 : i32
    return %arg1, %c0_i32 : i32, i32
  }
  func.func @transform_2(%arg0: i32, %arg1: i32) -> (i32, i32) {
    %c0_i32 = arith.constant 0 : i32
    %c0_i32_0 = arith.constant 0 : i32
    return %arg0, %c0_i32 : i32, i32
  }
  func.func @transform_3(%arg0: i32, %arg1: i32) -> (i32, i32) {
    %c0_i32 = arith.constant 0 : i32
    %c0_i32_0 = arith.constant 0 : i32
    %c0_i32_1 = arith.constant 0 : i32
    return %c0_i32, %c0_i32_0 : i32, i32
  }
  func.func @transform_4(%arg0: i32, %arg1: i32) -> (i32, i32) {
    %c0_i32 = arith.constant 0 : i32
    %c0_i32_0 = arith.constant 0 : i32
    %c0_i32_1 = arith.constant 0 : i32
    return %c0_i32, %c0_i32_0 : i32, i32
  }
  func.func @transform_5(%arg0: i32, %arg1: i32) -> (i32, i32) {
    %c0_i32 = arith.constant 0 : i32
    %c0_i32_0 = arith.constant 0 : i32
    return %arg0, %c0_i32 : i32, i32
  }
  func.func @transform_6(%arg0: i32, %arg1: i32) -> (i32, i32) {
    %c0_i32 = arith.constant 0 : i32
    %c0_i32_0 = arith.constant 0 : i32
    return %arg0, %c0_i32 : i32, i32
  }
}

</mosaic_0001>

<llo_original>
// kernel: graphsage_forward.4
$region0: #{graphsage_forward.4}
  #allocation0 [shape = 'u32[]', space=smem, size = 0x4, offset = 0x4, fixed_abs, tag = 'smem constant byte address 0x4 - core index']
  #allocation1 [shape = 'u32[144,128]{1,0:T(1,128)}', space=vmem, size = 0x12000, scoped, tag = 'internal scratch']
  %s0 = inlined_call_operand.vmem [shape: bf16[256,128], index: 0, kind: input, shape index: {}]
  %s1 = inlined_call_operand.vmem [shape: bf16[128,128], index: 1, kind: input, shape index: {}]
  %s2 = inlined_call_operand.vmem [shape: bf16[256,128], index: 2, kind: output, shape index: {}]
  %s3 = sld [smem:[#allocation0]]
  $region18: #{graphsage_forward.4} parent=0
    _
  %s5 = ssub.s32 1, %s3
  %s6 = scalar_select 0, %s5, %s3
  // Predicated region
  $region2: #{graphsage_forward.4} parent=0 // pred_check
    _
  $region3: #{graphsage_forward.4} parent=0 // pred_check_branch
    %8 = sbr.rel (0) target = $region5
  $region4: #{graphsage_forward.4} parent=0 // pred_region
    _
  $region5: #{graphsage_forward.4} parent=0 // pred_fallthru
    _
  // Predicated region
  $region6: #{graphsage_forward.4} parent=0 // pred_check
    _
  $region7: #{graphsage_forward.4} parent=0 // pred_check_branch
    %10 = sbr.rel (0) target = $region9
  $region8: #{graphsage_forward.4} parent=0 // pred_region
    _
  $region9: #{graphsage_forward.4} parent=0 // pred_fallthru
    _
  %v12 = vld [vmem:[%s0] sm:$0xf]
  %v13 = vld [vmem:[%s0 + $0x4] sm:$0xf]
  %v14 = vld [vmem:[%s0 + $0x8] sm:$0xf]
  %v15 = vld [vmem:[%s0 + $0xc] sm:$0xf]
  %v16 = vld [vmem:[%s0 + $0x10] sm:$0xf]
  %v17 = vld [vmem:[%s0 + $0x14] sm:$0xf]
  %v18 = vld [vmem:[%s0 + $0x18] sm:$0xf]
  %v19 = vld [vmem:[%s0 + $0x1c] sm:$0xf]
  %v20 = vld [vmem:[%s0 + $0x20] sm:$0xf]
  %v21 = vld [vmem:[%s0 + $0x24] sm:$0xf]
  %v22 = vld [vmem:[%s0 + $0x28] sm:$0xf]
  %v23 = vld [vmem:[%s0 + $0x2c] sm:$0xf]
  %v24 = vld [vmem:[%s0 + $0x30] sm:$0xf]
  %v25 = vld [vmem:[%s0 + $0x34] sm:$0xf]
  %v26 = vld [vmem:[%s0 + $0x38] sm:$0xf]
  %v27 = vld [vmem:[%s0 + $0x3c] sm:$0xf]
  %v28 = vld [vmem:[%s0 + $0x40] sm:$0xf]
  %v29 = vld [vmem:[%s0 + $0x44] sm:$0xf]
  %v30 = vld [vmem:[%s0 + $0x48] sm:$0xf]
  %v31 = vld [vmem:[%s0 + $0x4c] sm:$0xf]
  %v32 = vld [vmem:[%s0 + $0x50] sm:$0xf]
  %v33 = vld [vmem:[%s0 + $0x54] sm:$0xf]
  %v34 = vld [vmem:[%s0 + $0x58] sm:$0xf]
  %v35 = vld [vmem:[%s0 + $0x5c] sm:$0xf]
  %v36 = vld [vmem:[%s0 + $0x60] sm:$0xf]
  %v37 = vld [vmem:[%s0 + $0x64] sm:$0xf]
  %v38 = vld [vmem:[%s0 + $0x68] sm:$0xf]
  %v39 = vld [vmem:[%s0 + $0x6c] sm:$0xf]
  %v40 = vld [vmem:[%s0 + $0x70] sm:$0xf]
  %v41 = vld [vmem:[%s0 + $0x74] sm:$0xf]
  %v42 = vld [vmem:[%s0 + $0x78] sm:$0xf]
  %v43 = vld [vmem:[%s0 + $0x7c] sm:$0xf]
  %v44 = vld [vmem:[%s1] sm:$0xf]
  %v45 = vld [vmem:[%s1 + $0x4] sm:$0xf]
  %v46 = vld [vmem:[%s1 + $0x8] sm:$0xf]
  %v47 = vld [vmem:[%s1 + $0xc] sm:$0xf]
  %v48 = vld [vmem:[%s1 + $0x10] sm:$0xf]
  %v49 = vld [vmem:[%s1 + $0x14] sm:$0xf]
  %v50 = vld [vmem:[%s1 + $0x18] sm:$0xf]
  %v51 = vld [vmem:[%s1 + $0x1c] sm:$0xf]
  %v52 = vld [vmem:[%s1 + $0x20] sm:$0xf]
  %v53 = vld [vmem:[%s1 + $0x24] sm:$0xf]
  %v54 = vld [vmem:[%s1 + $0x28] sm:$0xf]
  %v55 = vld [vmem:[%s1 + $0x2c] sm:$0xf]
  %v56 = vld [vmem:[%s1 + $0x30] sm:$0xf]
  %v57 = vld [vmem:[%s1 + $0x34] sm:$0xf]
  %v58 = vld [vmem:[%s1 + $0x38] sm:$0xf]
  %v59 = vld [vmem:[%s1 + $0x3c] sm:$0xf]
  %v92 = vunpack.c.l.b16 %v12
  %v93 = vunpack.c.l.b16 %v13
  %v94 = vunpack.c.l.b16 %v14
  %v95 = vunpack.c.l.b16 %v15
  %v96 = vunpack.c.l.b16 %v16
  %v97 = vunpack.c.l.b16 %v17
  %v98 = vunpack.c.l.b16 %v18
  %v99 = vunpack.c.l.b16 %v19
  %v100 = vunpack.c.l.b16 %v20
  %v101 = vunpack.c.l.b16 %v21
  %v102 = vunpack.c.l.b16 %v22
  %v103 = vunpack.c.l.b16 %v23
  %v104 = vunpack.c.l.b16 %v24
  %v105 = vunpack.c.l.b16 %v25
  %v106 = vunpack.c.l.b16 %v26
  %v107 = vunpack.c.l.b16 %v27
  %v108 = vunpack.c.l.b16 %v28
  %v109 = vunpack.c.l.b16 %v29
  %v110 = vunpack.c.l.b16 %v30
  %v111 = vunpack.c.l.b16 %v31
  %v112 = vunpack.c.l.b16 %v32
  %v113 = vunpack.c.l.b16 %v33
  %v114 = vunpack.c.l.b16 %v34
  %v115 = vunpack.c.l.b16 %v35
  %v116 = vunpack.c.l.b16 %v36
  %v117 = vunpack.c.l.b16 %v37
  %v118 = vunpack.c.l.b16 %v38
  %v119 = vunpack.c.l.b16 %v39
  %v120 = vunpack.c.l.b16 %v40
  %v121 = vunpack.c.l.b16 %v41
  %v122 = vunpack.c.l.b16 %v42
  %v123 = vunpack.c.l.b16 %v43
  %v124 = vpack.c.b16 %v93, %v92
  %v125 = vpack.c.b16 %v95, %v94
  %v126 = vpack.c.b16 %v97, %v96
  %v127 = vpack.c.b16 %v99, %v98
  %v128 = vpack.c.b16 %v101, %v100
  %v129 = vpack.c.b16 %v103, %v102
  %v130 = vpack.c.b16 %v105, %v104
  %v131 = vpack.c.b16 %v107, %v106
  %v132 = vpack.c.b16 %v109, %v108
  %v133 = vpack.c.b16 %v111, %v110
  %v134 = vpack.c.b16 %v113, %v112
  %v135 = vpack.c.b16 %v115, %v114
  %v136 = vpack.c.b16 %v117, %v116
  %v137 = vpack.c.b16 %v119, %v118
  %v138 = vpack.c.b16 %v121, %v120
  %v139 = vpack.c.b16 %v123, %v122
  %v172 = vunpack.c.l.b16 %v44
  %v173 = vunpack.c.l.b16 %v45
  %v174 = vunpack.c.l.b16 %v46
  %v175 = vunpack.c.l.b16 %v47
  %v176 = vunpack.c.l.b16 %v48
  %v177 = vunpack.c.l.b16 %v49
  %v178 = vunpack.c.l.b16 %v50
  %v179 = vunpack.c.l.b16 %v51
  %v180 = vunpack.c.l.b16 %v52
  %v181 = vunpack.c.l.b16 %v53
  %v182 = vunpack.c.l.b16 %v54
  %v183 = vunpack.c.l.b16 %v55
  %v184 = vunpack.c.l.b16 %v56
  %v185 = vunpack.c.l.b16 %v57
  %v186 = vunpack.c.l.b16 %v58
  %v187 = vunpack.c.l.b16 %v59
  %v188 = vpack.c.b16 %v173, %v172
  %v189 = vpack.c.b16 %v175, %v174
  %v190 = vpack.c.b16 %v177, %v176
  %v191 = vpack.c.b16 %v179, %v178
  %v192 = vpack.c.b16 %v181, %v180
  %v193 = vpack.c.b16 %v183, %v182
  %v194 = vpack.c.b16 %v185, %v184
  %v195 = vpack.c.b16 %v187, %v186
  %204 = vmatprep.subr.bf16.mxu0 0
  %205 = vmatpush1.bf16.msra.mxu0 %v188
  %206 = vmatprep.subr.bf16.mxu0 0
  %207 = vmatpush1.bf16.msra.mxu0 %v189
  %208 = vmatprep.subr.bf16.mxu0 0
  %209 = vmatpush1.bf16.msra.mxu0 %v190
  %210 = vmatprep.subr.bf16.mxu0 0
  %211 = vmatpush1.bf16.msra.mxu0 %v191
  %212 = vmatprep.subr.bf16.mxu0 0
  %213 = vmatpush1.bf16.msra.mxu0 %v192
  %214 = vmatprep.subr.bf16.mxu0 0
  %215 = vmatpush1.bf16.msra.mxu0 %v193
  %216 = vmatprep.subr.bf16.mxu0 0
  %217 = vmatpush1.bf16.msra.mxu0 %v194
  %218 = vmatprep.subr.bf16.mxu0 0
  %219 = vmatpush1.bf16.msra.mxu0 %v195
  %220 = vmatprep.subr.bf16.mxu0 0
  %221 = vmatpush1.bf16.msra.mxu0 0
  %222 = vmatprep.subr.bf16.mxu0 0
  %223 = vmatpush1.bf16.msra.mxu0 0
  %224 = vmatprep.subr.bf16.mxu0 0
  %225 = vmatpush1.bf16.msra.mxu0 0
  %226 = vmatprep.subr.bf16.mxu0 0
  %227 = vmatpush1.bf16.msra.mxu0 0
  %228 = vmatprep.subr.bf16.mxu0 0
  %229 = vmatpush1.bf16.msra.mxu0 0
  %230 = vmatprep.subr.bf16.mxu0 0
  %231 = vmatpush1.bf16.msra.mxu0 0
  %232 = vmatprep.subr.bf16.mxu0 0
  %233 = vmatpush1.bf16.msra.mxu0 0
  %234 = vmatprep.subr.bf16.mxu0 0
  %235 = vmatpush1.bf16.msra.mxu0 0
  %236 = vmatprep.mubr.bf16.mxu0 0
  %237 = vmatmul.mubr.bf16.gmra.mrb[0].mxu0 %v124
  %v238 = vpop.f32.mrb[0].mxu0
  %v239 = vadd.f32 0.0, %v238
  %v240 = vpop.f32.mrb[0].mxu0
  %v241 = vpop.f32.mrb[0].mxu0
  %v242 = vadd.f32 0.0, %v241
  %v243 = vpop.f32.mrb[0].mxu0
  %244 = vmatprep.mubr.bf16.mxu0 0
  %245 = vmatmul.mubr.bf16.gmra.mrb[0].mxu0 %v125
  %v246 = vpop.f32.mrb[0].mxu0
  %v247 = vadd.f32 0.0, %v246
  %v248 = vpop.f32.mrb[0].mxu0
  %v249 = vpop.f32.mrb[0].mxu0
  %v250 = vadd.f32 0.0, %v249
  %v251 = vpop.f32.mrb[0].mxu0
  %252 = vmatprep.mubr.bf16.mxu0 0
  %253 = vmatmul.mubr.bf16.gmra.mrb[0].mxu0 %v126
  %v254 = vpop.f32.mrb[0].mxu0
  %v255 = vadd.f32 0.0, %v254
  %v256 = vpop.f32.mrb[0].mxu0
  %v257 = vpop.f32.mrb[0].mxu0
  %v258 = vadd.f32 0.0, %v257
  %v259 = vpop.f32.mrb[0].mxu0
  %260 = vmatprep.mubr.bf16.mxu0 0
  %261 = vmatmul.mubr.bf16.gmra.mrb[0].mxu0 %v127
  %v262 = vpop.f32.mrb[0].mxu0
  %v263 = vadd.f32 0.0, %v262
  %v264 = vpop.f32.mrb[0].mxu0
  %v265 = vpop.f32.mrb[0].mxu0
  %v266 = vadd.f32 0.0, %v265
  %v267 = vpop.f32.mrb[0].mxu0
  %268 = vmatprep.mubr.bf16.mxu0 0
  %269 = vmatmul.mubr.bf16.gmra.mrb[0].mxu0 %v128
  %v270 = vpop.f32.mrb[0].mxu0
  %v271 = vadd.f32 0.0, %v270
  %v272 = vpop.f32.mrb[0].mxu0
  %v273 = vpop.f32.mrb[0].mxu0
  %v274 = vadd.f32 0.0, %v273
  %v275 = vpop.f32.mrb[0].mxu0
  %276 = vmatprep.mubr.bf16.mxu0 0
  %277 = vmatmul.mubr.bf16.gmra.mrb[0].mxu0 %v129
  %v278 = vpop.f32.mrb[0].mxu0
  %v279 = vadd.f32 0.0, %v278
  %v280 = vpop.f32.mrb[0].mxu0
  %v281 = vpop.f32.mrb[0].mxu0
  %v282 = vadd.f32 0.0, %v281
  %v283 = vpop.f32.mrb[0].mxu0
  %284 = vmatprep.mubr.bf16.mxu0 0
  %285 = vmatmul.mubr.bf16.gmra.mrb[0].mxu0 %v130
  %v286 = vpop.f32.mrb[0].mxu0
  %v287 = vadd.f32 0.0, %v286
  %v288 = vpop.f32.mrb[0].mxu0
  %v289 = vpop.f32.mrb[0].mxu0
  %v290 = vadd.f32 0.0, %v289
  %v291 = vpop.f32.mrb[0].mxu0
  %292 = vmatprep.mubr.bf16.mxu0 0
  %293 = vmatmul.mubr.bf16.gmra.mrb[0].mxu0 %v131
  %v294 = vpop.f32.mrb[0].mxu0
  %v295 = vadd.f32 0.0, %v294
  %v296 = vpop.f32.mrb[0].mxu0
  %v297 = vpop.f32.mrb[0].mxu0
  %v298 = vadd.f32 0.0, %v297
  %v299 = vpop.f32.mrb[0].mxu0
  %300 = vmatprep.mubr.bf16.mxu0 0
  %301 = vmatmul.mubr.bf16.gmra.mrb[0].mxu0 %v132
  %v302 = vpop.f32.mrb[0].mxu0
  %v303 = vadd.f32 0.0, %v302
  %v304 = vpop.f32.mrb[0].mxu0
  %v305 = vpop.f32.mrb[0].mxu0
  %v306 = vadd.f32 0.0, %v305
  %v307 = vpop.f32.mrb[0].mxu0
  %308 = vmatprep.mubr.bf16.mxu0 0
  %309 = vmatmul.mubr.bf16.gmra.mrb[0].mxu0 %v133
  %v310 = vpop.f32.mrb[0].mxu0
  %v311 = vadd.f32 0.0, %v310
  %v312 = vpop.f32.mrb[0].mxu0
  %v313 = vpop.f32.mrb[0].mxu0
  %v314 = vadd.f32 0.0, %v313
  %v315 = vpop.f32.mrb[0].mxu0
  %316 = vmatprep.mubr.bf16.mxu0 0
  %317 = vmatmul.mubr.bf16.gmra.mrb[0].mxu0 %v134
  %v318 = vpop.f32.mrb[0].mxu0
  %v319 = vadd.f32 0.0, %v318
  %v320 = vpop.f32.mrb[0].mxu0
  %v321 = vpop.f32.mrb[0].mxu0
  %v322 = vadd.f32 0.0, %v321
  %v323 = vpop.f32.mrb[0].mxu0
  %324 = vmatprep.mubr.bf16.mxu0 0
  %325 = vmatmul.mubr.bf16.gmra.mrb[0].mxu0 %v135
  %v326 = vpop.f32.mrb[0].mxu0
  %v327 = vadd.f32 0.0, %v326
  %v328 = vpop.f32.mrb[0].mxu0
  %v329 = vpop.f32.mrb[0].mxu0
  %v330 = vadd.f32 0.0, %v329
  %v331 = vpop.f32.mrb[0].mxu0
  %332 = vmatprep.mubr.bf16.mxu0 0
  %333 = vmatmul.mubr.bf16.gmra.mrb[0].mxu0 %v136
  %v334 = vpop.f32.mrb[0].mxu0
  %v335 = vadd.f32 0.0, %v334
  %v336 = vpop.f32.mrb[0].mxu0
  %v337 = vpop.f32.mrb[0].mxu0
  %v338 = vadd.f32 0.0, %v337
  %v339 = vpop.f32.mrb[0].mxu0
  %340 = vmatprep.mubr.bf16.mxu0 0
  %341 = vmatmul.mubr.bf16.gmra.mrb[0].mxu0 %v137
  %v342 = vpop.f32.mrb[0].mxu0
  %v343 = vadd.f32 0.0, %v342
  %v344 = vpop.f32.mrb[0].mxu0
  %v345 = vpop.f32.mrb[0].mxu0
  %v346 = vadd.f32 0.0, %v345
  %v347 = vpop.f32.mrb[0].mxu0
  %348 = vmatprep.mubr.bf16.mxu0 0
  %349 = vmatmul.mubr.bf16.gmra.mrb[0].mxu0 %v138
  %v350 = vpop.f32.mrb[0].mxu0
  %v351 = vadd.f32 0.0, %v350
  %v352 = vpop.f32.mrb[0].mxu0
  %v353 = vpop.f32.mrb[0].mxu0
  %v354 = vadd.f32 0.0, %v353
  %v355 = vpop.f32.mrb[0].mxu0
  %356 = vmatprep.mubr.bf16.mxu0 0
  %357 = vmatmul.mubr.bf16.gmra.mrb[0].mxu0 %v139
  %v358 = vpop.f32.mrb[0].mxu0
  %v359 = vadd.f32 0.0, %v358
  %v360 = vpop.f32.mrb[0].mxu0
  %v361 = vpop.f32.mrb[0].mxu0
  %v362 = vadd.f32 0.0, %v361
  %v363 = vpop.f32.mrb[0].mxu0
  %364 = vdwg.mxu0
  %v365 = vpack.c.bf16 %v242, %v239
  %v366 = vpack.c.bf16 %v250, %v247
  %v367 = vpack.c.bf16 %v258, %v255
  %v368 = vpack.c.bf16 %v266, %v263
  %v369 = vpack.c.bf16 %v274, %v271
  %v370 = vpack.c.bf16 %v282, %v279
  %v371 = vpack.c.bf16 %v290, %v287
  %v372 = vpack.c.bf16 %v298, %v295
  %v373 = vpack.c.bf16 %v306, %v303
  %v374 = vpack.c.bf16 %v314, %v311
  %v375 = vpack.c.bf16 %v322, %v319
  %v376 = vpack.c.bf16 %v330, %v327
  %v377 = vpack.c.bf16 %v338, %v335
  %v378 = vpack.c.bf16 %v346, %v343
  %v379 = vpack.c.bf16 %v354, %v351
  %v380 = vpack.c.bf16 %v362, %v359
  %v397 = vunpack.c.l.b16 %v365
  %v398 = vunpack.c.h.b16 %v365
  %v399 = vunpack.c.l.b16 %v366
  %v400 = vunpack.c.h.b16 %v366
  %v401 = vunpack.c.l.b16 %v367
  %v402 = vunpack.c.h.b16 %v367
  %v403 = vunpack.c.l.b16 %v368
  %v404 = vunpack.c.h.b16 %v368
  %v405 = vunpack.c.l.b16 %v369
  %v406 = vunpack.c.h.b16 %v369
  %v407 = vunpack.c.l.b16 %v370
  %v408 = vunpack.c.h.b16 %v370
  %v409 = vunpack.c.l.b16 %v371
  %v410 = vunpack.c.h.b16 %v371
  %v411 = vunpack.c.l.b16 %v372
  %v412 = vunpack.c.h.b16 %v372
  %v413 = vunpack.c.l.b16 %v373
  %v414 = vunpack.c.h.b16 %v373
  %v415 = vunpack.c.l.b16 %v374
  %v416 = vunpack.c.h.b16 %v374
  %v417 = vunpack.c.l.b16 %v375
  %v418 = vunpack.c.h.b16 %v375
  %v419 = vunpack.c.l.b16 %v376
  %v420 = vunpack.c.h.b16 %v376
  %v421 = vunpack.c.l.b16 %v377
  %v422 = vunpack.c.h.b16 %v377
  %v423 = vunpack.c.l.b16 %v378
  %v424 = vunpack.c.h.b16 %v378
  %v425 = vunpack.c.l.b16 %v379
  %v426 = vunpack.c.h.b16 %v379
  %v427 = vunpack.c.l.b16 %v380
  %v428 = vunpack.c.h.b16 %v380
  %v429 = vpack.c.b16 %v397, %v397
  %v430 = vpack.c.b16 %v398, %v398
  %v431 = vpack.c.b16 %v399, %v399
  %v432 = vpack.c.b16 %v400, %v400
  %v433 = vpack.c.b16 %v401, %v401
  %v434 = vpack.c.b16 %v402, %v402
  %v435 = vpack.c.b16 %v403, %v403
  %v436 = vpack.c.b16 %v404, %v404
  %v437 = vpack.c.b16 %v405, %v405
  %v438 = vpack.c.b16 %v406, %v406
  %v439 = vpack.c.b16 %v407, %v407
  %v440 = vpack.c.b16 %v408, %v408
  %v441 = vpack.c.b16 %v409, %v409
  %v442 = vpack.c.b16 %v410, %v410
  %v443 = vpack.c.b16 %v411, %v411
  %v444 = vpack.c.b16 %v412, %v412
  %v445 = vpack.c.b16 %v413, %v413
  %v446 = vpack.c.b16 %v414, %v414
  %v447 = vpack.c.b16 %v415, %v415
  %v448 = vpack.c.b16 %v416, %v416
  %v449 = vpack.c.b16 %v417, %v417
  %v450 = vpack.c.b16 %v418, %v418
  %v451 = vpack.c.b16 %v419, %v419
  %v452 = vpack.c.b16 %v420, %v420
  %v453 = vpack.c.b16 %v421, %v421
  %v454 = vpack.c.b16 %v422, %v422
  %v455 = vpack.c.b16 %v423, %v423
  %v456 = vpack.c.b16 %v424, %v424
  %v457 = vpack.c.b16 %v425, %v425
  %v458 = vpack.c.b16 %v426, %v426
  %v459 = vpack.c.b16 %v427, %v427
  %v460 = vpack.c.b16 %v428, %v428
  %493 = vst [vmem:[%s2] sm:$0xf] %v429
  %494 = vst [vmem:[%s2 + $0x4] sm:$0xf] %v430
  %495 = vst [vmem:[%s2 + $0x8] sm:$0xf] %v431
  %496 = vst [vmem:[%s2 + $0xc] sm:$0xf] %v432
  %497 = vst [vmem:[%s2 + $0x10] sm:$0xf] %v433
  %498 = vst [vmem:[%s2 + $0x14] sm:$0xf] %v434
  %499 = vst [vmem:[%s2 + $0x18] sm:$0xf] %v435
  %500 = vst [vmem:[%s2 + $0x1c] sm:$0xf] %v436
  %501 = vst [vmem:[%s2 + $0x20] sm:$0xf] %v437
  %502 = vst [vmem:[%s2 + $0x24] sm:$0xf] %v438
  %503 = vst [vmem:[%s2 + $0x28] sm:$0xf] %v439
  %504 = vst [vmem:[%s2 + $0x2c] sm:$0xf] %v440
  %505 = vst [vmem:[%s2 + $0x30] sm:$0xf] %v441
  %506 = vst [vmem:[%s2 + $0x34] sm:$0xf] %v442
  %507 = vst [vmem:[%s2 + $0x38] sm:$0xf] %v443
  %508 = vst [vmem:[%s2 + $0x3c] sm:$0xf] %v444
  %509 = vst [vmem:[%s2 + $0x40] sm:$0xf] %v445
  %510 = vst [vmem:[%s2 + $0x44] sm:$0xf] %v446
  %511 = vst [vmem:[%s2 + $0x48] sm:$0xf] %v447
  %512 = vst [vmem:[%s2 + $0x4c] sm:$0xf] %v448
  %513 = vst [vmem:[%s2 + $0x50] sm:$0xf] %v449
  %514 = vst [vmem:[%s2 + $0x54] sm:$0xf] %v450
  %515 = vst [vmem:[%s2 + $0x58] sm:$0xf] %v451
  %516 = vst [vmem:[%s2 + $0x5c] sm:$0xf] %v452
  %517 = vst [vmem:[%s2 + $0x60] sm:$0xf] %v453
  %518 = vst [vmem:[%s2 + $0x64] sm:$0xf] %v454
  %519 = vst [vmem:[%s2 + $0x68] sm:$0xf] %v455
  %520 = vst [vmem:[%s2 + $0x6c] sm:$0xf] %v456
  %521 = vst [vmem:[%s2 + $0x70] sm:$0xf] %v457
  %522 = vst [vmem:[%s2 + $0x74] sm:$0xf] %v458
  %523 = vst [vmem:[%s2 + $0x78] sm:$0xf] %v459
  %524 = vst [vmem:[%s2 + $0x7c] sm:$0xf] %v460
  // Predicated region
  $region10: #{graphsage_forward.4} parent=0 // pred_check
    _
  $region11: #{graphsage_forward.4} parent=0 // pred_check_branch
    %526 = sbr.rel (0) target = $region13
  $region12: #{graphsage_forward.4} parent=0 // pred_region
    _
  $region13: #{graphsage_forward.4} parent=0 // pred_fallthru
    _
  // Predicated region
  $region14: #{graphsage_forward.4} parent=0 // pred_check
    _
  $region15: #{graphsage_forward.4} parent=0 // pred_check_branch
    %528 = sbr.rel (0) target = $region17
  $region16: #{graphsage_forward.4} parent=0 // pred_region
    _
  $region17: #{graphsage_forward.4} parent=0 // pred_fallthru
    _

// kernel: graphsage_forward.5
$region0: #{graphsage_forward.5}
  #allocation0 [shape = 'u32[]', space=smem, size = 0x4, offset = 0x4, fixed_abs, tag = 'smem constant byte address 0x4 - core index']
  #allocation1 [shape = 'u32[144,128]{1,0:T(1,128)}', space=vmem, size = 0x12000, scoped, tag = 'internal scratch']
  #allocation2 [shape = 'f32[256,128]{1,0:T(8,128)}', space=vmem, size = 0x20000, scoped, tag = 'scratch operand']
  %s0 = inlined_call_operand.vmem [shape: bf16[256,256], index: 0, kind: input, shape index: {}]
  %s1 = inlined_call_operand.vmem [shape: bf16[256,128], index: 1, kind: input, shape index: {}]
  %s2 = inlined_call_operand.vmem [shape: bf16[256,128], index: 2, kind: input, shape index: {}]
  %s3 = inlined_call_operand.vmem [shape: bf16[128,128], index: 3, kind: input, shape index: {}]
  %s4 = inlined_call_operand.vmem [shape: f32[1,128], index: 4, kind: input, shape index: {}]
  %s5 = inlined_call_operand.vmem [shape: f32[256,1], index: 5, kind: input, shape index: {}]
  %s6 = inlined_call_operand.vmem [shape: bf16[256,128], index: 6, kind: output, shape index: {}]
  %s7 = sld [smem:[#allocation0]]
  $region42: #{graphsage_forward.5} parent=0
    _
  %s9 = ssub.s32 1, %s7
  %s10 = scalar_select 0, %s9, %s7
  // Predicated region
  $region2: #{graphsage_forward.5} parent=0 // pred_check
    _
  $region3: #{graphsage_forward.5} parent=0 // pred_check_branch
    %12 = sbr.rel (0) target = $region5
  $region4: #{graphsage_forward.5} parent=0 // pred_region
    _
  $region5: #{graphsage_forward.5} parent=0 // pred_fallthru
    _
  // Predicated region
  $region6: #{graphsage_forward.5} parent=0 // pred_check
    _
  $region7: #{graphsage_forward.5} parent=0 // pred_check_branch
    %14 = sbr.rel (0) target = $region9
  $region8: #{graphsage_forward.5} parent=0 // pred_region
    _
  $region9: #{graphsage_forward.5} parent=0 // pred_fallthru
    _
  // Predicated region
  $region10: #{graphsage_forward.5} parent=0 // pred_check
    _
  $region11: #{graphsage_forward.5} parent=0 // pred_check_branch
    %16 = sbr.rel (0) target = $region13
  $region12: #{graphsage_forward.5} parent=0 // pred_region
    _
  $region13: #{graphsage_forward.5} parent=0 // pred_fallthru
    _
  // Predicated region
  $region14: #{graphsage_forward.5} parent=0 // pred_check
    _
  $region15: #{graphsage_forward.5} parent=0 // pred_check_branch
    %18 = sbr.rel (0) target = $region17
  $region16: #{graphsage_forward.5} parent=0 // pred_region
    _
  $region17: #{graphsage_forward.5} parent=0 // pred_fallthru
    _
  // Predicated region
  $region18: #{graphsage_forward.5} parent=0 // pred_check
    _
  $region19: #{graphsage_forward.5} parent=0 // pred_check_branch
    %20 = sbr.rel (0) target = $region21
  $region20: #{graphsage_forward.5} parent=0 // pred_region
    _
  $region21: #{graphsage_forward.5} parent=0 // pred_fallthru
    _
  // Predicated region
  $region22: #{graphsage_forward.5} parent=0 // pred_check
    _
  $region23: #{graphsage_forward.5} parent=0 // pred_check_branch
    %22 = sbr.rel (0) target = $region25
  $region24: #{graphsage_forward.5} parent=0 // pred_region
    _
  $region25: #{graphsage_forward.5} parent=0 // pred_fallthru
    _
  %p24 = scmp.eq.s32.totalorder 0, 0
  // Predicated region
  $region26: #{graphsage_forward.5} parent=0 // pred_check
    %p25 = pneg %p24
  $region27: #{graphsage_forward.5} parent=0 // pred_check_branch
    %27 = sbr.rel (%p25) target = $region29
  $region28: #{graphsage_forward.5} parent=0 // pred_region
    %28 = vst [vmem:[#allocation2] sm:$0xff] 0.0
    %29 = vst [vmem:[#allocation2 + $0x8] sm:$0xff] 0.0
    %30 = vst [vmem:[#allocation2 + $0x10] sm:$0xff] 0.0
    %31 = vst [vmem:[#allocation2 + $0x18] sm:$0xff] 0.0
    %32 = vst [vmem:[#allocation2 + $0x20] sm:$0xff] 0.0
    %33 = vst [vmem:[#allocation2 + $0x28] sm:$0xff] 0.0
    %34 = vst [vmem:[#allocation2 + $0x30] sm:$0xff] 0.0
    %35 = vst [vmem:[#allocation2 + $0x38] sm:$0xff] 0.0
    %36 = vst [vmem:[#allocation2 + $0x40] sm:$0xff] 0.0
    %37 = vst [vmem:[#allocation2 + $0x48] sm:$0xff] 0.0
    %38 = vst [vmem:[#allocation2 + $0x50] sm:$0xff] 0.0
    %39 = vst [vmem:[#allocation2 + $0x58] sm:$0xff] 0.0
    %40 = vst [vmem:[#allocation2 + $0x60] sm:$0xff] 0.0
    %41 = vst [vmem:[#allocation2 + $0x68] sm:$0xff] 0.0
    %42 = vst [vmem:[#allocation2 + $0x70] sm:$0xff] 0.0
    %43 = vst [vmem:[#allocation2 + $0x78] sm:$0xff] 0.0
    %44 = vst [vmem:[#allocation2 + $0x80] sm:$0xff] 0.0
    %45 = vst [vmem:[#allocation2 + $0x88] sm:$0xff] 0.0
    %46 = vst [vmem:[#allocation2 + $0x90] sm:$0xff] 0.0
    %47 = vst [vmem:[#allocation2 + $0x98] sm:$0xff] 0.0
    %48 = vst [vmem:[#allocation2 + $0xa0] sm:$0xff] 0.0
    %49 = vst [vmem:[#allocation2 + $0xa8] sm:$0xff] 0.0
    %50 = vst [vmem:[#allocation2 + $0xb0] sm:$0xff] 0.0
    %51 = vst [vmem:[#allocation2 + $0xb8] sm:$0xff] 0.0
    %52 = vst [vmem:[#allocation2 + $0xc0] sm:$0xff] 0.0
    %53 = vst [vmem:[#allocation2 + $0xc8] sm:$0xff] 0.0
    %54 = vst [vmem:[#allocation2 + $0xd0] sm:$0xff] 0.0
    %55 = vst [vmem:[#allocation2 + $0xd8] sm:$0xff] 0.0
    %56 = vst [vmem:[#allocation2 + $0xe0] sm:$0xff] 0.0
    %57 = vst [vmem:[#allocation2 + $0xe8] sm:$0xff] 0.0
    %58 = vst [vmem:[#allocation2 + $0xf0] sm:$0xff] 0.0
    %59 = vst [vmem:[#allocation2 + $0xf8] sm:$0xff] 0.0
  $region29: #{graphsage_forward.5} parent=0 // pred_fallthru
    _
  %v60 = vld [vmem:[#allocation2] sm:$0xff]
  %v61 = vld [vmem:[#allocation2 + $0x8] sm:$0xff]
  %v62 = vld [vmem:[#allocation2 + $0x10] sm:$0xff]
  %v63 = vld [vmem:[#allocation2 + $0x18] sm:$0xff]
  %v64 = vld [vmem:[#allocation2 + $0x20] sm:$0xff]
  %v65 = vld [vmem:[#allocation2 + $0x28] sm:$0xff]
  %v66 = vld [vmem:[#allocation2 + $0x30] sm:$0xff]
  %v67 = vld [vmem:[#allocation2 + $0x38] sm:$0xff]
  %v68 = vld [vmem:[#allocation2 + $0x40] sm:$0xff]
  %v69 = vld [vmem:[#allocation2 + $0x48] sm:$0xff]
  %v70 = vld [vmem:[#allocation2 + $0x50] sm:$0xff]
  %v71 = vld [vmem:[#allocation2 + $0x58] sm:$0xff]
  %v72 = vld [vmem:[#allocation2 + $0x60] sm:$0xff]
  %v73 = vld [vmem:[#allocation2 + $0x68] sm:$0xff]
  %v74 = vld [vmem:[#allocation2 + $0x70] sm:$0xff]
  %v75 = vld [vmem:[#allocation2 + $0x78] sm:$0xff]
  %v76 = vld [vmem:[#allocation2 + $0x80] sm:$0xff]
  %v77 = vld [vmem:[#allocation2 + $0x88] sm:$0xff]
  %v78 = vld [vmem:[#allocation2 + $0x90] sm:$0xff]
  %v79 = vld [vmem:[#allocation2 + $0x98] sm:$0xff]
  %v80 = vld [vmem:[#allocation2 + $0xa0] sm:$0xff]
  %v81 = vld [vmem:[#allocation2 + $0xa8] sm:$0xff]
  %v82 = vld [vmem:[#allocation2 + $0xb0] sm:$0xff]
  %v83 = vld [vmem:[#allocation2 + $0xb8] sm:$0xff]
  %v84 = vld [vmem:[#allocation2 + $0xc0] sm:$0xff]
  %v85 = vld [vmem:[#allocation2 + $0xc8] sm:$0xff]
  %v86 = vld [vmem:[#allocation2 + $0xd0] sm:$0xff]
  %v87 = vld [vmem:[#allocation2 + $0xd8] sm:$0xff]
  %v88 = vld [vmem:[#allocation2 + $0xe0] sm:$0xff]
  %v89 = vld [vmem:[#allocation2 + $0xe8] sm:$0xff]
  %v90 = vld [vmem:[#allocation2 + $0xf0] sm:$0xff]
  %v91 = vld [vmem:[#allocation2 + $0xf8] sm:$0xff]
  %v92 = vld [vmem:[%s0] sm:$0xff]
  %v93 = vld [vmem:[%s0 + $0x8] sm:$0xff]
  %v94 = vld [vmem:[%s0 + $0x10] sm:$0xff]
  %v95 = vld [vmem:[%s0 + $0x18] sm:$0xff]
  %v96 = vld [vmem:[%s0 + $0x20] sm:$0xff]
  %v97 = vld [vmem:[%s0 + $0x28] sm:$0xff]
  %v98 = vld [vmem:[%s0 + $0x30] sm:$0xff]
  %v99 = vld [vmem:[%s0 + $0x38] sm:$0xff]
  %v100 = vld [vmem:[%s0 + $0x40] sm:$0xff]
  %v101 = vld [vmem:[%s0 + $0x48] sm:$0xff]
  %v102 = vld [vmem:[%s0 + $0x50] sm:$0xff]
  %v103 = vld [vmem:[%s0 + $0x58] sm:$0xff]
  %v104 = vld [vmem:[%s0 + $0x60] sm:$0xff]
  %v105 = vld [vmem:[%s0 + $0x68] sm:$0xff]
  %v106 = vld [vmem:[%s0 + $0x70] sm:$0xff]
  %v107 = vld [vmem:[%s0 + $0x78] sm:$0xff]
  %v108 = vld [vmem:[%s0 + $0x80] sm:$0xff]
  %v109 = vld [vmem:[%s0 + $0x88] sm:$0xff]
  %v110 = vld [vmem:[%s0 + $0x90] sm:$0xff]
  %v111 = vld [vmem:[%s0 + $0x98] sm:$0xff]
  %v112 = vld [vmem:[%s0 + $0xa0] sm:$0xff]
  %v113 = vld [vmem:[%s0 + $0xa8] sm:$0xff]
  %v114 = vld [vmem:[%s0 + $0xb0] sm:$0xff]
  %v115 = vld [vmem:[%s0 + $0xb8] sm:$0xff]
  %v116 = vld [vmem:[%s0 + $0xc0] sm:$0xff]
  %v117 = vld [vmem:[%s0 + $0xc8] sm:$0xff]
  %v118 = vld [vmem:[%s0 + $0xd0] sm:$0xff]
  %v119 = vld [vmem:[%s0 + $0xd8] sm:$0xff]
  %v120 = vld [vmem:[%s0 + $0xe0] sm:$0xff]
  %v121 = vld [vmem:[%s0 + $0xe8] sm:$0xff]
  %v122 = vld [vmem:[%s0 + $0xf0] sm:$0xff]
  %v123 = vld [vmem:[%s0 + $0xf8] sm:$0xff]
  %v124 = vld [vmem:[%s1] sm:$0xf]
  %v125 = vld [vmem:[%s1 + $0x4] sm:$0xf]
  %v126 = vld [vmem:[%s1 + $0x8] sm:$0xf]
  %v127 = vld [vmem:[%s1 + $0xc] sm:$0xf]
  %v128 = vld [vmem:[%s1 + $0x10] sm:$0xf]
  %v129 = vld [vmem:[%s1 + $0x14] sm:$0xf]
  %v130 = vld [vmem:[%s1 + $0x18] sm:$0xf]
  %v131 = vld [vmem:[%s1 + $0x1c] sm:$0xf]
  %v132 = vld [vmem:[%s1 + $0x20] sm:$0xf]
  %v133 = vld [vmem:[%s1 + $0x24] sm:$0xf]
  %v134 = vld [vmem:[%s1 + $0x28] sm:$0xf]
  %v135 = vld [vmem:[%s1 + $0x2c] sm:$0xf]
  %v136 = vld [vmem:[%s1 + $0x30] sm:$0xf]
  %v137 = vld [vmem:[%s1 + $0x34] sm:$0xf]
  %v138 = vld [vmem:[%s1 + $0x38] sm:$0xf]
  %v139 = vld [vmem:[%s1 + $0x3c] sm:$0xf]
  %v140 = vld [vmem:[%s1 + $0x40] sm:$0xf]
  %v141 = vld [vmem:[%s1 + $0x44] sm:$0xf]
  %v142 = vld [vmem:[%s1 + $0x48] sm:$0xf]
  %v143 = vld [vmem:[%s1 + $0x4c] sm:$0xf]
  %v144 = vld [vmem:[%s1 + $0x50] sm:$0xf]
  %v145 = vld [vmem:[%s1 + $0x54] sm:$0xf]
  %v146 = vld [vmem:[%s1 + $0x58] sm:$0xf]
  %v147 = vld [vmem:[%s1 + $0x5c] sm:$0xf]
  %v148 = vld [vmem:[%s1 + $0x60] sm:$0xf]
  %v149 = vld [vmem:[%s1 + $0x64] sm:$0xf]
  %v150 = vld [vmem:[%s1 + $0x68] sm:$0xf]
  %v151 = vld [vmem:[%s1 + $0x6c] sm:$0xf]
  %v152 = vld [vmem:[%s1 + $0x70] sm:$0xf]
  %v153 = vld [vmem:[%s1 + $0x74] sm:$0xf]
  %v154 = vld [vmem:[%s1 + $0x78] sm:$0xf]
  %v155 = vld [vmem:[%s1 + $0x7c] sm:$0xf]
  %v188 = vunpack.c.l.b16 %v92
  %v189 = vunpack.c.h.b16 %v92
  %v190 = vunpack.c.l.b16 %v93
  %v191 = vunpack.c.h.b16 %v93
  %v192 = vunpack.c.l.b16 %v94
  %v193 = vunpack.c.h.b16 %v94
  %v194 = vunpack.c.l.b16 %v95
  %v195 = vunpack.c.h.b16 %v95
  %v196 = vunpack.c.l.b16 %v96
  %v197 = vunpack.c.h.b16 %v96
  %v198 = vunpack.c.l.b16 %v97
  %v199 = vunpack.c.h.b16 %v97
  %v200 = vunpack.c.l.b16 %v98
  %v201 = vunpack.c.h.b16 %v98
  %v202 = vunpack.c.l.b16 %v99
  %v203 = vunpack.c.h.b16 %v99
  %v204 = vunpack.c.l.b16 %v100
  %v205 = vunpack.c.h.b16 %v100
  %v206 = vunpack.c.l.b16 %v101
  %v207 = vunpack.c.h.b16 %v101
  %v208 = vunpack.c.l.b16 %v102
  %v209 = vunpack.c.h.b16 %v102
  %v210 = vunpack.c.l.b16 %v103
  %v211 = vunpack.c.h.b16 %v103
  %v212 = vunpack.c.l.b16 %v104
  %v213 = vunpack.c.h.b16 %v104
  %v214 = vunpack.c.l.b16 %v105
  %v215 = vunpack.c.h.b16 %v105
  %v216 = vunpack.c.l.b16 %v106
  %v217 = vunpack.c.h.b16 %v106
  %v218 = vunpack.c.l.b16 %v107
  %v219 = vunpack.c.h.b16 %v107
  %v220 = vunpack.c.l.b16 %v108
  %v221 = vunpack.c.h.b16 %v108
  %v222 = vunpack.c.l.b16 %v109
  %v223 = vunpack.c.h.b16 %v109
  %v224 = vunpack.c.l.b16 %v110
  %v225 = vunpack.c.h.b16 %v110
  %v226 = vunpack.c.l.b16 %v111
  %v227 = vunpack.c.h.b16 %v111
  %v228 = vunpack.c.l.b16 %v112
  %v229 = vunpack.c.h.b16 %v112
  %v230 = vunpack.c.l.b16 %v113
  %v231 = vunpack.c.h.b16 %v113
  %v232 = vunpack.c.l.b16 %v114
  %v233 = vunpack.c.h.b16 %v114
  %v234 = vunpack.c.l.b16 %v115
  %v235 = vunpack.c.h.b16 %v115
  %v236 = vunpack.c.l.b16 %v116
  %v237 = vunpack.c.h.b16 %v116
  %v238 = vunpack.c.l.b16 %v117
  %v239 = vunpack.c.h.b16 %v117
  %v240 = vunpack.c.l.b16 %v118
  %v241 = vunpack.c.h.b16 %v118
  %v242 = vunpack.c.l.b16 %v119
  %v243 = vunpack.c.h.b16 %v119
  %v244 = vunpack.c.l.b16 %v120
  %v245 = vunpack.c.h.b16 %v120
  %v246 = vunpack.c.l.b16 %v121
  %v247 = vunpack.c.h.b16 %v121
  %v248 = vunpack.c.l.b16 %v122
  %v249 = vunpack.c.h.b16 %v122
  %v250 = vunpack.c.l.b16 %v123
  %v251 = vunpack.c.h.b16 %v123
  %v252 = vpack.c.b16 %v190, %v188
  %v253 = vpack.c.b16 %v191, %v189
  %v254 = vpack.c.b16 %v194, %v192
  %v255 = vpack.c.b16 %v195, %v193
  %v256 = vpack.c.b16 %v198, %v196
  %v257 = vpack.c.b16 %v199, %v197
  %v258 = vpack.c.b16 %v202, %v200
  %v259 = vpack.c.b16 %v203, %v201
  %v260 = vpack.c.b16 %v206, %v204
  %v261 = vpack.c.b16 %v207, %v205
  %v262 = vpack.c.b16 %v210, %v208
  %v263 = vpack.c.b16 %v211, %v209
  %v264 = vpack.c.b16 %v214, %v212
  %v265 = vpack.c.b16 %v215, %v213
  %v266 = vpack.c.b16 %v218, %v216
  %v267 = vpack.c.b16 %v219, %v217
  %v268 = vpack.c.b16 %v222, %v220
  %v269 = vpack.c.b16 %v223, %v221
  %v270 = vpack.c.b16 %v226, %v224
  %v271 = vpack.c.b16 %v227, %v225
  %v272 = vpack.c.b16 %v230, %v228
  %v273 = vpack.c.b16 %v231, %v229
  %v274 = vpack.c.b16 %v234, %v232
  %v275 = vpack.c.b16 %v235, %v233
  %v276 = vpack.c.b16 %v238, %v236
  %v277 = vpack.c.b16 %v239, %v237
  %v278 = vpack.c.b16 %v242, %v240
  %v279 = vpack.c.b16 %v243, %v241
  %v280 = vpack.c.b16 %v246, %v244
  %v281 = vpack.c.b16 %v247, %v245
  %v282 = vpack.c.b16 %v250, %v248
  %v283 = vpack.c.b16 %v251, %v249
  %v348 = vunpack.c.l.b16 %v124
  %v349 = vunpack.c.l.b16 %v125
  %v350 = vunpack.c.l.b16 %v126
  %v351 = vunpack.c.l.b16 %v127
  %v352 = vunpack.c.l.b16 %v128
  %v353 = vunpack.c.l.b16 %v129
  %v354 = vunpack.c.l.b16 %v130
  %v355 = vunpack.c.l.b16 %v131
  %v356 = vunpack.c.l.b16 %v132
  %v357 = vunpack.c.l.b16 %v133
  %v358 = vunpack.c.l.b16 %v134
  %v359 = vunpack.c.l.b16 %v135
  %v360 = vunpack.c.l.b16 %v136
  %v361 = vunpack.c.l.b16 %v137
  %v362 = vunpack.c.l.b16 %v138
  %v363 = vunpack.c.l.b16 %v139
  %v364 = vunpack.c.l.b16 %v140
  %v365 = vunpack.c.l.b16 %v141
  %v366 = vunpack.c.l.b16 %v142
  %v367 = vunpack.c.l.b16 %v143
  %v368 = vunpack.c.l.b16 %v144
  %v369 = vunpack.c.l.b16 %v145
  %v370 = vunpack.c.l.b16 %v146
  %v371 = vunpack.c.l.b16 %v147
  %v372 = vunpack.c.l.b16 %v148
  %v373 = vunpack.c.l.b16 %v149
  %v374 = vunpack.c.l.b16 %v150
  %v375 = vunpack.c.l.b16 %v151
  %v376 = vunpack.c.l.b16 %v152
  %v377 = vunpack.c.l.b16 %v153
  %v378 = vunpack.c.l.b16 %v154
  %v379 = vunpack.c.l.b16 %v155
  %v380 = vpack.c.b16 %v349, %v348
  %v381 = vpack.c.b16 %v351, %v350
  %v382 = vpack.c.b16 %v353, %v352
  %v383 = vpack.c.b16 %v355, %v354
  %v384 = vpack.c.b16 %v357, %v356
  %v385 = vpack.c.b16 %v359, %v358
  %v386 = vpack.c.b16 %v361, %v360
  %v387 = vpack.c.b16 %v363, %v362
  %v388 = vpack.c.b16 %v365, %v364
  %v389 = vpack.c.b16 %v367, %v366
  %v390 = vpack.c.b16 %v369, %v368
  %v391 = vpack.c.b16 %v371, %v370
  %v392 = vpack.c.b16 %v373, %v372
  %v393 = vpack.c.b16 %v375, %v374
  %v394 = vpack.c.b16 %v377, %v376
  %v395 = vpack.c.b16 %v379, %v378
  %412 = vmatprep.subr.bf16.mxu0 0
  %413 = vmatpush1.bf16.msra.mxu0 %v380
  %414 = vmatprep.subr.bf16.mxu0 0
  %415 = vmatpush1.bf16.msra.mxu0 %v381
  %416 = vmatprep.subr.bf16.mxu0 0
  %417 = vmatpush1.bf16.msra.mxu0 %v382
  %418 = vmatprep.subr.bf16.mxu0 0
  %419 = vmatpush1.bf16.msra.mxu0 %v383
  %420 = vmatprep.subr.bf16.mxu0 0
  %421 = vmatpush1.bf16.msra.mxu0 %v384
  %422 = vmatprep.subr.bf16.mxu0 0
  %423 = vmatpush1.bf16.msra.mxu0 %v385
  %424 = vmatprep.subr.bf16.mxu0 0
  %425 = vmatpush1.bf16.msra.mxu0 %v386
  %426 = vmatprep.subr.bf16.mxu0 0
  %427 = vmatpush1.bf16.msra.mxu0 %v387
  %428 = vmatprep.subr.bf16.mxu0 0
  %429 = vmatpush1.bf16.msra.mxu0 %v388
  %430 = vmatprep.subr.bf16.mxu0 0
  %431 = vmatpush1.bf16.msra.mxu0 %v389
  %432 = vmatprep.subr.bf16.mxu0 0
  %433 = vmatpush1.bf16.msra.mxu0 %v390
  %434 = vmatprep.subr.bf16.mxu0 0
  %435 = vmatpush1.bf16.msra.mxu0 %v391
  %436 = vmatprep.subr.bf16.mxu0 0
  %437 = vmatpush1.bf16.msra.mxu0 %v392
  %438 = vmatprep.subr.bf16.mxu0 0
  %439 = vmatpush1.bf16.msra.mxu0 %v393
  %440 = vmatprep.subr.bf16.mxu0 0
  %441 = vmatpush1.bf16.msra.mxu0 %v394
  %442 = vmatprep.subr.bf16.mxu0 0
  %443 = vmatpush1.bf16.msra.mxu0 %v395
  %444 = vmatprep.mubr.bf16.mxu0 %v253
  %445 = vmatmul.mubr.bf16.gmra.mrb[0].mxu0 %v252
  %v446 = vpop.f32.mrb[0].mxu0
  %v447 = vadd.f32 0.0, %v446
  %v448 = vpop.f32.mrb[0].mxu0
  %v449 = vpop.f32.mrb[0].mxu0
  %v450 = vadd.f32 0.0, %v449
  %v451 = vpop.f32.mrb[0].mxu0
  %452 = vmatprep.mubr.bf16.mxu0 %v255
  %453 = vmatmul.mubr.bf16.gmra.mrb[0].mxu0 %v254
  %v454 = vpop.f32.mrb[0].mxu0
  %v455 = vadd.f32 0.0, %v454
  %v456 = vpop.f32.mrb[0].mxu0
  %v457 = vpop.f32.mrb[0].mxu0
  %v458 = vadd.f32 0.0, %v457
  %v459 = vpop.f32.mrb[0].mxu0
  %460 = vmatprep.mubr.bf16.mxu0 %v257
  %461 = vmatmul.mubr.bf16.gmra.mrb[0].mxu0 %v256
  %v462 = vpop.f32.mrb[0].mxu0
  %v463 = vadd.f32 0.0, %v462
  %v464 = vpop.f32.mrb[0].mxu0
  %v465 = vpop.f32.mrb[0].mxu0
  %v466 = vadd.f32 0.0, %v465
  %v467 = vpop.f32.mrb[0].mxu0
  %468 = vmatprep.mubr.bf16.mxu0 %v259
  %469 = vmatmul.mubr.bf16.gmra.mrb[0].mxu0 %v258
  %v470 = vpop.f32.mrb[0].mxu0
  %v471 = vadd.f32 0.0, %v470
  %v472 = vpop.f32.mrb[0].mxu0
  %v473 = vpop.f32.mrb[0].mxu0
  %v474 = vadd.f32 0.0, %v473
  %v475 = vpop.f32.mrb[0].mxu0
  %476 = vmatprep.mubr.bf16.mxu0 %v261
  %477 = vmatmul.mubr.bf16.gmra.mrb[0].mxu0 %v260
  %v478 = vpop.f32.mrb[0].mxu0
  %v479 = vadd.f32 0.0, %v478
  %v480 = vpop.f32.mrb[0].mxu0
  %v481 = vpop.f32.mrb[0].mxu0
  %v482 = vadd.f32 0.0, %v481
  %v483 = vpop.f32.mrb[0].mxu0
  %484 = vmatprep.mubr.bf16.mxu0 %v263
  %485 = vmatmul.mubr.bf16.gmra.mrb[0].mxu0 %v262
  %v486 = vpop.f32.mrb[0].mxu0
  %v487 = vadd.f32 0.0, %v486
  %v488 = vpop.f32.mrb[0].mxu0
  %v489 = vpop.f32.mrb[0].mxu0
  %v490 = vadd.f32 0.0, %v489
  %v491 = vpop.f32.mrb[0].mxu0
  %492 = vmatprep.mubr.bf16.mxu0 %v265
  %493 = vmatmul.mubr.bf16.gmra.mrb[0].mxu0 %v264
  %v494 = vpop.f32.mrb[0].mxu0
  %v495 = vadd.f32 0.0, %v494
  %v496 = vpop.f32.mrb[0].mxu0
  %v497 = vpop.f32.mrb[0].mxu0
  %v498 = vadd.f32 0.0, %v497
  %v499 = vpop.f32.mrb[0].mxu0
  %500 = vmatprep.mubr.bf16.mxu0 %v267
  %501 = vmatmul.mubr.bf16.gmra.mrb[0].mxu0 %v266
  %v502 = vpop.f32.mrb[0].mxu0
  %v503 = vadd.f32 0.0, %v502
  %v504 = vpop.f32.mrb[0].mxu0
  %v505 = vpop.f32.mrb[0].mxu0
  %v506 = vadd.f32 0.0, %v505
  %v507 = vpop.f32.mrb[0].mxu0
  %508 = vmatprep.mubr.bf16.mxu0 %v269
  %509 = vmatmul.mubr.bf16.gmra.mrb[0].mxu0 %v268
  %v510 = vpop.f32.mrb[0].mxu0
  %v511 = vadd.f32 0.0, %v510
  %v512 = vpop.f32.mrb[0].mxu0
  %v513 = vpop.f32.mrb[0].mxu0
  %v514 = vadd.f32 0.0, %v513
  %v515 = vpop.f32.mrb[0].mxu0
  %516 = vmatprep.mubr.bf16.mxu0 %v271
  %517 = vmatmul.mubr.bf16.gmra.mrb[0].mxu0 %v270
  %v518 = vpop.f32.mrb[0].mxu0
  %v519 = vadd.f32 0.0, %v518
  %v520 = vpop.f32.mrb[0].mxu0
  %v521 = vpop.f32.mrb[0].mxu0
  %v522 = vadd.f32 0.0, %v521
  %v523 = vpop.f32.mrb[0].mxu0
  %524 = vmatprep.mubr.bf16.mxu0 %v273
  %525 = vmatmul.mubr.bf16.gmra.mrb[0].mxu0 %v272
  %v526 = vpop.f32.mrb[0].mxu0
  %v527 = vadd.f32 0.0, %v526
  %v528 = vpop.f32.mrb[0].mxu0
  %v529 = vpop.f32.mrb[0].mxu0
  %v530 = vadd.f32 0.0, %v529
  %v531 = vpop.f32.mrb[0].mxu0
  %532 = vmatprep.mubr.bf16.mxu0 %v275
  %533 = vmatmul.mubr.bf16.gmra.mrb[0].mxu0 %v274
  %v534 = vpop.f32.mrb[0].mxu0
  %v535 = vadd.f32 0.0, %v534
  %v536 = vpop.f32.mrb[0].mxu0
  %v537 = vpop.f32.mrb[0].mxu0
  %v538 = vadd.f32 0.0, %v537
  %v539 = vpop.f32.mrb[0].mxu0
  %540 = vmatprep.mubr.bf16.mxu0 %v277
  %541 = vmatmul.mubr.bf16.gmra.mrb[0].mxu0 %v276
  %v542 = vpop.f32.mrb[0].mxu0
  %v543 = vadd.f32 0.0, %v542
  %v544 = vpop.f32.mrb[0].mxu0
  %v545 = vpop.f32.mrb[0].mxu0
  %v546 = vadd.f32 0.0, %v545
  %v547 = vpop.f32.mrb[0].mxu0
  %548 = vmatprep.mubr.bf16.mxu0 %v279
  %549 = vmatmul.mubr.bf16.gmra.mrb[0].mxu0 %v278
  %v550 = vpop.f32.mrb[0].mxu0
  %v551 = vadd.f32 0.0, %v550
  %v552 = vpop.f32.mrb[0].mxu0
  %v553 = vpop.f32.mrb[0].mxu0
  %v554 = vadd.f32 0.0, %v553
  %v555 = vpop.f32.mrb[0].mxu0
  %556 = vmatprep.mubr.bf16.mxu0 %v281
  %557 = vmatmul.mubr.bf16.gmra.mrb[0].mxu0 %v280
  %v558 = vpop.f32.mrb[0].mxu0
  %v559 = vadd.f32 0.0, %v558
  %v560 = vpop.f32.mrb[0].mxu0
  %v561 = vpop.f32.mrb[0].mxu0
  %v562 = vadd.f32 0.0, %v561
  %v563 = vpop.f32.mrb[0].mxu0
  %564 = vmatprep.mubr.bf16.mxu0 %v283
  %565 = vmatmul.mubr.bf16.gmra.mrb[0].mxu0 %v282
  %v566 = vpop.f32.mrb[0].mxu0
  %v567 = vadd.f32 0.0, %v566
  %v568 = vpop.f32.mrb[0].mxu0
  %v569 = vpop.f32.mrb[0].mxu0
  %v570 = vadd.f32 0.0, %v569
  %v571 = vpop.f32.mrb[0].mxu0
  %572 = vdwg.mxu0
  %v573 = vadd.f32 %v60, %v447
  %v574 = vadd.f32 %v61, %v450
  %v575 = vadd.f32 %v62, %v455
  %v576 = vadd.f32 %v63, %v458
  %v577 = vadd.f32 %v64, %v463
  %v578 = vadd.f32 %v65, %v466
  %v579 = vadd.f32 %v66, %v471
  %v580 = vadd.f32 %v67, %v474
  %v581 = vadd.f32 %v68, %v479
  %v582 = vadd.f32 %v69, %v482
  %v583 = vadd.f32 %v70, %v487
  %v584 = vadd.f32 %v71, %v490
  %v585 = vadd.f32 %v72, %v495
  %v586 = vadd.f32 %v73, %v498
  %v587 = vadd.f32 %v74, %v503
  %v588 = vadd.f32 %v75, %v506
  %v589 = vadd.f32 %v76, %v511
  %v590 = vadd.f32 %v77, %v514
  %v591 = vadd.f32 %v78, %v519
  %v592 = vadd.f32 %v79, %v522
  %v593 = vadd.f32 %v80, %v527
  %v594 = vadd.f32 %v81, %v530
  %v595 = vadd.f32 %v82, %v535
  %v596 = vadd.f32 %v83, %v538
  %v597 = vadd.f32 %v84, %v543
  %v598 = vadd.f32 %v85, %v546
  %v599 = vadd.f32 %v86, %v551
  %v600 = vadd.f32 %v87, %v554
  %v601 = vadd.f32 %v88, %v559
  %v602 = vadd.f32 %v89, %v562
  %v603 = vadd.f32 %v90, %v567
  %v604 = vadd.f32 %v91, %v570
  %605 = vst [vmem:[#allocation2] sm:$0xff] %v573
  %606 = vst [vmem:[#allocation2 + $0x8] sm:$0xff] %v574
  %607 = vst [vmem:[#allocation2 + $0x10] sm:$0xff] %v575
  %608 = vst [vmem:[#allocation2 + $0x18] sm:$0xff] %v576
  %609 = vst [vmem:[#allocation2 + $0x20] sm:$0xff] %v577
  %610 = vst [vmem:[#allocation2 + $0x28] sm:$0xff] %v578
  %611 = vst [vmem:[#allocation2 + $0x30] sm:$0xff] %v579
  %612 = vst [vmem:[#allocation2 + $0x38] sm:$0xff] %v580
  %613 = vst [vmem:[#allocation2 + $0x40] sm:$0xff] %v581
  %614 = vst [vmem:[#allocation2 + $0x48] sm:$0xff] %v582
  %615 = vst [vmem:[#allocation2 + $0x50] sm:$0xff] %v583
  %616 = vst [vmem:[#allocation2 + $0x58] sm:$0xff] %v584
  %617 = vst [vmem:[#allocation2 + $0x60] sm:$0xff] %v585
  %618 = vst [vmem:[#allocation2 + $0x68] sm:$0xff] %v586
  %619 = vst [vmem:[#allocation2 + $0x70] sm:$0xff] %v587
  %620 = vst [vmem:[#allocation2 + $0x78] sm:$0xff] %v588
  %621 = vst [vmem:[#allocation2 + $0x80] sm:$0xff] %v589
  %622 = vst [vmem:[#allocation2 + $0x88] sm:$0xff] %v590
  %623 = vst [vmem:[#allocation2 + $0x90] sm:$0xff] %v591
  %624 = vst [vmem:[#allocation2 + $0x98] sm:$0xff] %v592
  %625 = vst [vmem:[#allocation2 + $0xa0] sm:$0xff] %v593
  %626 = vst [vmem:[#allocation2 + $0xa8] sm:$0xff] %v594
  %627 = vst [vmem:[#allocation2 + $0xb0] sm:$0xff] %v595
  %628 = vst [vmem:[#allocation2 + $0xb8] sm:$0xff] %v596
  %629 = vst [vmem:[#allocation2 + $0xc0] sm:$0xff] %v597
  %630 = vst [vmem:[#allocation2 + $0xc8] sm:$0xff] %v598
  %631 = vst [vmem:[#allocation2 + $0xd0] sm:$0xff] %v599
  %632 = vst [vmem:[#allocation2 + $0xd8] sm:$0xff] %v600
  %633 = vst [vmem:[#allocation2 + $0xe0] sm:$0xff] %v601
  %634 = vst [vmem:[#allocation2 + $0xe8] sm:$0xff] %v602
  %635 = vst [vmem:[#allocation2 + $0xf0] sm:$0xff] %v603
  %636 = vst [vmem:[#allocation2 + $0xf8] sm:$0xff] %v604
  // Predicated region
  $region30: #{graphsage_forward.5} parent=0 // pred_check
    %p637 = pneg %p24
  $region31: #{graphsage_forward.5} parent=0 // pred_check_branch
    %639 = sbr.rel (%p637) target = $region33
  $region32: #{graphsage_forward.5} parent=0 // pred_region
    %v640 = vld [vmem:[%s2] sm:$0xf]
    %v641 = vld [vmem:[%s2 + $0x4] sm:$0xf]
    %v642 = vld [vmem:[%s2 + $0x8] sm:$0xf]
    %v643 = vld [vmem:[%s2 + $0xc] sm:$0xf]
    %v644 = vld [vmem:[%s2 + $0x10] sm:$0xf]
    %v645 = vld [vmem:[%s2 + $0x14] sm:$0xf]
    %v646 = vld [vmem:[%s2 + $0x18] sm:$0xf]
    %v647 = vld [vmem:[%s2 + $0x1c] sm:$0xf]
    %v648 = vld [vmem:[%s2 + $0x20] sm:$0xf]
    %v649 = vld [vmem:[%s2 + $0x24] sm:$0xf]
    %v650 = vld [vmem:[%s2 + $0x28] sm:$0xf]
    %v651 = vld [vmem:[%s2 + $0x2c] sm:$0xf]
    %v652 = vld [vmem:[%s2 + $0x30] sm:$0xf]
    %v653 = vld [vmem:[%s2 + $0x34] sm:$0xf]
    %v654 = vld [vmem:[%s2 + $0x38] sm:$0xf]
    %v655 = vld [vmem:[%s2 + $0x3c] sm:$0xf]
    %v656 = vld [vmem:[%s2 + $0x40] sm:$0xf]
    %v657 = vld [vmem:[%s2 + $0x44] sm:$0xf]
    %v658 = vld [vmem:[%s2 + $0x48] sm:$0xf]
    %v659 = vld [vmem:[%s2 + $0x4c] sm:$0xf]
    %v660 = vld [vmem:[%s2 + $0x50] sm:$0xf]
    %v661 = vld [vmem:[%s2 + $0x54] sm:$0xf]
    %v662 = vld [vmem:[%s2 + $0x58] sm:$0xf]
    %v663 = vld [vmem:[%s2 + $0x5c] sm:$0xf]
    %v664 = vld [vmem:[%s2 + $0x60] sm:$0xf]
    %v665 = vld [vmem:[%s2 + $0x64] sm:$0xf]
    %v666 = vld [vmem:[%s2 + $0x68] sm:$0xf]
    %v667 = vld [vmem:[%s2 + $0x6c] sm:$0xf]
    %v668 = vld [vmem:[%s2 + $0x70] sm:$0xf]
    %v669 = vld [vmem:[%s2 + $0x74] sm:$0xf]
    %v670 = vld [vmem:[%s2 + $0x78] sm:$0xf]
    %v671 = vld [vmem:[%s2 + $0x7c] sm:$0xf]
    %v672 = vld [vmem:[%s3] sm:$0xf]
    %v673 = vld [vmem:[%s3 + $0x4] sm:$0xf]
    %v674 = vld [vmem:[%s3 + $0x8] sm:$0xf]
    %v675 = vld [vmem:[%s3 + $0xc] sm:$0xf]
    %v676 = vld [vmem:[%s3 + $0x10] sm:$0xf]
    %v677 = vld [vmem:[%s3 + $0x14] sm:$0xf]
    %v678 = vld [vmem:[%s3 + $0x18] sm:$0xf]
    %v679 = vld [vmem:[%s3 + $0x1c] sm:$0xf]
    %v680 = vld [vmem:[%s3 + $0x20] sm:$0xf]
    %v681 = vld [vmem:[%s3 + $0x24] sm:$0xf]
    %v682 = vld [vmem:[%s3 + $0x28] sm:$0xf]
    %v683 = vld [vmem:[%s3 + $0x2c] sm:$0xf]
    %v684 = vld [vmem:[%s3 + $0x30] sm:$0xf]
    %v685 = vld [vmem:[%s3 + $0x34] sm:$0xf]
    %v686 = vld [vmem:[%s3 + $0x38] sm:$0xf]
    %v687 = vld [vmem:[%s3 + $0x3c] sm:$0xf]
    %v720 = vunpack.c.l.b16 %v640
    %v721 = vunpack.c.l.b16 %v641
    %v722 = vunpack.c.l.b16 %v642
    %v723 = vunpack.c.l.b16 %v643
    %v724 = vunpack.c.l.b16 %v644
    %v725 = vunpack.c.l.b16 %v645
    %v726 = vunpack.c.l.b16 %v646
    %v727 = vunpack.c.l.b16 %v647
    %v728 = vunpack.c.l.b16 %v648
    %v729 = vunpack.c.l.b16 %v649
    %v730 = vunpack.c.l.b16 %v650
    %v731 = vunpack.c.l.b16 %v651
    %v732 = vunpack.c.l.b16 %v652
    %v733 = vunpack.c.l.b16 %v653
    %v734 = vunpack.c.l.b16 %v654
    %v735 = vunpack.c.l.b16 %v655
    %v736 = vunpack.c.l.b16 %v656
    %v737 = vunpack.c.l.b16 %v657
    %v738 = vunpack.c.l.b16 %v658
    %v739 = vunpack.c.l.b16 %v659
    %v740 = vunpack.c.l.b16 %v660
    %v741 = vunpack.c.l.b16 %v661
    %v742 = vunpack.c.l.b16 %v662
    %v743 = vunpack.c.l.b16 %v663
    %v744 = vunpack.c.l.b16 %v664
    %v745 = vunpack.c.l.b16 %v665
    %v746 = vunpack.c.l.b16 %v666
    %v747 = vunpack.c.l.b16 %v667
    %v748 = vunpack.c.l.b16 %v668
    %v749 = vunpack.c.l.b16 %v669
    %v750 = vunpack.c.l.b16 %v670
    %v751 = vunpack.c.l.b16 %v671
    %v752 = vpack.c.b16 %v721, %v720
    %v753 = vpack.c.b16 %v723, %v722
    %v754 = vpack.c.b16 %v725, %v724
    %v755 = vpack.c.b16 %v727, %v726
    %v756 = vpack.c.b16 %v729, %v728
    %v757 = vpack.c.b16 %v731, %v730
    %v758 = vpack.c.b16 %v733, %v732
    %v759 = vpack.c.b16 %v735, %v734
    %v760 = vpack.c.b16 %v737, %v736
    %v761 = vpack.c.b16 %v739, %v738
    %v762 = vpack.c.b16 %v741, %v740
    %v763 = vpack.c.b16 %v743, %v742
    %v764 = vpack.c.b16 %v745, %v744
    %v765 = vpack.c.b16 %v747, %v746
    %v766 = vpack.c.b16 %v749, %v748
    %v767 = vpack.c.b16 %v751, %v750
    %v800 = vunpack.c.l.b16 %v672
    %v801 = vunpack.c.l.b16 %v673
    %v802 = vunpack.c.l.b16 %v674
    %v803 = vunpack.c.l.b16 %v675
    %v804 = vunpack.c.l.b16 %v676
    %v805 = vunpack.c.l.b16 %v677
    %v806 = vunpack.c.l.b16 %v678
    %v807 = vunpack.c.l.b16 %v679
    %v808 = vunpack.c.l.b16 %v680
    %v809 = vunpack.c.l.b16 %v681
    %v810 = vunpack.c.l.b16 %v682
    %v811 = vunpack.c.l.b16 %v683
    %v812 = vunpack.c.l.b16 %v684
    %v813 = vunpack.c.l.b16 %v685
    %v814 = vunpack.c.l.b16 %v686
    %v815 = vunpack.c.l.b16 %v687
    %v816 = vpack.c.b16 %v801, %v800
    %v817 = vpack.c.b16 %v803, %v802
    %v818 = vpack.c.b16 %v805, %v804
    %v819 = vpack.c.b16 %v807, %v806
    %v820 = vpack.c.b16 %v809, %v808
    %v821 = vpack.c.b16 %v811, %v810
    %v822 = vpack.c.b16 %v813, %v812
    %v823 = vpack.c.b16 %v815, %v814
    %832 = vmatprep.subr.bf16.mxu0 0
    %833 = vmatpush1.bf16.msra.mxu0 %v816
    %834 = vmatprep.subr.bf16.mxu0 0
    %835 = vmatpush1.bf16.msra.mxu0 %v817
    %836 = vmatprep.subr.bf16.mxu0 0
    %837 = vmatpush1.bf16.msra.mxu0 %v818
    %838 = vmatprep.subr.bf16.mxu0 0
    %839 = vmatpush1.bf16.msra.mxu0 %v819
    %840 = vmatprep.subr.bf16.mxu0 0
    %841 = vmatpush1.bf16.msra.mxu0 %v820
    %842 = vmatprep.subr.bf16.mxu0 0
    %843 = vmatpush1.bf16.msra.mxu0 %v821
    %844 = vmatprep.subr.bf16.mxu0 0
    %845 = vmatpush1.bf16.msra.mxu0 %v822
    %846 = vmatprep.subr.bf16.mxu0 0
    %847 = vmatpush1.bf16.msra.mxu0 %v823
    %848 = vmatprep.subr.bf16.mxu0 0
    %849 = vmatpush1.bf16.msra.mxu0 0
    %850 = vmatprep.subr.bf16.mxu0 0
    %851 = vmatpush1.bf16.msra.mxu0 0
    %852 = vmatprep.subr.bf16.mxu0 0
    %853 = vmatpush1.bf16.msra.mxu0 0
    %854 = vmatprep.subr.bf16.mxu0 0
    %855 = vmatpush1.bf16.msra.mxu0 0
    %856 = vmatprep.subr.bf16.mxu0 0
    %857 = vmatpush1.bf16.msra.mxu0 0
    %858 = vmatprep.subr.bf16.mxu0 0
    %859 = vmatpush1.bf16.msra.mxu0 0
    %860 = vmatprep.subr.bf16.mxu0 0
    %861 = vmatpush1.bf16.msra.mxu0 0
    %862 = vmatprep.subr.bf16.mxu0 0
    %863 = vmatpush1.bf16.msra.mxu0 0
    %864 = vmatprep.mubr.bf16.mxu0 0
    %865 = vmatmul.mubr.bf16.gmra.mrb[0].mxu0 %v752
    %v866 = vpop.f32.mrb[0].mxu0
    %v867 = vadd.f32 0.0, %v866
    %v868 = vpop.f32.mrb[0].mxu0
    %v869 = vpop.f32.mrb[0].mxu0
    %v870 = vadd.f32 0.0, %v869
    %v871 = vpop.f32.mrb[0].mxu0
    %872 = vmatprep.mubr.bf16.mxu0 0
    %873 = vmatmul.mubr.bf16.gmra.mrb[0].mxu0 %v753
    %v874 = vpop.f32.mrb[0].mxu0
    %v875 = vadd.f32 0.0, %v874
    %v876 = vpop.f32.mrb[0].mxu0
    %v877 = vpop.f32.mrb[0].mxu0
    %v878 = vadd.f32 0.0, %v877
    %v879 = vpop.f32.mrb[0].mxu0
    %880 = vmatprep.mubr.bf16.mxu0 0
    %881 = vmatmul.mubr.bf16.gmra.mrb[0].mxu0 %v754
    %v882 = vpop.f32.mrb[0].mxu0
    %v883 = vadd.f32 0.0, %v882
    %v884 = vpop.f32.mrb[0].mxu0
    %v885 = vpop.f32.mrb[0].mxu0
    %v886 = vadd.f32 0.0, %v885
    %v887 = vpop.f32.mrb[0].mxu0
    %888 = vmatprep.mubr.bf16.mxu0 0
    %889 = vmatmul.mubr.bf16.gmra.mrb[0].mxu0 %v755
    %v890 = vpop.f32.mrb[0].mxu0
    %v891 = vadd.f32 0.0, %v890
    %v892 = vpop.f32.mrb[0].mxu0
    %v893 = vpop.f32.mrb[0].mxu0
    %v894 = vadd.f32 0.0, %v893
    %v895 = vpop.f32.mrb[0].mxu0
    %896 = vmatprep.mubr.bf16.mxu0 0
    %897 = vmatmul.mubr.bf16.gmra.mrb[0].mxu0 %v756
    %v898 = vpop.f32.mrb[0].mxu0
    %v899 = vadd.f32 0.0, %v898
    %v900 = vpop.f32.mrb[0].mxu0
    %v901 = vpop.f32.mrb[0].mxu0
    %v902 = vadd.f32 0.0, %v901
    %v903 = vpop.f32.mrb[0].mxu0
    %904 = vmatprep.mubr.bf16.mxu0 0
    %905 = vmatmul.mubr.bf16.gmra.mrb[0].mxu0 %v757
    %v906 = vpop.f32.mrb[0].mxu0
    %v907 = vadd.f32 0.0, %v906
    %v908 = vpop.f32.mrb[0].mxu0
    %v909 = vpop.f32.mrb[0].mxu0
    %v910 = vadd.f32 0.0, %v909
    %v911 = vpop.f32.mrb[0].mxu0
    %912 = vmatprep.mubr.bf16.mxu0 0
    %913 = vmatmul.mubr.bf16.gmra.mrb[0].mxu0 %v758
    %v914 = vpop.f32.mrb[0].mxu0
    %v915 = vadd.f32 0.0, %v914
    %v916 = vpop.f32.mrb[0].mxu0
    %v917 = vpop.f32.mrb[0].mxu0
    %v918 = vadd.f32 0.0, %v917
    %v919 = vpop.f32.mrb[0].mxu0
    %920 = vmatprep.mubr.bf16.mxu0 0
    %921 = vmatmul.mubr.bf16.gmra.mrb[0].mxu0 %v759
    %v922 = vpop.f32.mrb[0].mxu0
    %v923 = vadd.f32 0.0, %v922
    %v924 = vpop.f32.mrb[0].mxu0
    %v925 = vpop.f32.mrb[0].mxu0
    %v926 = vadd.f32 0.0, %v925
    %v927 = vpop.f32.mrb[0].mxu0
    %928 = vmatprep.mubr.bf16.mxu0 0
    %929 = vmatmul.mubr.bf16.gmra.mrb[0].mxu0 %v760
    %v930 = vpop.f32.mrb[0].mxu0
    %v931 = vadd.f32 0.0, %v930
    %v932 = vpop.f32.mrb[0].mxu0
    %v933 = vpop.f32.mrb[0].mxu0
    %v934 = vadd.f32 0.0, %v933
    %v935 = vpop.f32.mrb[0].mxu0
    %936 = vmatprep.mubr.bf16.mxu0 0
    %937 = vmatmul.mubr.bf16.gmra.mrb[0].mxu0 %v761
    %v938 = vpop.f32.mrb[0].mxu0
    %v939 = vadd.f32 0.0, %v938
    %v940 = vpop.f32.mrb[0].mxu0
    %v941 = vpop.f32.mrb[0].mxu0
    %v942 = vadd.f32 0.0, %v941
    %v943 = vpop.f32.mrb[0].mxu0
    %944 = vmatprep.mubr.bf16.mxu0 0
    %945 = vmatmul.mubr.bf16.gmra.mrb[0].mxu0 %v762
    %v946 = vpop.f32.mrb[0].mxu0
    %v947 = vadd.f32 0.0, %v946
    %v948 = vpop.f32.mrb[0].mxu0
    %v949 = vpop.f32.mrb[0].mxu0
    %v950 = vadd.f32 0.0, %v949
    %v951 = vpop.f32.mrb[0].mxu0
    %952 = vmatprep.mubr.bf16.mxu0 0
    %953 = vmatmul.mubr.bf16.gmra.mrb[0].mxu0 %v763
    %v954 = vpop.f32.mrb[0].mxu0
    %v955 = vadd.f32 0.0, %v954
    %v956 = vpop.f32.mrb[0].mxu0
    %v957 = vpop.f32.mrb[0].mxu0
    %v958 = vadd.f32 0.0, %v957
    %v959 = vpop.f32.mrb[0].mxu0
    %960 = vmatprep.mubr.bf16.mxu0 0
    %961 = vmatmul.mubr.bf16.gmra.mrb[0].mxu0 %v764
    %v962 = vpop.f32.mrb[0].mxu0
    %v963 = vadd.f32 0.0, %v962
    %v964 = vpop.f32.mrb[0].mxu0
    %v965 = vpop.f32.mrb[0].mxu0
    %v966 = vadd.f32 0.0, %v965
    %v967 = vpop.f32.mrb[0].mxu0
    %968 = vmatprep.mubr.bf16.mxu0 0
    %969 = vmatmul.mubr.bf16.gmra.mrb[0].mxu0 %v765
    %v970 = vpop.f32.mrb[0].mxu0
    %v971 = vadd.f32 0.0, %v970
    %v972 = vpop.f32.mrb[0].mxu0
    %v973 = vpop.f32.mrb[0].mxu0
    %v974 = vadd.f32 0.0, %v973
    %v975 = vpop.f32.mrb[0].mxu0
    %976 = vmatprep.mubr.bf16.mxu0 0
    %977 = vmatmul.mubr.bf16.gmra.mrb[0].mxu0 %v766
    %v978 = vpop.f32.mrb[0].mxu0
    %v979 = vadd.f32 0.0, %v978
    %v980 = vpop.f32.mrb[0].mxu0
    %v981 = vpop.f32.mrb[0].mxu0
    %v982 = vadd.f32 0.0, %v981
    %v983 = vpop.f32.mrb[0].mxu0
    %984 = vmatprep.mubr.bf16.mxu0 0
    %985 = vmatmul.mubr.bf16.gmra.mrb[0].mxu0 %v767
    %v986 = vpop.f32.mrb[0].mxu0
    %v987 = vadd.f32 0.0, %v986
    %v988 = vpop.f32.mrb[0].mxu0
    %v989 = vpop.f32.mrb[0].mxu0
    %v990 = vadd.f32 0.0, %v989
    %v991 = vpop.f32.mrb[0].mxu0
    %992 = vdwg.mxu0
    %v993 = vld [vmem:[#allocation2] sm:$0xff]
    %v994 = vld [vmem:[#allocation2 + $0x8] sm:$0xff]
    %v995 = vld [vmem:[#allocation2 + $0x10] sm:$0xff]
    %v996 = vld [vmem:[#allocation2 + $0x18] sm:$0xff]
    %v997 = vld [vmem:[#allocation2 + $0x20] sm:$0xff]
    %v998 = vld [vmem:[#allocation2 + $0x28] sm:$0xff]
    %v999 = vld [vmem:[#allocation2 + $0x30] sm:$0xff]
    %v1000 = vld [vmem:[#allocation2 + $0x38] sm:$0xff]
    %v1001 = vld [vmem:[#allocation2 + $0x40] sm:$0xff]
    %v1002 = vld [vmem:[#allocation2 + $0x48] sm:$0xff]
    %v1003 = vld [vmem:[#allocation2 + $0x50] sm:$0xff]
    %v1004 = vld [vmem:[#allocation2 + $0x58] sm:$0xff]
    %v1005 = vld [vmem:[#allocation2 + $0x60] sm:$0xff]
    %v1006 = vld [vmem:[#allocation2 + $0x68] sm:$0xff]
    %v1007 = vld [vmem:[#allocation2 + $0x70] sm:$0xff]
    %v1008 = vld [vmem:[#allocation2 + $0x78] sm:$0xff]
    %v1009 = vld [vmem:[#allocation2 + $0x80] sm:$0xff]
    %v1010 = vld [vmem:[#allocation2 + $0x88] sm:$0xff]
    %v1011 = vld [vmem:[#allocation2 + $0x90] sm:$0xff]
    %v1012 = vld [vmem:[#allocation2 + $0x98] sm:$0xff]
    %v1013 = vld [vmem:[#allocation2 + $0xa0] sm:$0xff]
    %v1014 = vld [vmem:[#allocation2 + $0xa8] sm:$0xff]
    %v1015 = vld [vmem:[#allocation2 + $0xb0] sm:$0xff]
    %v1016 = vld [vmem:[#allocation2 + $0xb8] sm:$0xff]
    %v1017 = vld [vmem:[#allocation2 + $0xc0] sm:$0xff]
    %v1018 = vld [vmem:[#allocation2 + $0xc8] sm:$0xff]
    %v1019 = vld [vmem:[#allocation2 + $0xd0] sm:$0xff]
    %v1020 = vld [vmem:[#allocation2 + $0xd8] sm:$0xff]
    %v1021 = vld [vmem:[#allocation2 + $0xe0] sm:$0xff]
    %v1022 = vld [vmem:[#allocation2 + $0xe8] sm:$0xff]
    %v1023 = vld [vmem:[#allocation2 + $0xf0] sm:$0xff]
    %v1024 = vld [vmem:[#allocation2 + $0xf8] sm:$0xff]
    %v1025 = vld [vmem:[%s5] sm:$0xff]
    %v1026 = vld [vmem:[%s5 + $0x8] sm:$0xff]
    %v1027 = vld [vmem:[%s5 + $0x10] sm:$0xff]
    %v1028 = vld [vmem:[%s5 + $0x18] sm:$0xff]
    %v1029 = vld [vmem:[%s5 + $0x20] sm:$0xff]
    %v1030 = vld [vmem:[%s5 + $0x28] sm:$0xff]
    %v1031 = vld [vmem:[%s5 + $0x30] sm:$0xff]
    %v1032 = vld [vmem:[%s5 + $0x38] sm:$0xff]
    %v1033 = vld [vmem:[%s5 + $0x40] sm:$0xff]
    %v1034 = vld [vmem:[%s5 + $0x48] sm:$0xff]
    %v1035 = vld [vmem:[%s5 + $0x50] sm:$0xff]
    %v1036 = vld [vmem:[%s5 + $0x58] sm:$0xff]
    %v1037 = vld [vmem:[%s5 + $0x60] sm:$0xff]
    %v1038 = vld [vmem:[%s5 + $0x68] sm:$0xff]
    %v1039 = vld [vmem:[%s5 + $0x70] sm:$0xff]
    %v1040 = vld [vmem:[%s5 + $0x78] sm:$0xff]
    %v1041 = vld [vmem:[%s5 + $0x80] sm:$0xff]
    %v1042 = vld [vmem:[%s5 + $0x88] sm:$0xff]
    %v1043 = vld [vmem:[%s5 + $0x90] sm:$0xff]
    %v1044 = vld [vmem:[%s5 + $0x98] sm:$0xff]
    %v1045 = vld [vmem:[%s5 + $0xa0] sm:$0xff]
    %v1046 = vld [vmem:[%s5 + $0xa8] sm:$0xff]
    %v1047 = vld [vmem:[%s5 + $0xb0] sm:$0xff]
    %v1048 = vld [vmem:[%s5 + $0xb8] sm:$0xff]
    %v1049 = vld [vmem:[%s5 + $0xc0] sm:$0xff]
    %v1050 = vld [vmem:[%s5 + $0xc8] sm:$0xff]
    %v1051 = vld [vmem:[%s5 + $0xd0] sm:$0xff]
    %v1052 = vld [vmem:[%s5 + $0xd8] sm:$0xff]
    %v1053 = vld [vmem:[%s5 + $0xe0] sm:$0xff]
    %v1054 = vld [vmem:[%s5 + $0xe8] sm:$0xff]
    %v1055 = vld [vmem:[%s5 + $0xf0] sm:$0xff]
    %v1056 = vld [vmem:[%s5 + $0xf8] sm:$0xff]
    %1058 = vset.pattern.permute.xlu0 0
    %1059 = vperm.xlu0 %1058, %v1025
    %v1060 = vpop.permute.xlu0 %1059
    %1063 = vset.pattern.permute.xlu0 0
    %1064 = vperm.xlu0 %1063, %v1026
    %v1065 = vpop.permute.xlu0 %1064
    %1068 = vset.pattern.permute.xlu0 0
    %1069 = vperm.xlu0 %1068, %v1027
    %v1070 = vpop.permute.xlu0 %1069
    %1073 = vset.pattern.permute.xlu0 0
    %1074 = vperm.xlu0 %1073, %v1028
    %v1075 = vpop.permute.xlu0 %1074
    %1078 = vset.pattern.permute.xlu0 0
    %1079 = vperm.xlu0 %1078, %v1029
    %v1080 = vpop.permute.xlu0 %1079
    %1083 = vset.pattern.permute.xlu0 0
    %1084 = vperm.xlu0 %1083, %v1030
    %v1085 = vpop.permute.xlu0 %1084
    %1088 = vset.pattern.permute.xlu0 0
    %1089 = vperm.xlu0 %1088, %v1031
    %v1090 = vpop.permute.xlu0 %1089
    %1093 = vset.pattern.permute.xlu0 0
    %1094 = vperm.xlu0 %1093, %v1032
    %v1095 = vpop.permute.xlu0 %1094
    %1098 = vset.pattern.permute.xlu0 0
    %1099 = vperm.xlu0 %1098, %v1033
    %v1100 = vpop.permute.xlu0 %1099
    %1103 = vset.pattern.permute.xlu0 0
    %1104 = vperm.xlu0 %1103, %v1034
    %v1105 = vpop.permute.xlu0 %1104
    %1108 = vset.pattern.permute.xlu0 0
    %1109 = vperm.xlu0 %1108, %v1035
    %v1110 = vpop.permute.xlu0 %1109
    %1113 = vset.pattern.permute.xlu0 0
    %1114 = vperm.xlu0 %1113, %v1036
    %v1115 = vpop.permute.xlu0 %1114
    %1118 = vset.pattern.permute.xlu0 0
    %1119 = vperm.xlu0 %1118, %v1037
    %v1120 = vpop.permute.xlu0 %1119
    %1123 = vset.pattern.permute.xlu0 0
    %1124 = vperm.xlu0 %1123, %v1038
    %v1125 = vpop.permute.xlu0 %1124
    %1128 = vset.pattern.permute.xlu0 0
    %1129 = vperm.xlu0 %1128, %v1039
    %v1130 = vpop.permute.xlu0 %1129
    %1133 = vset.pattern.permute.xlu0 0
    %1134 = vperm.xlu0 %1133, %v1040
    %v1135 = vpop.permute.xlu0 %1134
    %1138 = vset.pattern.permute.xlu0 0
    %1139 = vperm.xlu0 %1138, %v1041
    %v1140 = vpop.permute.xlu0 %1139
    %1143 = vset.pattern.permute.xlu0 0
    %1144 = vperm.xlu0 %1143, %v1042
    %v1145 = vpop.permute.xlu0 %1144
    %1148 = vset.pattern.permute.xlu0 0
    %1149 = vperm.xlu0 %1148, %v1043
    %v1150 = vpop.permute.xlu0 %1149
    %1153 = vset.pattern.permute.xlu0 0
    %1154 = vperm.xlu0 %1153, %v1044
    %v1155 = vpop.permute.xlu0 %1154
    %1158 = vset.pattern.permute.xlu0 0
    %1159 = vperm.xlu0 %1158, %v1045
    %v1160 = vpop.permute.xlu0 %1159
    %1163 = vset.pattern.permute.xlu0 0
    %1164 = vperm.xlu0 %1163, %v1046
    %v1165 = vpop.permute.xlu0 %1164
    %1168 = vset.pattern.permute.xlu0 0
    %1169 = vperm.xlu0 %1168, %v1047
    %v1170 = vpop.permute.xlu0 %1169
    %1173 = vset.pattern.permute.xlu0 0
    %1174 = vperm.xlu0 %1173, %v1048
    %v1175 = vpop.permute.xlu0 %1174
    %1178 = vset.pattern.permute.xlu0 0
    %1179 = vperm.xlu0 %1178, %v1049
    %v1180 = vpop.permute.xlu0 %1179
    %1183 = vset.pattern.permute.xlu0 0
    %1184 = vperm.xlu0 %1183, %v1050
    %v1185 = vpop.permute.xlu0 %1184
    %1188 = vset.pattern.permute.xlu0 0
    %1189 = vperm.xlu0 %1188, %v1051
    %v1190 = vpop.permute.xlu0 %1189
    %1193 = vset.pattern.permute.xlu0 0
    %1194 = vperm.xlu0 %1193, %v1052
    %v1195 = vpop.permute.xlu0 %1194
    %1198 = vset.pattern.permute.xlu0 0
    %1199 = vperm.xlu0 %1198, %v1053
    %v1200 = vpop.permute.xlu0 %1199
    %1203 = vset.pattern.permute.xlu0 0
    %1204 = vperm.xlu0 %1203, %v1054
    %v1205 = vpop.permute.xlu0 %1204
    %1208 = vset.pattern.permute.xlu0 0
    %1209 = vperm.xlu0 %1208, %v1055
    %v1210 = vpop.permute.xlu0 %1209
    %1213 = vset.pattern.permute.xlu0 0
    %1214 = vperm.xlu0 %1213, %v1056
    %v1215 = vpop.permute.xlu0 %1214
    %v1217 = vmul.f32 %v993, %v1060
    %v1218 = vmul.f32 %v994, %v1065
    %v1219 = vmul.f32 %v995, %v1070
    %v1220 = vmul.f32 %v996, %v1075
    %v1221 = vmul.f32 %v997, %v1080
    %v1222 = vmul.f32 %v998, %v1085
    %v1223 = vmul.f32 %v999, %v1090
    %v1224 = vmul.f32 %v1000, %v1095
    %v1225 = vmul.f32 %v1001, %v1100
    %v1226 = vmul.f32 %v1002, %v1105
    %v1227 = vmul.f32 %v1003, %v1110
    %v1228 = vmul.f32 %v1004, %v1115
    %v1229 = vmul.f32 %v1005, %v1120
    %v1230 = vmul.f32 %v1006, %v1125
    %v1231 = vmul.f32 %v1007, %v1130
    %v1232 = vmul.f32 %v1008, %v1135
    %v1233 = vmul.f32 %v1009, %v1140
    %v1234 = vmul.f32 %v1010, %v1145
    %v1235 = vmul.f32 %v1011, %v1150
    %v1236 = vmul.f32 %v1012, %v1155
    %v1237 = vmul.f32 %v1013, %v1160
    %v1238 = vmul.f32 %v1014, %v1165
    %v1239 = vmul.f32 %v1015, %v1170
    %v1240 = vmul.f32 %v1016, %v1175
    %v1241 = vmul.f32 %v1017, %v1180
    %v1242 = vmul.f32 %v1018, %v1185
    %v1243 = vmul.f32 %v1019, %v1190
    %v1244 = vmul.f32 %v1020, %v1195
    %v1245 = vmul.f32 %v1021, %v1200
    %v1246 = vmul.f32 %v1022, %v1205
    %v1247 = vmul.f32 %v1023, %v1210
    %v1248 = vmul.f32 %v1024, %v1215
    %v1249 = vadd.f32 %v1217, %v867
    %v1250 = vadd.f32 %v1218, %v870
    %v1251 = vadd.f32 %v1219, %v875
    %v1252 = vadd.f32 %v1220, %v878
    %v1253 = vadd.f32 %v1221, %v883
    %v1254 = vadd.f32 %v1222, %v886
    %v1255 = vadd.f32 %v1223, %v891
    %v1256 = vadd.f32 %v1224, %v894
    %v1257 = vadd.f32 %v1225, %v899
    %v1258 = vadd.f32 %v1226, %v902
    %v1259 = vadd.f32 %v1227, %v907
    %v1260 = vadd.f32 %v1228, %v910
    %v1261 = vadd.f32 %v1229, %v915
    %v1262 = vadd.f32 %v1230, %v918
    %v1263 = vadd.f32 %v1231, %v923
    %v1264 = vadd.f32 %v1232, %v926
    %v1265 = vadd.f32 %v1233, %v931
    %v1266 = vadd.f32 %v1234, %v934
    %v1267 = vadd.f32 %v1235, %v939
    %v1268 = vadd.f32 %v1236, %v942
    %v1269 = vadd.f32 %v1237, %v947
    %v1270 = vadd.f32 %v1238, %v950
    %v1271 = vadd.f32 %v1239, %v955
    %v1272 = vadd.f32 %v1240, %v958
    %v1273 = vadd.f32 %v1241, %v963
    %v1274 = vadd.f32 %v1242, %v966
    %v1275 = vadd.f32 %v1243, %v971
    %v1276 = vadd.f32 %v1244, %v974
    %v1277 = vadd.f32 %v1245, %v979
    %v1278 = vadd.f32 %v1246, %v982
    %v1279 = vadd.f32 %v1247, %v987
    %v1280 = vadd.f32 %v1248, %v990
    %v1281 = vld [vmem:[%s4] sm:$0x1]
    %v1283 = vlaneseq
    %v1284 = vshrl.u32 %v1283, 7
    %v1285 = vsub.s32 0, %v1284
    %v1286 = vrot.slane %v1281, %v1285
    %v1288 = vadd.f32 %v1249, %v1286
    %v1289 = vadd.f32 %v1250, %v1286
    %v1290 = vadd.f32 %v1251, %v1286
    %v1291 = vadd.f32 %v1252, %v1286
    %v1292 = vadd.f32 %v1253, %v1286
    %v1293 = vadd.f32 %v1254, %v1286
    %v1294 = vadd.f32 %v1255, %v1286
    %v1295 = vadd.f32 %v1256, %v1286
    %v1296 = vadd.f32 %v1257, %v1286
    %v1297 = vadd.f32 %v1258, %v1286
    %v1298 = vadd.f32 %v1259, %v1286
    %v1299 = vadd.f32 %v1260, %v1286
    %v1300 = vadd.f32 %v1261, %v1286
    %v1301 = vadd.f32 %v1262, %v1286
    %v1302 = vadd.f32 %v1263, %v1286
    %v1303 = vadd.f32 %v1264, %v1286
    %v1304 = vadd.f32 %v1265, %v1286
    %v1305 = vadd.f32 %v1266, %v1286
    %v1306 = vadd.f32 %v1267, %v1286
    %v1307 = vadd.f32 %v1268, %v1286
    %v1308 = vadd.f32 %v1269, %v1286
    %v1309 = vadd.f32 %v1270, %v1286
    %v1310 = vadd.f32 %v1271, %v1286
    %v1311 = vadd.f32 %v1272, %v1286
    %v1312 = vadd.f32 %v1273, %v1286
    %v1313 = vadd.f32 %v1274, %v1286
    %v1314 = vadd.f32 %v1275, %v1286
    %v1315 = vadd.f32 %v1276, %v1286
    %v1316 = vadd.f32 %v1277, %v1286
    %v1317 = vadd.f32 %v1278, %v1286
    %v1318 = vadd.f32 %v1279, %v1286
    %v1319 = vadd.f32 %v1280, %v1286
    %v1320 = vmax.f32 %v1288, 0.0
    %v1321 = vmax.f32 %v1289, 0.0
    %v1322 = vmax.f32 %v1290, 0.0
    %v1323 = vmax.f32 %v1291, 0.0
    %v1324 = vmax.f32 %v1292, 0.0
    %v1325 = vmax.f32 %v1293, 0.0
    %v1326 = vmax.f32 %v1294, 0.0
    %v1327 = vmax.f32 %v1295, 0.0
    %v1328 = vmax.f32 %v1296, 0.0
    %v1329 = vmax.f32 %v1297, 0.0
    %v1330 = vmax.f32 %v1298, 0.0
    %v1331 = vmax.f32 %v1299, 0.0
    %v1332 = vmax.f32 %v1300, 0.0
    %v1333 = vmax.f32 %v1301, 0.0
    %v1334 = vmax.f32 %v1302, 0.0
    %v1335 = vmax.f32 %v1303, 0.0
    %v1336 = vmax.f32 %v1304, 0.0
    %v1337 = vmax.f32 %v1305, 0.0
    %v1338 = vmax.f32 %v1306, 0.0
    %v1339 = vmax.f32 %v1307, 0.0
    %v1340 = vmax.f32 %v1308, 0.0
    %v1341 = vmax.f32 %v1309, 0.0
    %v1342 = vmax.f32 %v1310, 0.0
    %v1343 = vmax.f32 %v1311, 0.0
    %v1344 = vmax.f32 %v1312, 0.0
    %v1345 = vmax.f32 %v1313, 0.0
    %v1346 = vmax.f32 %v1314, 0.0
    %v1347 = vmax.f32 %v1315, 0.0
    %v1348 = vmax.f32 %v1316, 0.0
    %v1349 = vmax.f32 %v1317, 0.0
    %v1350 = vmax.f32 %v1318, 0.0
    %v1351 = vmax.f32 %v1319, 0.0
    %v1352 = vpack.c.bf16 %v1321, %v1320
    %v1353 = vpack.c.bf16 %v1323, %v1322
    %v1354 = vpack.c.bf16 %v1325, %v1324
    %v1355 = vpack.c.bf16 %v1327, %v1326
    %v1356 = vpack.c.bf16 %v1329, %v1328
    %v1357 = vpack.c.bf16 %v1331, %v1330
    %v1358 = vpack.c.bf16 %v1333, %v1332
    %v1359 = vpack.c.bf16 %v1335, %v1334
    %v1360 = vpack.c.bf16 %v1337, %v1336
    %v1361 = vpack.c.bf16 %v1339, %v1338
    %v1362 = vpack.c.bf16 %v1341, %v1340
    %v1363 = vpack.c.bf16 %v1343, %v1342
    %v1364 = vpack.c.bf16 %v1345, %v1344
    %v1365 = vpack.c.bf16 %v1347, %v1346
    %v1366 = vpack.c.bf16 %v1349, %v1348
    %v1367 = vpack.c.bf16 %v1351, %v1350
    %v1384 = vunpack.c.l.b16 %v1352
    %v1385 = vunpack.c.h.b16 %v1352
    %v1386 = vunpack.c.l.b16 %v1353
    %v1387 = vunpack.c.h.b16 %v1353
    %v1388 = vunpack.c.l.b16 %v1354
    %v1389 = vunpack.c.h.b16 %v1354
    %v1390 = vunpack.c.l.b16 %v1355
    %v1391 = vunpack.c.h.b16 %v1355
    %v1392 = vunpack.c.l.b16 %v1356
    %v1393 = vunpack.c.h.b16 %v1356
    %v1394 = vunpack.c.l.b16 %v1357
    %v1395 = vunpack.c.h.b16 %v1357
    %v1396 = vunpack.c.l.b16 %v1358
    %v1397 = vunpack.c.h.b16 %v1358
    %v1398 = vunpack.c.l.b16 %v1359
    %v1399 = vunpack.c.h.b16 %v1359
    %v1400 = vunpack.c.l.b16 %v1360
    %v1401 = vunpack.c.h.b16 %v1360
    %v1402 = vunpack.c.l.b16 %v1361
    %v1403 = vunpack.c.h.b16 %v1361
    %v1404 = vunpack.c.l.b16 %v1362
    %v1405 = vunpack.c.h.b16 %v1362
    %v1406 = vunpack.c.l.b16 %v1363
    %v1407 = vunpack.c.h.b16 %v1363
    %v1408 = vunpack.c.l.b16 %v1364
    %v1409 = vunpack.c.h.b16 %v1364
    %v1410 = vunpack.c.l.b16 %v1365
    %v1411 = vunpack.c.h.b16 %v1365
    %v1412 = vunpack.c.l.b16 %v1366
    %v1413 = vunpack.c.h.b16 %v1366
    %v1414 = vunpack.c.l.b16 %v1367
    %v1415 = vunpack.c.h.b16 %v1367
    %v1416 = vpack.c.b16 %v1384, %v1384
    %v1417 = vpack.c.b16 %v1385, %v1385
    %v1418 = vpack.c.b16 %v1386, %v1386
    %v1419 = vpack.c.b16 %v1387, %v1387
    %v1420 = vpack.c.b16 %v1388, %v1388
    %v1421 = vpack.c.b16 %v1389, %v1389
    %v1422 = vpack.c.b16 %v1390, %v1390
    %v1423 = vpack.c.b16 %v1391, %v1391
    %v1424 = vpack.c.b16 %v1392, %v1392
    %v1425 = vpack.c.b16 %v1393, %v1393
    %v1426 = vpack.c.b16 %v1394, %v1394
    %v1427 = vpack.c.b16 %v1395, %v1395
    %v1428 = vpack.c.b16 %v1396, %v1396
    %v1429 = vpack.c.b16 %v1397, %v1397
    %v1430 = vpack.c.b16 %v1398, %v1398
    %v1431 = vpack.c.b16 %v1399, %v1399
    %v1432 = vpack.c.b16 %v1400, %v1400
    %v1433 = vpack.c.b16 %v1401, %v1401
    %v1434 = vpack.c.b16 %v1402, %v1402
    %v1435 = vpack.c.b16 %v1403, %v1403
    %v1436 = vpack.c.b16 %v1404, %v1404
    %v1437 = vpack.c.b16 %v1405, %v1405
    %v1438 = vpack.c.b16 %v1406, %v1406
    %v1439 = vpack.c.b16 %v1407, %v1407
    %v1440 = vpack.c.b16 %v1408, %v1408
    %v1441 = vpack.c.b16 %v1409, %v1409
    %v1442 = vpack.c.b16 %v1410, %v1410
    %v1443 = vpack.c.b16 %v1411, %v1411
    %v1444 = vpack.c.b16 %v1412, %v1412
    %v1445 = vpack.c.b16 %v1413, %v1413
    %v1446 = vpack.c.b16 %v1414, %v1414
    %v1447 = vpack.c.b16 %v1415, %v1415
    %1480 = vst [vmem:[%s6] sm:$0xf] %v1416
    %1481 = vst [vmem:[%s6 + $0x4] sm:$0xf] %v1417
    %1482 = vst [vmem:[%s6 + $0x8] sm:$0xf] %v1418
    %1483 = vst [vmem:[%s6 + $0xc] sm:$0xf] %v1419
    %1484 = vst [vmem:[%s6 + $0x10] sm:$0xf] %v1420
    %1485 = vst [vmem:[%s6 + $0x14] sm:$0xf] %v1421
    %1486 = vst [vmem:[%s6 + $0x18] sm:$0xf] %v1422
    %1487 = vst [vmem:[%s6 + $0x1c] sm:$0xf] %v1423
    %1488 = vst [vmem:[%s6 + $0x20] sm:$0xf] %v1424
    %1489 = vst [vmem:[%s6 + $0x24] sm:$0xf] %v1425
    %1490 = vst [vmem:[%s6 + $0x28] sm:$0xf] %v1426
    %1491 = vst [vmem:[%s6 + $0x2c] sm:$0xf] %v1427
    %1492 = vst [vmem:[%s6 + $0x30] sm:$0xf] %v1428
    %1493 = vst [vmem:[%s6 + $0x34] sm:$0xf] %v1429
    %1494 = vst [vmem:[%s6 + $0x38] sm:$0xf] %v1430
    %1495 = vst [vmem:[%s6 + $0x3c] sm:$0xf] %v1431
    %1496 = vst [vmem:[%s6 + $0x40] sm:$0xf] %v1432
    %1497 = vst [vmem:[%s6 + $0x44] sm:$0xf] %v1433
    %1498 = vst [vmem:[%s6 + $0x48] sm:$0xf] %v1434
    %1499 = vst [vmem:[%s6 + $0x4c] sm:$0xf] %v1435
    %1500 = vst [vmem:[%s6 + $0x50] sm:$0xf] %v1436
    %1501 = vst [vmem:[%s6 + $0x54] sm:$0xf] %v1437
    %1502 = vst [vmem:[%s6 + $0x58] sm:$0xf] %v1438
    %1503 = vst [vmem:[%s6 + $0x5c] sm:$0xf] %v1439
    %1504 = vst [vmem:[%s6 + $0x60] sm:$0xf] %v1440
    %1505 = vst [vmem:[%s6 + $0x64] sm:$0xf] %v1441
    %1506 = vst [vmem:[%s6 + $0x68] sm:$0xf] %v1442
    %1507 = vst [vmem:[%s6 + $0x6c] sm:$0xf] %v1443
    %1508 = vst [vmem:[%s6 + $0x70] sm:$0xf] %v1444
    %1509 = vst [vmem:[%s6 + $0x74] sm:$0xf] %v1445
    %1510 = vst [vmem:[%s6 + $0x78] sm:$0xf] %v1446
    %1511 = vst [vmem:[%s6 + $0x7c] sm:$0xf] %v1447
  $region33: #{graphsage_forward.5} parent=0 // pred_fallthru
    _
  // Predicated region
  $region34: #{graphsage_forward.5} parent=0 // pred_check
    _
  $region35: #{graphsage_forward.5} parent=0 // pred_check_branch
    %1513 = sbr.rel (0) target = $region37
  $region36: #{graphsage_forward.5} parent=0 // pred_region
    _
  $region37: #{graphsage_forward.5} parent=0 // pred_fallthru
    _
  // Predicated region
  $region38: #{graphsage_forward.5} parent=0 // pred_check
    _
  $region39: #{graphsage_forward.5} parent=0 // pred_check_branch
    %1515 = sbr.rel (0) target = $region41
  $region40: #{graphsage_forward.5} parent=0 // pred_region
    _
  $region41: #{graphsage_forward.5} parent=0 // pred_fallthru
    _

// kernel: graphsage_forward.7
$region0: #{graphsage_forward.7}
  #allocation0 [shape = 'u32[]', space=smem, size = 0x4, offset = 0x4, fixed_abs, tag = 'smem constant byte address 0x4 - core index']
  #allocation1 [shape = 'u32[144,128]{1,0:T(1,128)}', space=vmem, size = 0x12000, scoped, tag = 'internal scratch']
  %s0 = inlined_call_operand.vmem [shape: bf16[256,256], index: 0, kind: input, shape index: {}]
  %s1 = inlined_call_operand.vmem [shape: bf16[256,128], index: 1, kind: input, shape index: {}]
  %s2 = inlined_call_operand.vmem [shape: bf16[256,128], index: 2, kind: input, shape index: {}]
  %s3 = inlined_call_operand.vmem [shape: bf16[128,128], index: 3, kind: input, shape index: {}]
  %s4 = inlined_call_operand.vmem [shape: f32[1,128], index: 4, kind: input, shape index: {}]
  %s5 = inlined_call_operand.vmem [shape: f32[256,1], index: 5, kind: input, shape index: {}]
  %s6 = inlined_call_operand.vmem [shape: f32[256,128], index: 6, kind: output, shape index: {}]
  %s7 = sld [smem:[#allocation0]]
  $region42: #{graphsage_forward.7} parent=0
    _
  %s9 = ssub.s32 1, %s7
  %s10 = scalar_select 0, %s9, %s7
  // Predicated region
  $region2: #{graphsage_forward.7} parent=0 // pred_check
    _
  $region3: #{graphsage_forward.7} parent=0 // pred_check_branch
    %12 = sbr.rel (0) target = $region5
  $region4: #{graphsage_forward.7} parent=0 // pred_region
    _
  $region5: #{graphsage_forward.7} parent=0 // pred_fallthru
    _
  // Predicated region
  $region6: #{graphsage_forward.7} parent=0 // pred_check
    _
  $region7: #{graphsage_forward.7} parent=0 // pred_check_branch
    %14 = sbr.rel (0) target = $region9
  $region8: #{graphsage_forward.7} parent=0 // pred_region
    _
  $region9: #{graphsage_forward.7} parent=0 // pred_fallthru
    _
  // Predicated region
  $region10: #{graphsage_forward.7} parent=0 // pred_check
    _
  $region11: #{graphsage_forward.7} parent=0 // pred_check_branch
    %16 = sbr.rel (0) target = $region13
  $region12: #{graphsage_forward.7} parent=0 // pred_region
    _
  $region13: #{graphsage_forward.7} parent=0 // pred_fallthru
    _
  // Predicated region
  $region14: #{graphsage_forward.7} parent=0 // pred_check
    _
  $region15: #{graphsage_forward.7} parent=0 // pred_check_branch
    %18 = sbr.rel (0) target = $region17
  $region16: #{graphsage_forward.7} parent=0 // pred_region
    _
  $region17: #{graphsage_forward.7} parent=0 // pred_fallthru
    _
  // Predicated region
  $region18: #{graphsage_forward.7} parent=0 // pred_check
    _
  $region19: #{graphsage_forward.7} parent=0 // pred_check_branch
    %20 = sbr.rel (0) target = $region21
  $region20: #{graphsage_forward.7} parent=0 // pred_region
    _
  $region21: #{graphsage_forward.7} parent=0 // pred_fallthru
    _
  // Predicated region
  $region22: #{graphsage_forward.7} parent=0 // pred_check
    _
  $region23: #{graphsage_forward.7} parent=0 // pred_check_branch
    %22 = sbr.rel (0) target = $region25
  $region24: #{graphsage_forward.7} parent=0 // pred_region
    _
  $region25: #{graphsage_forward.7} parent=0 // pred_fallthru
    _
  %p24 = scmp.eq.s32.totalorder 0, 0
  // Predicated region
  $region26: #{graphsage_forward.7} parent=0 // pred_check
    %p25 = pneg %p24
  $region27: #{graphsage_forward.7} parent=0 // pred_check_branch
    %27 = sbr.rel (%p25) target = $region29
  $region28: #{graphsage_forward.7} parent=0 // pred_region
    %28 = vst [vmem:[%s6] sm:$0xff] 0.0
    %29 = vst [vmem:[%s6 + $0x8] sm:$0xff] 0.0
    %30 = vst [vmem:[%s6 + $0x10] sm:$0xff] 0.0
    %31 = vst [vmem:[%s6 + $0x18] sm:$0xff] 0.0
    %32 = vst [vmem:[%s6 + $0x20] sm:$0xff] 0.0
    %33 = vst [vmem:[%s6 + $0x28] sm:$0xff] 0.0
    %34 = vst [vmem:[%s6 + $0x30] sm:$0xff] 0.0
    %35 = vst [vmem:[%s6 + $0x38] sm:$0xff] 0.0
    %36 = vst [vmem:[%s6 + $0x40] sm:$0xff] 0.0
    %37 = vst [vmem:[%s6 + $0x48] sm:$0xff] 0.0
    %38 = vst [vmem:[%s6 + $0x50] sm:$0xff] 0.0
    %39 = vst [vmem:[%s6 + $0x58] sm:$0xff] 0.0
    %40 = vst [vmem:[%s6 + $0x60] sm:$0xff] 0.0
    %41 = vst [vmem:[%s6 + $0x68] sm:$0xff] 0.0
    %42 = vst [vmem:[%s6 + $0x70] sm:$0xff] 0.0
    %43 = vst [vmem:[%s6 + $0x78] sm:$0xff] 0.0
    %44 = vst [vmem:[%s6 + $0x80] sm:$0xff] 0.0
    %45 = vst [vmem:[%s6 + $0x88] sm:$0xff] 0.0
    %46 = vst [vmem:[%s6 + $0x90] sm:$0xff] 0.0
    %47 = vst [vmem:[%s6 + $0x98] sm:$0xff] 0.0
    %48 = vst [vmem:[%s6 + $0xa0] sm:$0xff] 0.0
    %49 = vst [vmem:[%s6 + $0xa8] sm:$0xff] 0.0
    %50 = vst [vmem:[%s6 + $0xb0] sm:$0xff] 0.0
    %51 = vst [vmem:[%s6 + $0xb8] sm:$0xff] 0.0
    %52 = vst [vmem:[%s6 + $0xc0] sm:$0xff] 0.0
    %53 = vst [vmem:[%s6 + $0xc8] sm:$0xff] 0.0
    %54 = vst [vmem:[%s6 + $0xd0] sm:$0xff] 0.0
    %55 = vst [vmem:[%s6 + $0xd8] sm:$0xff] 0.0
    %56 = vst [vmem:[%s6 + $0xe0] sm:$0xff] 0.0
    %57 = vst [vmem:[%s6 + $0xe8] sm:$0xff] 0.0
    %58 = vst [vmem:[%s6 + $0xf0] sm:$0xff] 0.0
    %59 = vst [vmem:[%s6 + $0xf8] sm:$0xff] 0.0
  $region29: #{graphsage_forward.7} parent=0 // pred_fallthru
    _
  %v60 = vld [vmem:[%s6] sm:$0xff]
  %v61 = vld [vmem:[%s6 + $0x8] sm:$0xff]
  %v62 = vld [vmem:[%s6 + $0x10] sm:$0xff]
  %v63 = vld [vmem:[%s6 + $0x18] sm:$0xff]
  %v64 = vld [vmem:[%s6 + $0x20] sm:$0xff]
  %v65 = vld [vmem:[%s6 + $0x28] sm:$0xff]
  %v66 = vld [vmem:[%s6 + $0x30] sm:$0xff]
  %v67 = vld [vmem:[%s6 + $0x38] sm:$0xff]
  %v68 = vld [vmem:[%s6 + $0x40] sm:$0xff]
  %v69 = vld [vmem:[%s6 + $0x48] sm:$0xff]
  %v70 = vld [vmem:[%s6 + $0x50] sm:$0xff]
  %v71 = vld [vmem:[%s6 + $0x58] sm:$0xff]
  %v72 = vld [vmem:[%s6 + $0x60] sm:$0xff]
  %v73 = vld [vmem:[%s6 + $0x68] sm:$0xff]
  %v74 = vld [vmem:[%s6 + $0x70] sm:$0xff]
  %v75 = vld [vmem:[%s6 + $0x78] sm:$0xff]
  %v76 = vld [vmem:[%s6 + $0x80] sm:$0xff]
  %v77 = vld [vmem:[%s6 + $0x88] sm:$0xff]
  %v78 = vld [vmem:[%s6 + $0x90] sm:$0xff]
  %v79 = vld [vmem:[%s6 + $0x98] sm:$0xff]
  %v80 = vld [vmem:[%s6 + $0xa0] sm:$0xff]
  %v81 = vld [vmem:[%s6 + $0xa8] sm:$0xff]
  %v82 = vld [vmem:[%s6 + $0xb0] sm:$0xff]
  %v83 = vld [vmem:[%s6 + $0xb8] sm:$0xff]
  %v84 = vld [vmem:[%s6 + $0xc0] sm:$0xff]
  %v85 = vld [vmem:[%s6 + $0xc8] sm:$0xff]
  %v86 = vld [vmem:[%s6 + $0xd0] sm:$0xff]
  %v87 = vld [vmem:[%s6 + $0xd8] sm:$0xff]
  %v88 = vld [vmem:[%s6 + $0xe0] sm:$0xff]
  %v89 = vld [vmem:[%s6 + $0xe8] sm:$0xff]
  %v90 = vld [vmem:[%s6 + $0xf0] sm:$0xff]
  %v91 = vld [vmem:[%s6 + $0xf8] sm:$0xff]
  %v92 = vld [vmem:[%s0] sm:$0xff]
  %v93 = vld [vmem:[%s0 + $0x8] sm:$0xff]
  %v94 = vld [vmem:[%s0 + $0x10] sm:$0xff]
  %v95 = vld [vmem:[%s0 + $0x18] sm:$0xff]
  %v96 = vld [vmem:[%s0 + $0x20] sm:$0xff]
  %v97 = vld [vmem:[%s0 + $0x28] sm:$0xff]
  %v98 = vld [vmem:[%s0 + $0x30] sm:$0xff]
  %v99 = vld [vmem:[%s0 + $0x38] sm:$0xff]
  %v100 = vld [vmem:[%s0 + $0x40] sm:$0xff]
  %v101 = vld [vmem:[%s0 + $0x48] sm:$0xff]
  %v102 = vld [vmem:[%s0 + $0x50] sm:$0xff]
  %v103 = vld [vmem:[%s0 + $0x58] sm:$0xff]
  %v104 = vld [vmem:[%s0 + $0x60] sm:$0xff]
  %v105 = vld [vmem:[%s0 + $0x68] sm:$0xff]
  %v106 = vld [vmem:[%s0 + $0x70] sm:$0xff]
  %v107 = vld [vmem:[%s0 + $0x78] sm:$0xff]
  %v108 = vld [vmem:[%s0 + $0x80] sm:$0xff]
  %v109 = vld [vmem:[%s0 + $0x88] sm:$0xff]
  %v110 = vld [vmem:[%s0 + $0x90] sm:$0xff]
  %v111 = vld [vmem:[%s0 + $0x98] sm:$0xff]
  %v112 = vld [vmem:[%s0 + $0xa0] sm:$0xff]
  %v113 = vld [vmem:[%s0 + $0xa8] sm:$0xff]
  %v114 = vld [vmem:[%s0 + $0xb0] sm:$0xff]
  %v115 = vld [vmem:[%s0 + $0xb8] sm:$0xff]
  %v116 = vld [vmem:[%s0 + $0xc0] sm:$0xff]
  %v117 = vld [vmem:[%s0 + $0xc8] sm:$0xff]
  %v118 = vld [vmem:[%s0 + $0xd0] sm:$0xff]
  %v119 = vld [vmem:[%s0 + $0xd8] sm:$0xff]
  %v120 = vld [vmem:[%s0 + $0xe0] sm:$0xff]
  %v121 = vld [vmem:[%s0 + $0xe8] sm:$0xff]
  %v122 = vld [vmem:[%s0 + $0xf0] sm:$0xff]
  %v123 = vld [vmem:[%s0 + $0xf8] sm:$0xff]
  %v124 = vld [vmem:[%s1] sm:$0xf]
  %v125 = vld [vmem:[%s1 + $0x4] sm:$0xf]
  %v126 = vld [vmem:[%s1 + $0x8] sm:$0xf]
  %v127 = vld [vmem:[%s1 + $0xc] sm:$0xf]
  %v128 = vld [vmem:[%s1 + $0x10] sm:$0xf]
  %v129 = vld [vmem:[%s1 + $0x14] sm:$0xf]
  %v130 = vld [vmem:[%s1 + $0x18] sm:$0xf]
  %v131 = vld [vmem:[%s1 + $0x1c] sm:$0xf]
  %v132 = vld [vmem:[%s1 + $0x20] sm:$0xf]
  %v133 = vld [vmem:[%s1 + $0x24] sm:$0xf]
  %v134 = vld [vmem:[%s1 + $0x28] sm:$0xf]
  %v135 = vld [vmem:[%s1 + $0x2c] sm:$0xf]
  %v136 = vld [vmem:[%s1 + $0x30] sm:$0xf]
  %v137 = vld [vmem:[%s1 + $0x34] sm:$0xf]
  %v138 = vld [vmem:[%s1 + $0x38] sm:$0xf]
  %v139 = vld [vmem:[%s1 + $0x3c] sm:$0xf]
  %v140 = vld [vmem:[%s1 + $0x40] sm:$0xf]
  %v141 = vld [vmem:[%s1 + $0x44] sm:$0xf]
  %v142 = vld [vmem:[%s1 + $0x48] sm:$0xf]
  %v143 = vld [vmem:[%s1 + $0x4c] sm:$0xf]
  %v144 = vld [vmem:[%s1 + $0x50] sm:$0xf]
  %v145 = vld [vmem:[%s1 + $0x54] sm:$0xf]
  %v146 = vld [vmem:[%s1 + $0x58] sm:$0xf]
  %v147 = vld [vmem:[%s1 + $0x5c] sm:$0xf]
  %v148 = vld [vmem:[%s1 + $0x60] sm:$0xf]
  %v149 = vld [vmem:[%s1 + $0x64] sm:$0xf]
  %v150 = vld [vmem:[%s1 + $0x68] sm:$0xf]
  %v151 = vld [vmem:[%s1 + $0x6c] sm:$0xf]
  %v152 = vld [vmem:[%s1 + $0x70] sm:$0xf]
  %v153 = vld [vmem:[%s1 + $0x74] sm:$0xf]
  %v154 = vld [vmem:[%s1 + $0x78] sm:$0xf]
  %v155 = vld [vmem:[%s1 + $0x7c] sm:$0xf]
  %v188 = vunpack.c.l.b16 %v92
  %v189 = vunpack.c.h.b16 %v92
  %v190 = vunpack.c.l.b16 %v93
  %v191 = vunpack.c.h.b16 %v93
  %v192 = vunpack.c.l.b16 %v94
  %v193 = vunpack.c.h.b16 %v94
  %v194 = vunpack.c.l.b16 %v95
  %v195 = vunpack.c.h.b16 %v95
  %v196 = vunpack.c.l.b16 %v96
  %v197 = vunpack.c.h.b16 %v96
  %v198 = vunpack.c.l.b16 %v97
  %v199 = vunpack.c.h.b16 %v97
  %v200 = vunpack.c.l.b16 %v98
  %v201 = vunpack.c.h.b16 %v98
  %v202 = vunpack.c.l.b16 %v99
  %v203 = vunpack.c.h.b16 %v99
  %v204 = vunpack.c.l.b16 %v100
  %v205 = vunpack.c.h.b16 %v100
  %v206 = vunpack.c.l.b16 %v101
  %v207 = vunpack.c.h.b16 %v101
  %v208 = vunpack.c.l.b16 %v102
  %v209 = vunpack.c.h.b16 %v102
  %v210 = vunpack.c.l.b16 %v103
  %v211 = vunpack.c.h.b16 %v103
  %v212 = vunpack.c.l.b16 %v104
  %v213 = vunpack.c.h.b16 %v104
  %v214 = vunpack.c.l.b16 %v105
  %v215 = vunpack.c.h.b16 %v105
  %v216 = vunpack.c.l.b16 %v106
  %v217 = vunpack.c.h.b16 %v106
  %v218 = vunpack.c.l.b16 %v107
  %v219 = vunpack.c.h.b16 %v107
  %v220 = vunpack.c.l.b16 %v108
  %v221 = vunpack.c.h.b16 %v108
  %v222 = vunpack.c.l.b16 %v109
  %v223 = vunpack.c.h.b16 %v109
  %v224 = vunpack.c.l.b16 %v110
  %v225 = vunpack.c.h.b16 %v110
  %v226 = vunpack.c.l.b16 %v111
  %v227 = vunpack.c.h.b16 %v111
  %v228 = vunpack.c.l.b16 %v112
  %v229 = vunpack.c.h.b16 %v112
  %v230 = vunpack.c.l.b16 %v113
  %v231 = vunpack.c.h.b16 %v113
  %v232 = vunpack.c.l.b16 %v114
  %v233 = vunpack.c.h.b16 %v114
  %v234 = vunpack.c.l.b16 %v115
  %v235 = vunpack.c.h.b16 %v115
  %v236 = vunpack.c.l.b16 %v116
  %v237 = vunpack.c.h.b16 %v116
  %v238 = vunpack.c.l.b16 %v117
  %v239 = vunpack.c.h.b16 %v117
  %v240 = vunpack.c.l.b16 %v118
  %v241 = vunpack.c.h.b16 %v118
  %v242 = vunpack.c.l.b16 %v119
  %v243 = vunpack.c.h.b16 %v119
  %v244 = vunpack.c.l.b16 %v120
  %v245 = vunpack.c.h.b16 %v120
  %v246 = vunpack.c.l.b16 %v121
  %v247 = vunpack.c.h.b16 %v121
  %v248 = vunpack.c.l.b16 %v122
  %v249 = vunpack.c.h.b16 %v122
  %v250 = vunpack.c.l.b16 %v123
  %v251 = vunpack.c.h.b16 %v123
  %v252 = vpack.c.b16 %v190, %v188
  %v253 = vpack.c.b16 %v191, %v189
  %v254 = vpack.c.b16 %v194, %v192
  %v255 = vpack.c.b16 %v195, %v193
  %v256 = vpack.c.b16 %v198, %v196
  %v257 = vpack.c.b16 %v199, %v197
  %v258 = vpack.c.b16 %v202, %v200
  %v259 = vpack.c.b16 %v203, %v201
  %v260 = vpack.c.b16 %v206, %v204
  %v261 = vpack.c.b16 %v207, %v205
  %v262 = vpack.c.b16 %v210, %v208
  %v263 = vpack.c.b16 %v211, %v209
  %v264 = vpack.c.b16 %v214, %v212
  %v265 = vpack.c.b16 %v215, %v213
  %v266 = vpack.c.b16 %v218, %v216
  %v267 = vpack.c.b16 %v219, %v217
  %v268 = vpack.c.b16 %v222, %v220
  %v269 = vpack.c.b16 %v223, %v221
  %v270 = vpack.c.b16 %v226, %v224
  %v271 = vpack.c.b16 %v227, %v225
  %v272 = vpack.c.b16 %v230, %v228
  %v273 = vpack.c.b16 %v231, %v229
  %v274 = vpack.c.b16 %v234, %v232
  %v275 = vpack.c.b16 %v235, %v233
  %v276 = vpack.c.b16 %v238, %v236
  %v277 = vpack.c.b16 %v239, %v237
  %v278 = vpack.c.b16 %v242, %v240
  %v279 = vpack.c.b16 %v243, %v241
  %v280 = vpack.c.b16 %v246, %v244
  %v281 = vpack.c.b16 %v247, %v245
  %v282 = vpack.c.b16 %v250, %v248
  %v283 = vpack.c.b16 %v251, %v249
  %v348 = vunpack.c.l.b16 %v124
  %v349 = vunpack.c.l.b16 %v125
  %v350 = vunpack.c.l.b16 %v126
  %v351 = vunpack.c.l.b16 %v127
  %v352 = vunpack.c.l.b16 %v128
  %v353 = vunpack.c.l.b16 %v129
  %v354 = vunpack.c.l.b16 %v130
  %v355 = vunpack.c.l.b16 %v131
  %v356 = vunpack.c.l.b16 %v132
  %v357 = vunpack.c.l.b16 %v133
  %v358 = vunpack.c.l.b16 %v134
  %v359 = vunpack.c.l.b16 %v135
  %v360 = vunpack.c.l.b16 %v136
  %v361 = vunpack.c.l.b16 %v137
  %v362 = vunpack.c.l.b16 %v138
  %v363 = vunpack.c.l.b16 %v139
  %v364 = vunpack.c.l.b16 %v140
  %v365 = vunpack.c.l.b16 %v141
  %v366 = vunpack.c.l.b16 %v142
  %v367 = vunpack.c.l.b16 %v143
  %v368 = vunpack.c.l.b16 %v144
  %v369 = vunpack.c.l.b16 %v145
  %v370 = vunpack.c.l.b16 %v146
  %v371 = vunpack.c.l.b16 %v147
  %v372 = vunpack.c.l.b16 %v148
  %v373 = vunpack.c.l.b16 %v149
  %v374 = vunpack.c.l.b16 %v150
  %v375 = vunpack.c.l.b16 %v151
  %v376 = vunpack.c.l.b16 %v152
  %v377 = vunpack.c.l.b16 %v153
  %v378 = vunpack.c.l.b16 %v154
  %v379 = vunpack.c.l.b16 %v155
  %v380 = vpack.c.b16 %v349, %v348
  %v381 = vpack.c.b16 %v351, %v350
  %v382 = vpack.c.b16 %v353, %v352
  %v383 = vpack.c.b16 %v355, %v354
  %v384 = vpack.c.b16 %v357, %v356
  %v385 = vpack.c.b16 %v359, %v358
  %v386 = vpack.c.b16 %v361, %v360
  %v387 = vpack.c.b16 %v363, %v362
  %v388 = vpack.c.b16 %v365, %v364
  %v389 = vpack.c.b16 %v367, %v366
  %v390 = vpack.c.b16 %v369, %v368
  %v391 = vpack.c.b16 %v371, %v370
  %v392 = vpack.c.b16 %v373, %v372
  %v393 = vpack.c.b16 %v375, %v374
  %v394 = vpack.c.b16 %v377, %v376
  %v395 = vpack.c.b16 %v379, %v378
  %412 = vmatprep.subr.bf16.mxu0 0
  %413 = vmatpush1.bf16.msra.mxu0 %v380
  %414 = vmatprep.subr.bf16.mxu0 0
  %415 = vmatpush1.bf16.msra.mxu0 %v381
  %416 = vmatprep.subr.bf16.mxu0 0
  %417 = vmatpush1.bf16.msra.mxu0 %v382
  %418 = vmatprep.subr.bf16.mxu0 0
  %419 = vmatpush1.bf16.msra.mxu0 %v383
  %420 = vmatprep.subr.bf16.mxu0 0
  %421 = vmatpush1.bf16.msra.mxu0 %v384
  %422 = vmatprep.subr.bf16.mxu0 0
  %423 = vmatpush1.bf16.msra.mxu0 %v385
  %424 = vmatprep.subr.bf16.mxu0 0
  %425 = vmatpush1.bf16.msra.mxu0 %v386
  %426 = vmatprep.subr.bf16.mxu0 0
  %427 = vmatpush1.bf16.msra.mxu0 %v387
  %428 = vmatprep.subr.bf16.mxu0 0
  %429 = vmatpush1.bf16.msra.mxu0 %v388
  %430 = vmatprep.subr.bf16.mxu0 0
  %431 = vmatpush1.bf16.msra.mxu0 %v389
  %432 = vmatprep.subr.bf16.mxu0 0
  %433 = vmatpush1.bf16.msra.mxu0 %v390
  %434 = vmatprep.subr.bf16.mxu0 0
  %435 = vmatpush1.bf16.msra.mxu0 %v391
  %436 = vmatprep.subr.bf16.mxu0 0
  %437 = vmatpush1.bf16.msra.mxu0 %v392
  %438 = vmatprep.subr.bf16.mxu0 0
  %439 = vmatpush1.bf16.msra.mxu0 %v393
  %440 = vmatprep.subr.bf16.mxu0 0
  %441 = vmatpush1.bf16.msra.mxu0 %v394
  %442 = vmatprep.subr.bf16.mxu0 0
  %443 = vmatpush1.bf16.msra.mxu0 %v395
  %444 = vmatprep.mubr.bf16.mxu0 %v253
  %445 = vmatmul.mubr.bf16.gmra.mrb[0].mxu0 %v252
  %v446 = vpop.f32.mrb[0].mxu0
  %v447 = vadd.f32 0.0, %v446
  %v448 = vpop.f32.mrb[0].mxu0
  %v449 = vpop.f32.mrb[0].mxu0
  %v450 = vadd.f32 0.0, %v449
  %v451 = vpop.f32.mrb[0].mxu0
  %452 = vmatprep.mubr.bf16.mxu0 %v255
  %453 = vmatmul.mubr.bf16.gmra.mrb[0].mxu0 %v254
  %v454 = vpop.f32.mrb[0].mxu0
  %v455 = vadd.f32 0.0, %v454
  %v456 = vpop.f32.mrb[0].mxu0
  %v457 = vpop.f32.mrb[0].mxu0
  %v458 = vadd.f32 0.0, %v457
  %v459 = vpop.f32.mrb[0].mxu0
  %460 = vmatprep.mubr.bf16.mxu0 %v257
  %461 = vmatmul.mubr.bf16.gmra.mrb[0].mxu0 %v256
  %v462 = vpop.f32.mrb[0].mxu0
  %v463 = vadd.f32 0.0, %v462
  %v464 = vpop.f32.mrb[0].mxu0
  %v465 = vpop.f32.mrb[0].mxu0
  %v466 = vadd.f32 0.0, %v465
  %v467 = vpop.f32.mrb[0].mxu0
  %468 = vmatprep.mubr.bf16.mxu0 %v259
  %469 = vmatmul.mubr.bf16.gmra.mrb[0].mxu0 %v258
  %v470 = vpop.f32.mrb[0].mxu0
  %v471 = vadd.f32 0.0, %v470
  %v472 = vpop.f32.mrb[0].mxu0
  %v473 = vpop.f32.mrb[0].mxu0
  %v474 = vadd.f32 0.0, %v473
  %v475 = vpop.f32.mrb[0].mxu0
  %476 = vmatprep.mubr.bf16.mxu0 %v261
  %477 = vmatmul.mubr.bf16.gmra.mrb[0].mxu0 %v260
  %v478 = vpop.f32.mrb[0].mxu0
  %v479 = vadd.f32 0.0, %v478
  %v480 = vpop.f32.mrb[0].mxu0
  %v481 = vpop.f32.mrb[0].mxu0
  %v482 = vadd.f32 0.0, %v481
  %v483 = vpop.f32.mrb[0].mxu0
  %484 = vmatprep.mubr.bf16.mxu0 %v263
  %485 = vmatmul.mubr.bf16.gmra.mrb[0].mxu0 %v262
  %v486 = vpop.f32.mrb[0].mxu0
  %v487 = vadd.f32 0.0, %v486
  %v488 = vpop.f32.mrb[0].mxu0
  %v489 = vpop.f32.mrb[0].mxu0
  %v490 = vadd.f32 0.0, %v489
  %v491 = vpop.f32.mrb[0].mxu0
  %492 = vmatprep.mubr.bf16.mxu0 %v265
  %493 = vmatmul.mubr.bf16.gmra.mrb[0].mxu0 %v264
  %v494 = vpop.f32.mrb[0].mxu0
  %v495 = vadd.f32 0.0, %v494
  %v496 = vpop.f32.mrb[0].mxu0
  %v497 = vpop.f32.mrb[0].mxu0
  %v498 = vadd.f32 0.0, %v497
  %v499 = vpop.f32.mrb[0].mxu0
  %500 = vmatprep.mubr.bf16.mxu0 %v267
  %501 = vmatmul.mubr.bf16.gmra.mrb[0].mxu0 %v266
  %v502 = vpop.f32.mrb[0].mxu0
  %v503 = vadd.f32 0.0, %v502
  %v504 = vpop.f32.mrb[0].mxu0
  %v505 = vpop.f32.mrb[0].mxu0
  %v506 = vadd.f32 0.0, %v505
  %v507 = vpop.f32.mrb[0].mxu0
  %508 = vmatprep.mubr.bf16.mxu0 %v269
  %509 = vmatmul.mubr.bf16.gmra.mrb[0].mxu0 %v268
  %v510 = vpop.f32.mrb[0].mxu0
  %v511 = vadd.f32 0.0, %v510
  %v512 = vpop.f32.mrb[0].mxu0
  %v513 = vpop.f32.mrb[0].mxu0
  %v514 = vadd.f32 0.0, %v513
  %v515 = vpop.f32.mrb[0].mxu0
  %516 = vmatprep.mubr.bf16.mxu0 %v271
  %517 = vmatmul.mubr.bf16.gmra.mrb[0].mxu0 %v270
  %v518 = vpop.f32.mrb[0].mxu0
  %v519 = vadd.f32 0.0, %v518
  %v520 = vpop.f32.mrb[0].mxu0
  %v521 = vpop.f32.mrb[0].mxu0
  %v522 = vadd.f32 0.0, %v521
  %v523 = vpop.f32.mrb[0].mxu0
  %524 = vmatprep.mubr.bf16.mxu0 %v273
  %525 = vmatmul.mubr.bf16.gmra.mrb[0].mxu0 %v272
  %v526 = vpop.f32.mrb[0].mxu0
  %v527 = vadd.f32 0.0, %v526
  %v528 = vpop.f32.mrb[0].mxu0
  %v529 = vpop.f32.mrb[0].mxu0
  %v530 = vadd.f32 0.0, %v529
  %v531 = vpop.f32.mrb[0].mxu0
  %532 = vmatprep.mubr.bf16.mxu0 %v275
  %533 = vmatmul.mubr.bf16.gmra.mrb[0].mxu0 %v274
  %v534 = vpop.f32.mrb[0].mxu0
  %v535 = vadd.f32 0.0, %v534
  %v536 = vpop.f32.mrb[0].mxu0
  %v537 = vpop.f32.mrb[0].mxu0
  %v538 = vadd.f32 0.0, %v537
  %v539 = vpop.f32.mrb[0].mxu0
  %540 = vmatprep.mubr.bf16.mxu0 %v277
  %541 = vmatmul.mubr.bf16.gmra.mrb[0].mxu0 %v276
  %v542 = vpop.f32.mrb[0].mxu0
  %v543 = vadd.f32 0.0, %v542
  %v544 = vpop.f32.mrb[0].mxu0
  %v545 = vpop.f32.mrb[0].mxu0
  %v546 = vadd.f32 0.0, %v545
  %v547 = vpop.f32.mrb[0].mxu0
  %548 = vmatprep.mubr.bf16.mxu0 %v279
  %549 = vmatmul.mubr.bf16.gmra.mrb[0].mxu0 %v278
  %v550 = vpop.f32.mrb[0].mxu0
  %v551 = vadd.f32 0.0, %v550
  %v552 = vpop.f32.mrb[0].mxu0
  %v553 = vpop.f32.mrb[0].mxu0
  %v554 = vadd.f32 0.0, %v553
  %v555 = vpop.f32.mrb[0].mxu0
  %556 = vmatprep.mubr.bf16.mxu0 %v281
  %557 = vmatmul.mubr.bf16.gmra.mrb[0].mxu0 %v280
  %v558 = vpop.f32.mrb[0].mxu0
  %v559 = vadd.f32 0.0, %v558
  %v560 = vpop.f32.mrb[0].mxu0
  %v561 = vpop.f32.mrb[0].mxu0
  %v562 = vadd.f32 0.0, %v561
  %v563 = vpop.f32.mrb[0].mxu0
  %564 = vmatprep.mubr.bf16.mxu0 %v283
  %565 = vmatmul.mubr.bf16.gmra.mrb[0].mxu0 %v282
  %v566 = vpop.f32.mrb[0].mxu0
  %v567 = vadd.f32 0.0, %v566
  %v568 = vpop.f32.mrb[0].mxu0
  %v569 = vpop.f32.mrb[0].mxu0
  %v570 = vadd.f32 0.0, %v569
  %v571 = vpop.f32.mrb[0].mxu0
  %572 = vdwg.mxu0
  %v573 = vadd.f32 %v60, %v447
  %v574 = vadd.f32 %v61, %v450
  %v575 = vadd.f32 %v62, %v455
  %v576 = vadd.f32 %v63, %v458
  %v577 = vadd.f32 %v64, %v463
  %v578 = vadd.f32 %v65, %v466
  %v579 = vadd.f32 %v66, %v471
  %v580 = vadd.f32 %v67, %v474
  %v581 = vadd.f32 %v68, %v479
  %v582 = vadd.f32 %v69, %v482
  %v583 = vadd.f32 %v70, %v487
  %v584 = vadd.f32 %v71, %v490
  %v585 = vadd.f32 %v72, %v495
  %v586 = vadd.f32 %v73, %v498
  %v587 = vadd.f32 %v74, %v503
  %v588 = vadd.f32 %v75, %v506
  %v589 = vadd.f32 %v76, %v511
  %v590 = vadd.f32 %v77, %v514
  %v591 = vadd.f32 %v78, %v519
  %v592 = vadd.f32 %v79, %v522
  %v593 = vadd.f32 %v80, %v527
  %v594 = vadd.f32 %v81, %v530
  %v595 = vadd.f32 %v82, %v535
  %v596 = vadd.f32 %v83, %v538
  %v597 = vadd.f32 %v84, %v543
  %v598 = vadd.f32 %v85, %v546
  %v599 = vadd.f32 %v86, %v551
  %v600 = vadd.f32 %v87, %v554
  %v601 = vadd.f32 %v88, %v559
  %v602 = vadd.f32 %v89, %v562
  %v603 = vadd.f32 %v90, %v567
  %v604 = vadd.f32 %v91, %v570
  %605 = vst [vmem:[%s6] sm:$0xff] %v573
  %606 = vst [vmem:[%s6 + $0x8] sm:$0xff] %v574
  %607 = vst [vmem:[%s6 + $0x10] sm:$0xff] %v575
  %608 = vst [vmem:[%s6 + $0x18] sm:$0xff] %v576
  %609 = vst [vmem:[%s6 + $0x20] sm:$0xff] %v577
  %610 = vst [vmem:[%s6 + $0x28] sm:$0xff] %v578
  %611 = vst [vmem:[%s6 + $0x30] sm:$0xff] %v579
  %612 = vst [vmem:[%s6 + $0x38] sm:$0xff] %v580
  %613 = vst [vmem:[%s6 + $0x40] sm:$0xff] %v581
  %614 = vst [vmem:[%s6 + $0x48] sm:$0xff] %v582
  %615 = vst [vmem:[%s6 + $0x50] sm:$0xff] %v583
  %616 = vst [vmem:[%s6 + $0x58] sm:$0xff] %v584
  %617 = vst [vmem:[%s6 + $0x60] sm:$0xff] %v585
  %618 = vst [vmem:[%s6 + $0x68] sm:$0xff] %v586
  %619 = vst [vmem:[%s6 + $0x70] sm:$0xff] %v587
  %620 = vst [vmem:[%s6 + $0x78] sm:$0xff] %v588
  %621 = vst [vmem:[%s6 + $0x80] sm:$0xff] %v589
  %622 = vst [vmem:[%s6 + $0x88] sm:$0xff] %v590
  %623 = vst [vmem:[%s6 + $0x90] sm:$0xff] %v591
  %624 = vst [vmem:[%s6 + $0x98] sm:$0xff] %v592
  %625 = vst [vmem:[%s6 + $0xa0] sm:$0xff] %v593
  %626 = vst [vmem:[%s6 + $0xa8] sm:$0xff] %v594
  %627 = vst [vmem:[%s6 + $0xb0] sm:$0xff] %v595
  %628 = vst [vmem:[%s6 + $0xb8] sm:$0xff] %v596
  %629 = vst [vmem:[%s6 + $0xc0] sm:$0xff] %v597
  %630 = vst [vmem:[%s6 + $0xc8] sm:$0xff] %v598
  %631 = vst [vmem:[%s6 + $0xd0] sm:$0xff] %v599
  %632 = vst [vmem:[%s6 + $0xd8] sm:$0xff] %v600
  %633 = vst [vmem:[%s6 + $0xe0] sm:$0xff] %v601
  %634 = vst [vmem:[%s6 + $0xe8] sm:$0xff] %v602
  %635 = vst [vmem:[%s6 + $0xf0] sm:$0xff] %v603
  %636 = vst [vmem:[%s6 + $0xf8] sm:$0xff] %v604
  // Predicated region
  $region30: #{graphsage_forward.7} parent=0 // pred_check
    %p637 = pneg %p24
  $region31: #{graphsage_forward.7} parent=0 // pred_check_branch
    %639 = sbr.rel (%p637) target = $region33
  $region32: #{graphsage_forward.7} parent=0 // pred_region
    %v640 = vld [vmem:[%s2] sm:$0xf]
    %v641 = vld [vmem:[%s2 + $0x4] sm:$0xf]
    %v642 = vld [vmem:[%s2 + $0x8] sm:$0xf]
    %v643 = vld [vmem:[%s2 + $0xc] sm:$0xf]
    %v644 = vld [vmem:[%s2 + $0x10] sm:$0xf]
    %v645 = vld [vmem:[%s2 + $0x14] sm:$0xf]
    %v646 = vld [vmem:[%s2 + $0x18] sm:$0xf]
    %v647 = vld [vmem:[%s2 + $0x1c] sm:$0xf]
    %v648 = vld [vmem:[%s2 + $0x20] sm:$0xf]
    %v649 = vld [vmem:[%s2 + $0x24] sm:$0xf]
    %v650 = vld [vmem:[%s2 + $0x28] sm:$0xf]
    %v651 = vld [vmem:[%s2 + $0x2c] sm:$0xf]
    %v652 = vld [vmem:[%s2 + $0x30] sm:$0xf]
    %v653 = vld [vmem:[%s2 + $0x34] sm:$0xf]
    %v654 = vld [vmem:[%s2 + $0x38] sm:$0xf]
    %v655 = vld [vmem:[%s2 + $0x3c] sm:$0xf]
    %v656 = vld [vmem:[%s2 + $0x40] sm:$0xf]
    %v657 = vld [vmem:[%s2 + $0x44] sm:$0xf]
    %v658 = vld [vmem:[%s2 + $0x48] sm:$0xf]
    %v659 = vld [vmem:[%s2 + $0x4c] sm:$0xf]
    %v660 = vld [vmem:[%s2 + $0x50] sm:$0xf]
    %v661 = vld [vmem:[%s2 + $0x54] sm:$0xf]
    %v662 = vld [vmem:[%s2 + $0x58] sm:$0xf]
    %v663 = vld [vmem:[%s2 + $0x5c] sm:$0xf]
    %v664 = vld [vmem:[%s2 + $0x60] sm:$0xf]
    %v665 = vld [vmem:[%s2 + $0x64] sm:$0xf]
    %v666 = vld [vmem:[%s2 + $0x68] sm:$0xf]
    %v667 = vld [vmem:[%s2 + $0x6c] sm:$0xf]
    %v668 = vld [vmem:[%s2 + $0x70] sm:$0xf]
    %v669 = vld [vmem:[%s2 + $0x74] sm:$0xf]
    %v670 = vld [vmem:[%s2 + $0x78] sm:$0xf]
    %v671 = vld [vmem:[%s2 + $0x7c] sm:$0xf]
    %v672 = vld [vmem:[%s3] sm:$0xf]
    %v673 = vld [vmem:[%s3 + $0x4] sm:$0xf]
    %v674 = vld [vmem:[%s3 + $0x8] sm:$0xf]
    %v675 = vld [vmem:[%s3 + $0xc] sm:$0xf]
    %v676 = vld [vmem:[%s3 + $0x10] sm:$0xf]
    %v677 = vld [vmem:[%s3 + $0x14] sm:$0xf]
    %v678 = vld [vmem:[%s3 + $0x18] sm:$0xf]
    %v679 = vld [vmem:[%s3 + $0x1c] sm:$0xf]
    %v680 = vld [vmem:[%s3 + $0x20] sm:$0xf]
    %v681 = vld [vmem:[%s3 + $0x24] sm:$0xf]
    %v682 = vld [vmem:[%s3 + $0x28] sm:$0xf]
    %v683 = vld [vmem:[%s3 + $0x2c] sm:$0xf]
    %v684 = vld [vmem:[%s3 + $0x30] sm:$0xf]
    %v685 = vld [vmem:[%s3 + $0x34] sm:$0xf]
    %v686 = vld [vmem:[%s3 + $0x38] sm:$0xf]
    %v687 = vld [vmem:[%s3 + $0x3c] sm:$0xf]
    %v720 = vunpack.c.l.b16 %v640
    %v721 = vunpack.c.l.b16 %v641
    %v722 = vunpack.c.l.b16 %v642
    %v723 = vunpack.c.l.b16 %v643
    %v724 = vunpack.c.l.b16 %v644
    %v725 = vunpack.c.l.b16 %v645
    %v726 = vunpack.c.l.b16 %v646
    %v727 = vunpack.c.l.b16 %v647
    %v728 = vunpack.c.l.b16 %v648
    %v729 = vunpack.c.l.b16 %v649
    %v730 = vunpack.c.l.b16 %v650
    %v731 = vunpack.c.l.b16 %v651
    %v732 = vunpack.c.l.b16 %v652
    %v733 = vunpack.c.l.b16 %v653
    %v734 = vunpack.c.l.b16 %v654
    %v735 = vunpack.c.l.b16 %v655
    %v736 = vunpack.c.l.b16 %v656
    %v737 = vunpack.c.l.b16 %v657
    %v738 = vunpack.c.l.b16 %v658
    %v739 = vunpack.c.l.b16 %v659
    %v740 = vunpack.c.l.b16 %v660
    %v741 = vunpack.c.l.b16 %v661
    %v742 = vunpack.c.l.b16 %v662
    %v743 = vunpack.c.l.b16 %v663
    %v744 = vunpack.c.l.b16 %v664
    %v745 = vunpack.c.l.b16 %v665
    %v746 = vunpack.c.l.b16 %v666
    %v747 = vunpack.c.l.b16 %v667
    %v748 = vunpack.c.l.b16 %v668
    %v749 = vunpack.c.l.b16 %v669
    %v750 = vunpack.c.l.b16 %v670
    %v751 = vunpack.c.l.b16 %v671
    %v752 = vpack.c.b16 %v721, %v720
    %v753 = vpack.c.b16 %v723, %v722
    %v754 = vpack.c.b16 %v725, %v724
    %v755 = vpack.c.b16 %v727, %v726
    %v756 = vpack.c.b16 %v729, %v728
    %v757 = vpack.c.b16 %v731, %v730
    %v758 = vpack.c.b16 %v733, %v732
    %v759 = vpack.c.b16 %v735, %v734
    %v760 = vpack.c.b16 %v737, %v736
    %v761 = vpack.c.b16 %v739, %v738
    %v762 = vpack.c.b16 %v741, %v740
    %v763 = vpack.c.b16 %v743, %v742
    %v764 = vpack.c.b16 %v745, %v744
    %v765 = vpack.c.b16 %v747, %v746
    %v766 = vpack.c.b16 %v749, %v748
    %v767 = vpack.c.b16 %v751, %v750
    %v800 = vunpack.c.l.b16 %v672
    %v801 = vunpack.c.l.b16 %v673
    %v802 = vunpack.c.l.b16 %v674
    %v803 = vunpack.c.l.b16 %v675
    %v804 = vunpack.c.l.b16 %v676
    %v805 = vunpack.c.l.b16 %v677
    %v806 = vunpack.c.l.b16 %v678
    %v807 = vunpack.c.l.b16 %v679
    %v808 = vunpack.c.l.b16 %v680
    %v809 = vunpack.c.l.b16 %v681
    %v810 = vunpack.c.l.b16 %v682
    %v811 = vunpack.c.l.b16 %v683
    %v812 = vunpack.c.l.b16 %v684
    %v813 = vunpack.c.l.b16 %v685
    %v814 = vunpack.c.l.b16 %v686
    %v815 = vunpack.c.l.b16 %v687
    %v816 = vpack.c.b16 %v801, %v800
    %v817 = vpack.c.b16 %v803, %v802
    %v818 = vpack.c.b16 %v805, %v804
    %v819 = vpack.c.b16 %v807, %v806
    %v820 = vpack.c.b16 %v809, %v808
    %v821 = vpack.c.b16 %v811, %v810
    %v822 = vpack.c.b16 %v813, %v812
    %v823 = vpack.c.b16 %v815, %v814
    %832 = vmatprep.subr.bf16.mxu0 0
    %833 = vmatpush1.bf16.msra.mxu0 %v816
    %834 = vmatprep.subr.bf16.mxu0 0
    %835 = vmatpush1.bf16.msra.mxu0 %v817
    %836 = vmatprep.subr.bf16.mxu0 0
    %837 = vmatpush1.bf16.msra.mxu0 %v818
    %838 = vmatprep.subr.bf16.mxu0 0
    %839 = vmatpush1.bf16.msra.mxu0 %v819
    %840 = vmatprep.subr.bf16.mxu0 0
    %841 = vmatpush1.bf16.msra.mxu0 %v820
    %842 = vmatprep.subr.bf16.mxu0 0
    %843 = vmatpush1.bf16.msra.mxu0 %v821
    %844 = vmatprep.subr.bf16.mxu0 0
    %845 = vmatpush1.bf16.msra.mxu0 %v822
    %846 = vmatprep.subr.bf16.mxu0 0
    %847 = vmatpush1.bf16.msra.mxu0 %v823
    %848 = vmatprep.subr.bf16.mxu0 0
    %849 = vmatpush1.bf16.msra.mxu0 0
    %850 = vmatprep.subr.bf16.mxu0 0
    %851 = vmatpush1.bf16.msra.mxu0 0
    %852 = vmatprep.subr.bf16.mxu0 0
    %853 = vmatpush1.bf16.msra.mxu0 0
    %854 = vmatprep.subr.bf16.mxu0 0
    %855 = vmatpush1.bf16.msra.mxu0 0
    %856 = vmatprep.subr.bf16.mxu0 0
    %857 = vmatpush1.bf16.msra.mxu0 0
    %858 = vmatprep.subr.bf16.mxu0 0
    %859 = vmatpush1.bf16.msra.mxu0 0
    %860 = vmatprep.subr.bf16.mxu0 0
    %861 = vmatpush1.bf16.msra.mxu0 0
    %862 = vmatprep.subr.bf16.mxu0 0
    %863 = vmatpush1.bf16.msra.mxu0 0
    %864 = vmatprep.mubr.bf16.mxu0 0
    %865 = vmatmul.mubr.bf16.gmra.mrb[0].mxu0 %v752
    %v866 = vpop.f32.mrb[0].mxu0
    %v867 = vadd.f32 0.0, %v866
    %v868 = vpop.f32.mrb[0].mxu0
    %v869 = vpop.f32.mrb[0].mxu0
    %v870 = vadd.f32 0.0, %v869
    %v871 = vpop.f32.mrb[0].mxu0
    %872 = vmatprep.mubr.bf16.mxu0 0
    %873 = vmatmul.mubr.bf16.gmra.mrb[0].mxu0 %v753
    %v874 = vpop.f32.mrb[0].mxu0
    %v875 = vadd.f32 0.0, %v874
    %v876 = vpop.f32.mrb[0].mxu0
    %v877 = vpop.f32.mrb[0].mxu0
    %v878 = vadd.f32 0.0, %v877
    %v879 = vpop.f32.mrb[0].mxu0
    %880 = vmatprep.mubr.bf16.mxu0 0
    %881 = vmatmul.mubr.bf16.gmra.mrb[0].mxu0 %v754
    %v882 = vpop.f32.mrb[0].mxu0
    %v883 = vadd.f32 0.0, %v882
    %v884 = vpop.f32.mrb[0].mxu0
    %v885 = vpop.f32.mrb[0].mxu0
    %v886 = vadd.f32 0.0, %v885
    %v887 = vpop.f32.mrb[0].mxu0
    %888 = vmatprep.mubr.bf16.mxu0 0
    %889 = vmatmul.mubr.bf16.gmra.mrb[0].mxu0 %v755
    %v890 = vpop.f32.mrb[0].mxu0
    %v891 = vadd.f32 0.0, %v890
    %v892 = vpop.f32.mrb[0].mxu0
    %v893 = vpop.f32.mrb[0].mxu0
    %v894 = vadd.f32 0.0, %v893
    %v895 = vpop.f32.mrb[0].mxu0
    %896 = vmatprep.mubr.bf16.mxu0 0
    %897 = vmatmul.mubr.bf16.gmra.mrb[0].mxu0 %v756
    %v898 = vpop.f32.mrb[0].mxu0
    %v899 = vadd.f32 0.0, %v898
    %v900 = vpop.f32.mrb[0].mxu0
    %v901 = vpop.f32.mrb[0].mxu0
    %v902 = vadd.f32 0.0, %v901
    %v903 = vpop.f32.mrb[0].mxu0
    %904 = vmatprep.mubr.bf16.mxu0 0
    %905 = vmatmul.mubr.bf16.gmra.mrb[0].mxu0 %v757
    %v906 = vpop.f32.mrb[0].mxu0
    %v907 = vadd.f32 0.0, %v906
    %v908 = vpop.f32.mrb[0].mxu0
    %v909 = vpop.f32.mrb[0].mxu0
    %v910 = vadd.f32 0.0, %v909
    %v911 = vpop.f32.mrb[0].mxu0
    %912 = vmatprep.mubr.bf16.mxu0 0
    %913 = vmatmul.mubr.bf16.gmra.mrb[0].mxu0 %v758
    %v914 = vpop.f32.mrb[0].mxu0
    %v915 = vadd.f32 0.0, %v914
    %v916 = vpop.f32.mrb[0].mxu0
    %v917 = vpop.f32.mrb[0].mxu0
    %v918 = vadd.f32 0.0, %v917
    %v919 = vpop.f32.mrb[0].mxu0
    %920 = vmatprep.mubr.bf16.mxu0 0
    %921 = vmatmul.mubr.bf16.gmra.mrb[0].mxu0 %v759
    %v922 = vpop.f32.mrb[0].mxu0
    %v923 = vadd.f32 0.0, %v922
    %v924 = vpop.f32.mrb[0].mxu0
    %v925 = vpop.f32.mrb[0].mxu0
    %v926 = vadd.f32 0.0, %v925
    %v927 = vpop.f32.mrb[0].mxu0
    %928 = vmatprep.mubr.bf16.mxu0 0
    %929 = vmatmul.mubr.bf16.gmra.mrb[0].mxu0 %v760
    %v930 = vpop.f32.mrb[0].mxu0
    %v931 = vadd.f32 0.0, %v930
    %v932 = vpop.f32.mrb[0].mxu0
    %v933 = vpop.f32.mrb[0].mxu0
    %v934 = vadd.f32 0.0, %v933
    %v935 = vpop.f32.mrb[0].mxu0
    %936 = vmatprep.mubr.bf16.mxu0 0
    %937 = vmatmul.mubr.bf16.gmra.mrb[0].mxu0 %v761
    %v938 = vpop.f32.mrb[0].mxu0
    %v939 = vadd.f32 0.0, %v938
    %v940 = vpop.f32.mrb[0].mxu0
    %v941 = vpop.f32.mrb[0].mxu0
    %v942 = vadd.f32 0.0, %v941
    %v943 = vpop.f32.mrb[0].mxu0
    %944 = vmatprep.mubr.bf16.mxu0 0
    %945 = vmatmul.mubr.bf16.gmra.mrb[0].mxu0 %v762
    %v946 = vpop.f32.mrb[0].mxu0
    %v947 = vadd.f32 0.0, %v946
    %v948 = vpop.f32.mrb[0].mxu0
    %v949 = vpop.f32.mrb[0].mxu0
    %v950 = vadd.f32 0.0, %v949
    %v951 = vpop.f32.mrb[0].mxu0
    %952 = vmatprep.mubr.bf16.mxu0 0
    %953 = vmatmul.mubr.bf16.gmra.mrb[0].mxu0 %v763
    %v954 = vpop.f32.mrb[0].mxu0
    %v955 = vadd.f32 0.0, %v954
    %v956 = vpop.f32.mrb[0].mxu0
    %v957 = vpop.f32.mrb[0].mxu0
    %v958 = vadd.f32 0.0, %v957
    %v959 = vpop.f32.mrb[0].mxu0
    %960 = vmatprep.mubr.bf16.mxu0 0
    %961 = vmatmul.mubr.bf16.gmra.mrb[0].mxu0 %v764
    %v962 = vpop.f32.mrb[0].mxu0
    %v963 = vadd.f32 0.0, %v962
    %v964 = vpop.f32.mrb[0].mxu0
    %v965 = vpop.f32.mrb[0].mxu0
    %v966 = vadd.f32 0.0, %v965
    %v967 = vpop.f32.mrb[0].mxu0
    %968 = vmatprep.mubr.bf16.mxu0 0
    %969 = vmatmul.mubr.bf16.gmra.mrb[0].mxu0 %v765
    %v970 = vpop.f32.mrb[0].mxu0
    %v971 = vadd.f32 0.0, %v970
    %v972 = vpop.f32.mrb[0].mxu0
    %v973 = vpop.f32.mrb[0].mxu0
    %v974 = vadd.f32 0.0, %v973
    %v975 = vpop.f32.mrb[0].mxu0
    %976 = vmatprep.mubr.bf16.mxu0 0
    %977 = vmatmul.mubr.bf16.gmra.mrb[0].mxu0 %v766
    %v978 = vpop.f32.mrb[0].mxu0
    %v979 = vadd.f32 0.0, %v978
    %v980 = vpop.f32.mrb[0].mxu0
    %v981 = vpop.f32.mrb[0].mxu0
    %v982 = vadd.f32 0.0, %v981
    %v983 = vpop.f32.mrb[0].mxu0
    %984 = vmatprep.mubr.bf16.mxu0 0
    %985 = vmatmul.mubr.bf16.gmra.mrb[0].mxu0 %v767
    %v986 = vpop.f32.mrb[0].mxu0
    %v987 = vadd.f32 0.0, %v986
    %v988 = vpop.f32.mrb[0].mxu0
    %v989 = vpop.f32.mrb[0].mxu0
    %v990 = vadd.f32 0.0, %v989
    %v991 = vpop.f32.mrb[0].mxu0
    %992 = vdwg.mxu0
    %v993 = vld [vmem:[%s6] sm:$0xff]
    %v994 = vld [vmem:[%s6 + $0x8] sm:$0xff]
    %v995 = vld [vmem:[%s6 + $0x10] sm:$0xff]
    %v996 = vld [vmem:[%s6 + $0x18] sm:$0xff]
    %v997 = vld [vmem:[%s6 + $0x20] sm:$0xff]
    %v998 = vld [vmem:[%s6 + $0x28] sm:$0xff]
    %v999 = vld [vmem:[%s6 + $0x30] sm:$0xff]
    %v1000 = vld [vmem:[%s6 + $0x38] sm:$0xff]
    %v1001 = vld [vmem:[%s6 + $0x40] sm:$0xff]
    %v1002 = vld [vmem:[%s6 + $0x48] sm:$0xff]
    %v1003 = vld [vmem:[%s6 + $0x50] sm:$0xff]
    %v1004 = vld [vmem:[%s6 + $0x58] sm:$0xff]
    %v1005 = vld [vmem:[%s6 + $0x60] sm:$0xff]
    %v1006 = vld [vmem:[%s6 + $0x68] sm:$0xff]
    %v1007 = vld [vmem:[%s6 + $0x70] sm:$0xff]
    %v1008 = vld [vmem:[%s6 + $0x78] sm:$0xff]
    %v1009 = vld [vmem:[%s6 + $0x80] sm:$0xff]
    %v1010 = vld [vmem:[%s6 + $0x88] sm:$0xff]
    %v1011 = vld [vmem:[%s6 + $0x90] sm:$0xff]
    %v1012 = vld [vmem:[%s6 + $0x98] sm:$0xff]
    %v1013 = vld [vmem:[%s6 + $0xa0] sm:$0xff]
    %v1014 = vld [vmem:[%s6 + $0xa8] sm:$0xff]
    %v1015 = vld [vmem:[%s6 + $0xb0] sm:$0xff]
    %v1016 = vld [vmem:[%s6 + $0xb8] sm:$0xff]
    %v1017 = vld [vmem:[%s6 + $0xc0] sm:$0xff]
    %v1018 = vld [vmem:[%s6 + $0xc8] sm:$0xff]
    %v1019 = vld [vmem:[%s6 + $0xd0] sm:$0xff]
    %v1020 = vld [vmem:[%s6 + $0xd8] sm:$0xff]
    %v1021 = vld [vmem:[%s6 + $0xe0] sm:$0xff]
    %v1022 = vld [vmem:[%s6 + $0xe8] sm:$0xff]
    %v1023 = vld [vmem:[%s6 + $0xf0] sm:$0xff]
    %v1024 = vld [vmem:[%s6 + $0xf8] sm:$0xff]
    %v1025 = vld [vmem:[%s5] sm:$0xff]
    %v1026 = vld [vmem:[%s5 + $0x8] sm:$0xff]
    %v1027 = vld [vmem:[%s5 + $0x10] sm:$0xff]
    %v1028 = vld [vmem:[%s5 + $0x18] sm:$0xff]
    %v1029 = vld [vmem:[%s5 + $0x20] sm:$0xff]
    %v1030 = vld [vmem:[%s5 + $0x28] sm:$0xff]
    %v1031 = vld [vmem:[%s5 + $0x30] sm:$0xff]
    %v1032 = vld [vmem:[%s5 + $0x38] sm:$0xff]
    %v1033 = vld [vmem:[%s5 + $0x40] sm:$0xff]
    %v1034 = vld [vmem:[%s5 + $0x48] sm:$0xff]
    %v1035 = vld [vmem:[%s5 + $0x50] sm:$0xff]
    %v1036 = vld [vmem:[%s5 + $0x58] sm:$0xff]
    %v1037 = vld [vmem:[%s5 + $0x60] sm:$0xff]
    %v1038 = vld [vmem:[%s5 + $0x68] sm:$0xff]
    %v1039 = vld [vmem:[%s5 + $0x70] sm:$0xff]
    %v1040 = vld [vmem:[%s5 + $0x78] sm:$0xff]
    %v1041 = vld [vmem:[%s5 + $0x80] sm:$0xff]
    %v1042 = vld [vmem:[%s5 + $0x88] sm:$0xff]
    %v1043 = vld [vmem:[%s5 + $0x90] sm:$0xff]
    %v1044 = vld [vmem:[%s5 + $0x98] sm:$0xff]
    %v1045 = vld [vmem:[%s5 + $0xa0] sm:$0xff]
    %v1046 = vld [vmem:[%s5 + $0xa8] sm:$0xff]
    %v1047 = vld [vmem:[%s5 + $0xb0] sm:$0xff]
    %v1048 = vld [vmem:[%s5 + $0xb8] sm:$0xff]
    %v1049 = vld [vmem:[%s5 + $0xc0] sm:$0xff]
    %v1050 = vld [vmem:[%s5 + $0xc8] sm:$0xff]
    %v1051 = vld [vmem:[%s5 + $0xd0] sm:$0xff]
    %v1052 = vld [vmem:[%s5 + $0xd8] sm:$0xff]
    %v1053 = vld [vmem:[%s5 + $0xe0] sm:$0xff]
    %v1054 = vld [vmem:[%s5 + $0xe8] sm:$0xff]
    %v1055 = vld [vmem:[%s5 + $0xf0] sm:$0xff]
    %v1056 = vld [vmem:[%s5 + $0xf8] sm:$0xff]
    %1058 = vset.pattern.permute.xlu0 0
    %1059 = vperm.xlu0 %1058, %v1025
    %v1060 = vpop.permute.xlu0 %1059
    %1063 = vset.pattern.permute.xlu0 0
    %1064 = vperm.xlu0 %1063, %v1026
    %v1065 = vpop.permute.xlu0 %1064
    %1068 = vset.pattern.permute.xlu0 0
    %1069 = vperm.xlu0 %1068, %v1027
    %v1070 = vpop.permute.xlu0 %1069
    %1073 = vset.pattern.permute.xlu0 0
    %1074 = vperm.xlu0 %1073, %v1028
    %v1075 = vpop.permute.xlu0 %1074
    %1078 = vset.pattern.permute.xlu0 0
    %1079 = vperm.xlu0 %1078, %v1029
    %v1080 = vpop.permute.xlu0 %1079
    %1083 = vset.pattern.permute.xlu0 0
    %1084 = vperm.xlu0 %1083, %v1030
    %v1085 = vpop.permute.xlu0 %1084
    %1088 = vset.pattern.permute.xlu0 0
    %1089 = vperm.xlu0 %1088, %v1031
    %v1090 = vpop.permute.xlu0 %1089
    %1093 = vset.pattern.permute.xlu0 0
    %1094 = vperm.xlu0 %1093, %v1032
    %v1095 = vpop.permute.xlu0 %1094
    %1098 = vset.pattern.permute.xlu0 0
    %1099 = vperm.xlu0 %1098, %v1033
    %v1100 = vpop.permute.xlu0 %1099
    %1103 = vset.pattern.permute.xlu0 0
    %1104 = vperm.xlu0 %1103, %v1034
    %v1105 = vpop.permute.xlu0 %1104
    %1108 = vset.pattern.permute.xlu0 0
    %1109 = vperm.xlu0 %1108, %v1035
    %v1110 = vpop.permute.xlu0 %1109
    %1113 = vset.pattern.permute.xlu0 0
    %1114 = vperm.xlu0 %1113, %v1036
    %v1115 = vpop.permute.xlu0 %1114
    %1118 = vset.pattern.permute.xlu0 0
    %1119 = vperm.xlu0 %1118, %v1037
    %v1120 = vpop.permute.xlu0 %1119
    %1123 = vset.pattern.permute.xlu0 0
    %1124 = vperm.xlu0 %1123, %v1038
    %v1125 = vpop.permute.xlu0 %1124
    %1128 = vset.pattern.permute.xlu0 0
    %1129 = vperm.xlu0 %1128, %v1039
    %v1130 = vpop.permute.xlu0 %1129
    %1133 = vset.pattern.permute.xlu0 0
    %1134 = vperm.xlu0 %1133, %v1040
    %v1135 = vpop.permute.xlu0 %1134
    %1138 = vset.pattern.permute.xlu0 0
    %1139 = vperm.xlu0 %1138, %v1041
    %v1140 = vpop.permute.xlu0 %1139
    %1143 = vset.pattern.permute.xlu0 0
    %1144 = vperm.xlu0 %1143, %v1042
    %v1145 = vpop.permute.xlu0 %1144
    %1148 = vset.pattern.permute.xlu0 0
    %1149 = vperm.xlu0 %1148, %v1043
    %v1150 = vpop.permute.xlu0 %1149
    %1153 = vset.pattern.permute.xlu0 0
    %1154 = vperm.xlu0 %1153, %v1044
    %v1155 = vpop.permute.xlu0 %1154
    %1158 = vset.pattern.permute.xlu0 0
    %1159 = vperm.xlu0 %1158, %v1045
    %v1160 = vpop.permute.xlu0 %1159
    %1163 = vset.pattern.permute.xlu0 0
    %1164 = vperm.xlu0 %1163, %v1046
    %v1165 = vpop.permute.xlu0 %1164
    %1168 = vset.pattern.permute.xlu0 0
    %1169 = vperm.xlu0 %1168, %v1047
    %v1170 = vpop.permute.xlu0 %1169
    %1173 = vset.pattern.permute.xlu0 0
    %1174 = vperm.xlu0 %1173, %v1048
    %v1175 = vpop.permute.xlu0 %1174
    %1178 = vset.pattern.permute.xlu0 0
    %1179 = vperm.xlu0 %1178, %v1049
    %v1180 = vpop.permute.xlu0 %1179
    %1183 = vset.pattern.permute.xlu0 0
    %1184 = vperm.xlu0 %1183, %v1050
    %v1185 = vpop.permute.xlu0 %1184
    %1188 = vset.pattern.permute.xlu0 0
    %1189 = vperm.xlu0 %1188, %v1051
    %v1190 = vpop.permute.xlu0 %1189
    %1193 = vset.pattern.permute.xlu0 0
    %1194 = vperm.xlu0 %1193, %v1052
    %v1195 = vpop.permute.xlu0 %1194
    %1198 = vset.pattern.permute.xlu0 0
    %1199 = vperm.xlu0 %1198, %v1053
    %v1200 = vpop.permute.xlu0 %1199
    %1203 = vset.pattern.permute.xlu0 0
    %1204 = vperm.xlu0 %1203, %v1054
    %v1205 = vpop.permute.xlu0 %1204
    %1208 = vset.pattern.permute.xlu0 0
    %1209 = vperm.xlu0 %1208, %v1055
    %v1210 = vpop.permute.xlu0 %1209
    %1213 = vset.pattern.permute.xlu0 0
    %1214 = vperm.xlu0 %1213, %v1056
    %v1215 = vpop.permute.xlu0 %1214
    %v1217 = vmul.f32 %v993, %v1060
    %v1218 = vmul.f32 %v994, %v1065
    %v1219 = vmul.f32 %v995, %v1070
    %v1220 = vmul.f32 %v996, %v1075
    %v1221 = vmul.f32 %v997, %v1080
    %v1222 = vmul.f32 %v998, %v1085
    %v1223 = vmul.f32 %v999, %v1090
    %v1224 = vmul.f32 %v1000, %v1095
    %v1225 = vmul.f32 %v1001, %v1100
    %v1226 = vmul.f32 %v1002, %v1105
    %v1227 = vmul.f32 %v1003, %v1110
    %v1228 = vmul.f32 %v1004, %v1115
    %v1229 = vmul.f32 %v1005, %v1120
    %v1230 = vmul.f32 %v1006, %v1125
    %v1231 = vmul.f32 %v1007, %v1130
    %v1232 = vmul.f32 %v1008, %v1135
    %v1233 = vmul.f32 %v1009, %v1140
    %v1234 = vmul.f32 %v1010, %v1145
    %v1235 = vmul.f32 %v1011, %v1150
    %v1236 = vmul.f32 %v1012, %v1155
    %v1237 = vmul.f32 %v1013, %v1160
    %v1238 = vmul.f32 %v1014, %v1165
    %v1239 = vmul.f32 %v1015, %v1170
    %v1240 = vmul.f32 %v1016, %v1175
    %v1241 = vmul.f32 %v1017, %v1180
    %v1242 = vmul.f32 %v1018, %v1185
    %v1243 = vmul.f32 %v1019, %v1190
    %v1244 = vmul.f32 %v1020, %v1195
    %v1245 = vmul.f32 %v1021, %v1200
    %v1246 = vmul.f32 %v1022, %v1205
    %v1247 = vmul.f32 %v1023, %v1210
    %v1248 = vmul.f32 %v1024, %v1215
    %v1249 = vadd.f32 %v1217, %v867
    %v1250 = vadd.f32 %v1218, %v870
    %v1251 = vadd.f32 %v1219, %v875
    %v1252 = vadd.f32 %v1220, %v878
    %v1253 = vadd.f32 %v1221, %v883
    %v1254 = vadd.f32 %v1222, %v886
    %v1255 = vadd.f32 %v1223, %v891
    %v1256 = vadd.f32 %v1224, %v894
    %v1257 = vadd.f32 %v1225, %v899
    %v1258 = vadd.f32 %v1226, %v902
    %v1259 = vadd.f32 %v1227, %v907
    %v1260 = vadd.f32 %v1228, %v910
    %v1261 = vadd.f32 %v1229, %v915
    %v1262 = vadd.f32 %v1230, %v918
    %v1263 = vadd.f32 %v1231, %v923
    %v1264 = vadd.f32 %v1232, %v926
    %v1265 = vadd.f32 %v1233, %v931
    %v1266 = vadd.f32 %v1234, %v934
    %v1267 = vadd.f32 %v1235, %v939
    %v1268 = vadd.f32 %v1236, %v942
    %v1269 = vadd.f32 %v1237, %v947
    %v1270 = vadd.f32 %v1238, %v950
    %v1271 = vadd.f32 %v1239, %v955
    %v1272 = vadd.f32 %v1240, %v958
    %v1273 = vadd.f32 %v1241, %v963
    %v1274 = vadd.f32 %v1242, %v966
    %v1275 = vadd.f32 %v1243, %v971
    %v1276 = vadd.f32 %v1244, %v974
    %v1277 = vadd.f32 %v1245, %v979
    %v1278 = vadd.f32 %v1246, %v982
    %v1279 = vadd.f32 %v1247, %v987
    %v1280 = vadd.f32 %v1248, %v990
    %v1281 = vld [vmem:[%s4] sm:$0x1]
    %v1283 = vlaneseq
    %v1284 = vshrl.u32 %v1283, 7
    %v1285 = vsub.s32 0, %v1284
    %v1286 = vrot.slane %v1281, %v1285
    %v1288 = vadd.f32 %v1249, %v1286
    %v1289 = vadd.f32 %v1250, %v1286
    %v1290 = vadd.f32 %v1251, %v1286
    %v1291 = vadd.f32 %v1252, %v1286
    %v1292 = vadd.f32 %v1253, %v1286
    %v1293 = vadd.f32 %v1254, %v1286
    %v1294 = vadd.f32 %v1255, %v1286
    %v1295 = vadd.f32 %v1256, %v1286
    %v1296 = vadd.f32 %v1257, %v1286
    %v1297 = vadd.f32 %v1258, %v1286
    %v1298 = vadd.f32 %v1259, %v1286
    %v1299 = vadd.f32 %v1260, %v1286
    %v1300 = vadd.f32 %v1261, %v1286
    %v1301 = vadd.f32 %v1262, %v1286
    %v1302 = vadd.f32 %v1263, %v1286
    %v1303 = vadd.f32 %v1264, %v1286
    %v1304 = vadd.f32 %v1265, %v1286
    %v1305 = vadd.f32 %v1266, %v1286
    %v1306 = vadd.f32 %v1267, %v1286
    %v1307 = vadd.f32 %v1268, %v1286
    %v1308 = vadd.f32 %v1269, %v1286
    %v1309 = vadd.f32 %v1270, %v1286
    %v1310 = vadd.f32 %v1271, %v1286
    %v1311 = vadd.f32 %v1272, %v1286
    %v1312 = vadd.f32 %v1273, %v1286
    %v1313 = vadd.f32 %v1274, %v1286
    %v1314 = vadd.f32 %v1275, %v1286
    %v1315 = vadd.f32 %v1276, %v1286
    %v1316 = vadd.f32 %v1277, %v1286
    %v1317 = vadd.f32 %v1278, %v1286
    %v1318 = vadd.f32 %v1279, %v1286
    %v1319 = vadd.f32 %v1280, %v1286
    %1320 = vst [vmem:[%s6] sm:$0xff] %v1288
    %1321 = vst [vmem:[%s6 + $0x8] sm:$0xff] %v1289
    %1322 = vst [vmem:[%s6 + $0x10] sm:$0xff] %v1290
    %1323 = vst [vmem:[%s6 + $0x18] sm:$0xff] %v1291
    %1324 = vst [vmem:[%s6 + $0x20] sm:$0xff] %v1292
    %1325 = vst [vmem:[%s6 + $0x28] sm:$0xff] %v1293
    %1326 = vst [vmem:[%s6 + $0x30] sm:$0xff] %v1294
    %1327 = vst [vmem:[%s6 + $0x38] sm:$0xff] %v1295
    %1328 = vst [vmem:[%s6 + $0x40] sm:$0xff] %v1296
    %1329 = vst [vmem:[%s6 + $0x48] sm:$0xff] %v1297
    %1330 = vst [vmem:[%s6 + $0x50] sm:$0xff] %v1298
    %1331 = vst [vmem:[%s6 + $0x58] sm:$0xff] %v1299
    %1332 = vst [vmem:[%s6 + $0x60] sm:$0xff] %v1300
    %1333 = vst [vmem:[%s6 + $0x68] sm:$0xff] %v1301
    %1334 = vst [vmem:[%s6 + $0x70] sm:$0xff] %v1302
    %1335 = vst [vmem:[%s6 + $0x78] sm:$0xff] %v1303
    %1336 = vst [vmem:[%s6 + $0x80] sm:$0xff] %v1304
    %1337 = vst [vmem:[%s6 + $0x88] sm:$0xff] %v1305
    %1338 = vst [vmem:[%s6 + $0x90] sm:$0xff] %v1306
    %1339 = vst [vmem:[%s6 + $0x98] sm:$0xff] %v1307
    %1340 = vst [vmem:[%s6 + $0xa0] sm:$0xff] %v1308
    %1341 = vst [vmem:[%s6 + $0xa8] sm:$0xff] %v1309
    %1342 = vst [vmem:[%s6 + $0xb0] sm:$0xff] %v1310
    %1343 = vst [vmem:[%s6 + $0xb8] sm:$0xff] %v1311
    %1344 = vst [vmem:[%s6 + $0xc0] sm:$0xff] %v1312
    %1345 = vst [vmem:[%s6 + $0xc8] sm:$0xff] %v1313
    %1346 = vst [vmem:[%s6 + $0xd0] sm:$0xff] %v1314
    %1347 = vst [vmem:[%s6 + $0xd8] sm:$0xff] %v1315
    %1348 = vst [vmem:[%s6 + $0xe0] sm:$0xff] %v1316
    %1349 = vst [vmem:[%s6 + $0xe8] sm:$0xff] %v1317
    %1350 = vst [vmem:[%s6 + $0xf0] sm:$0xff] %v1318
    %1351 = vst [vmem:[%s6 + $0xf8] sm:$0xff] %v1319
  $region33: #{graphsage_forward.7} parent=0 // pred_fallthru
    _
  // Predicated region
  $region34: #{graphsage_forward.7} parent=0 // pred_check
    _
  $region35: #{graphsage_forward.7} parent=0 // pred_check_branch
    %1353 = sbr.rel (0) target = $region37
  $region36: #{graphsage_forward.7} parent=0 // pred_region
    _
  $region37: #{graphsage_forward.7} parent=0 // pred_fallthru
    _
  // Predicated region
  $region38: #{graphsage_forward.7} parent=0 // pred_check
    _
  $region39: #{graphsage_forward.7} parent=0 // pred_check_branch
    %1355 = sbr.rel (0) target = $region41
  $region40: #{graphsage_forward.7} parent=0 // pred_region
    _
  $region41: #{graphsage_forward.7} parent=0 // pred_fallthru
    _

</llo_original>
